<compile_context>
chip_gen: v6e
topology: v6e:2x2x1
jax: 0.10.0
libtpu: 0.0.40
codegen_flags: <defaults>
</compile_context>

<pallas_src>
import numpy as np

import jax
import jax.numpy as jnp
from jax.experimental import pallas as pl
from jax.experimental.pallas import tpu as pltpu


def _vmem_spec():
    # whole-array block resident in VMEM (everything here is tiny)
    return pl.BlockSpec(memory_space=pltpu.MemorySpace.VMEM)


_COMPILER_PARAMS = pltpu.CompilerParams(vmem_limit_bytes=32 * 1024 * 1024)


def _shift_lanes(v, s):
    """out[:, m] = v[:, m + s] (cyclic).  Wrapped lanes are never selected
    downstream, so the wrap-around is harmless."""
    if s == 0:
        return v
    return jnp.concatenate([v[:, s:], v[:, :s]], axis=1)


# ----------------------------- fused forward kernel -----------------------------
def _net_kernel(x_ref, w1_ref, b1_ref, s1_ref, w2_ref, b2_ref, s2_ref,
                fc1w_ref, fc1b_ref, fc2w_ref, fc2b_ref, fc3w_ref, fc3b_ref,
                o_ref):
    # x_ref   : (1, N*1024)   flat input, lane m = n*1024 + y*32 + x
    # w1_ref  : (6, 9)        conv1 weights, column = kh*3 + kw
    # s1_ref  : (1024, 225)   per-sample pool-1 selector, column r = i*15 + j picks lane 64i+2j
    # w2_ref  : (16, 54)      conv2 weights, column = (kh*3+kw)*6 + ci
    # s2_ref  : (N*225, 36*N) pool-2 selector, column (i*6+j)*N + n picks lane n*225 + 30i + 2j
    # fc*_ref : (out, in) weights and (out, 1) biases
    # o_ref   : (10, N)
    N = o_ref.shape[1]
    f32 = jnp.float32

    # ---- conv1 (1->6, 3x3 valid): im2col via 9 lane shifts + one MXU matmul ----
    x = x_ref[...]                                                      # (1, N*1024)
    patches1 = jnp.concatenate(
        [_shift_lanes(x, 32 * kh + kw) for kh in range(3) for kw in range(3)],
        axis=0)                                                         # (9, N*1024)
    c1 = jnp.dot(w1_ref[...], patches1, preferred_element_type=f32) + b1_ref[...]
    c1 = jnp.maximum(c1, 0.0)                                           # (6, N*1024)

    # ---- maxpool 2x2/2: max of 4 shifted copies, stride-2 select via MXU matmul ----
    wm1 = jnp.maximum(jnp.maximum(c1, _shift_lanes(c1, 1)),
                      jnp.maximum(_shift_lanes(c1, 32), _shift_lanes(c1, 33)))
    p1 = jnp.concatenate(
        [jnp.dot(wm1[:, n * 1024:(n + 1) * 1024], s1_ref[...],
                 preferred_element_type=f32) for n in range(N)],
        axis=1)                                                         # (6, N*225), lane = n*225 + i*15 + j

    # ---- conv2 (6->16, 3x3 valid): im2col + one MXU matmul ----
    patches2 = jnp.concatenate(
        [_shift_lanes(p1, 15 * kh + kw) for kh in range(3) for kw in range(3)],
        axis=0)                                                         # (54, N*225)
    c2 = jnp.dot(w2_ref[...], patches2, preferred_element_type=f32) + b2_ref[...]
    c2 = jnp.maximum(c2, 0.0)                                           # (16, N*225)

    # ---- maxpool 2x2/2 (floor mode: odd remainder is simply never selected) ----
    wm2 = jnp.maximum(jnp.maximum(c2, _shift_lanes(c2, 1)),
                      jnp.maximum(_shift_lanes(c2, 15), _shift_lanes(c2, 16)))
    p2 = jnp.dot(wm2, s2_ref[...], preferred_element_type=f32)          # (16, 36*N), lane = p*N + n

    # ---- flatten to (576, N) with row order (spatial p, channel c), then the MLP ----
    feat = jnp.concatenate([p2[:, p * N:(p + 1) * N] for p in range(36)],
                           axis=0)                                      # (576, N)
    h = jnp.dot(fc1w_ref[...], feat, preferred_element_type=f32) + fc1b_ref[...]
    h = jnp.maximum(h, 0.0)                                             # (120, N)
    h = jnp.dot(fc2w_ref[...], h, preferred_element_type=f32) + fc2b_ref[...]
    h = jnp.maximum(h, 0.0)                                             # (84, N)
    o_ref[...] = jnp.dot(fc3w_ref[...], h, preferred_element_type=f32) + fc3b_ref[...]


# ------------------------- constant 0/1 pooling selectors -------------------------
def _pool1_selector():
    # (1024, 225): column r = i*15 + j selects per-sample lane 64*i + 2*j
    i = np.arange(15)
    j = np.arange(15)
    src = (64 * i[:, None] + 2 * j[None, :]).reshape(-1)
    return jnp.asarray(np.arange(1024)[:, None] == src[None, :], dtype=jnp.float32)


def _pool2_selector(n_batch):
    # (N*225, 36*N): column (i*6+j)*N + n selects lane n*225 + 30*i + 2*j
    i = np.arange(6)[:, None, None]
    j = np.arange(6)[None, :, None]
    n = np.arange(n_batch)[None, None, :]
    src = (n * 225 + 30 * i + 2 * j).reshape(-1)          # order (i, j, n)
    return jnp.asarray(np.arange(225 * n_batch)[:, None] == src[None, :],
                       dtype=jnp.float32)


# --------------------------------- public wrapper ---------------------------------
@jax.jit
def net_forward(x_nchw, p):
    N, C, H, W = x_nchw.shape
    assert (C, H, W) == (1, 32, 32), "Net requires 1x32x32 inputs (fc1 expects 16*6*6 features)"

    # layout plumbing only (selection matrices are trace-time numpy constants)
    x_flat = x_nchw.reshape(1, N * 1024)                                   # lane m = n*1024 + y*32 + x
    w1 = p["conv1_w"].reshape(6, 9)                                        # (Cout, kh*3 + kw)
    b1 = p["conv1_b"].reshape(6, 1)
    w2 = p["conv2_w"].transpose(0, 2, 3, 1).reshape(16, 54)                # (Cout, (kh*3+kw)*6 + ci)
    b2 = p["conv2_b"].reshape(16, 1)
    fc1w = p["fc1_w"].reshape(120, 16, 36).transpose(0, 2, 1).reshape(120, 576)  # cols (p, c)
    fc1b = p["fc1_b"].reshape(120, 1)
    fc2w = p["fc2_w"]
    fc2b = p["fc2_b"].reshape(84, 1)
    fc3w = p["fc3_w"]
    fc3b = p["fc3_b"].reshape(10, 1)
    s1 = _pool1_selector()
    s2 = _pool2_selector(N)

    out_t = pl.pallas_call(
        _net_kernel,
        out_shape=jax.ShapeDtypeStruct((10, N), jnp.float32),
        in_specs=[_vmem_spec()] * 13,
        out_specs=_vmem_spec(),
        compiler_params=_COMPILER_PARAMS,
    )(x_flat, w1, b1, s1, w2, b2, s2, fc1w, fc1b, fc2w, fc2b, fc3w, fc3b)
    return out_t.T                                                         # (N, 10)


# --------------------------------- pure-JAX reference ---------------------------------
def net_reference(x, p):
    def conv3x3_relu(x, w, b):
        n_, cin, hh, ww = x.shape
        cout = w.shape[0]
        ho, wo = hh - 2, ww - 2
        pats = jnp.stack([x[:, :, kh:kh + ho, kw:kw + wo]
                          for kh in range(3) for kw in range(3)], axis=-1)   # (N,Cin,Ho,Wo,9)
        y = jnp.einsum("nchwk,ock->nohw", pats, w.reshape(cout, cin, 9))
        return jax.nn.relu(y + b[None, :, None, None])

    def pool2x2(x):
        n_, c, hh, ww = x.shape
        hp, wp = hh // 2, ww // 2
        x = x[:, :, :2 * hp, :2 * wp].reshape(n_, c, hp, 2, wp, 2)
        return jnp.max(x, axis=(3, 5))

    x = pool2x2(conv3x3_relu(x, p["conv1_w"], p["conv1_b"]))
    x = pool2x2(conv3x3_relu(x, p["conv2_w"], p["conv2_b"]))
    x = x.reshape(x.shape[0], -1)                                    # (N, 576), (C,H,W) order
    x = jax.nn.relu(x @ p["fc1_w"].T + p["fc1_b"])
    x = jax.nn.relu(x @ p["fc2_w"].T + p["fc2_b"])
    return x @ p["fc3_w"].T + p["fc3_b"]


# ------------------------------------ parameter init ------------------------------------
def init_params(key):
    ks = jax.random.split(key, 10)
    p = {}
    p["conv1_w"] = jax.random.normal(ks[0], (6, 1, 3, 3), jnp.float32) * 0.30   # torch OIHW
    p["conv1_b"] = jax.random.normal(ks[1], (6,), jnp.float32) * 0.10
    p["conv2_w"] = jax.random.normal(ks[2], (16, 6, 3, 3), jnp.float32) * 0.15
    p["conv2_b"] = jax.random.normal(ks[3], (16,), jnp.float32) * 0.10
    p["fc1_w"] = jax.random.normal(ks[4], (120, 16 * 6 * 6), jnp.float32) * 0.05  # torch (out, in)
    p["fc1_b"] = jax.random.normal(ks[5], (120,), jnp.float32) * 0.10
    p["fc2_w"] = jax.random.normal(ks[6], (84, 120), jnp.float32) * 0.10
    p["fc2_b"] = jax.random.normal(ks[7], (84,), jnp.float32) * 0.10
    p["fc3_w"] = jax.random.normal(ks[8], (10, 84), jnp.float32) * 0.10
    p["fc3_b"] = jax.random.normal(ks[9], (10,), jnp.float32) * 0.10
    return p


if __name__ == "__main__":
    key = jax.random.PRNGKey(0)
    k_x, k_p = jax.random.split(key)
    params = init_params(k_p)
    # Net's forward requires 32x32 spatial input so fc1 sees 16*6*6 features.
    x = jax.random.normal(k_x, (2, 1, 32, 32), jnp.float32)

    out = net_forward(x, params)
    out = jax.block_until_ready(out)

    ref = net_reference(x, params)
    assert out.shape == (2, 10), out.shape
    if not jnp.allclose(out, ref, rtol=1e-3, atol=1e-3):
        err = float(jnp.max(jnp.abs(out - ref)))
        raise AssertionError(f"Pallas output does not match JAX reference (max abs err {err})")
    print("KERNEL_OK")
</pallas_src>

<mosaic_0001>
module attributes {stable_mosaic.version = 11 : i64} {
  func.func @_net_kernel(%arg0: memref<1x2048xf32, #tpu.memory_space<vmem>>, %arg1: memref<6x9xf32, #tpu.memory_space<vmem>>, %arg2: memref<6x1xf32, #tpu.memory_space<vmem>>, %arg3: memref<1024x225xf32, #tpu.memory_space<vmem>>, %arg4: memref<16x54xf32, #tpu.memory_space<vmem>>, %arg5: memref<16x1xf32, #tpu.memory_space<vmem>>, %arg6: memref<450x72xf32, #tpu.memory_space<vmem>>, %arg7: memref<120x576xf32, #tpu.memory_space<vmem>>, %arg8: memref<120x1xf32, #tpu.memory_space<vmem>>, %arg9: memref<84x120xf32, #tpu.memory_space<vmem>>, %arg10: memref<84x1xf32, #tpu.memory_space<vmem>>, %arg11: memref<10x84xf32, #tpu.memory_space<vmem>>, %arg12: memref<10x1xf32, #tpu.memory_space<vmem>>, %arg13: memref<10x2xf32, #tpu.memory_space<vmem>>) attributes {dimension_semantics = [], scalar_prefetch = 0 : i64, scratch_operands = 0 : i64, tpu.core_type = #tpu.core_type<tc>} {
    %c0 = arith.constant 0 : index
    %c0_0 = arith.constant 0 : index
    %0 = vector.load %arg0[%c0, %c0_0] : memref<1x2048xf32, #tpu.memory_space<vmem>>, vector<1x2048xf32>
    %1 = vector.extract_strided_slice %0 {offsets = [0, 1], sizes = [1, 2047], strides = [1, 1]} : vector<1x2048xf32> to vector<1x2047xf32>
    %2 = vector.extract_strided_slice %0 {offsets = [0, 0], sizes = [1, 1], strides = [1, 1]} : vector<1x2048xf32> to vector<1x1xf32>
    %3 = tpu.concatenate %1, %2 in 1 : vector<1x2047xf32>, vector<1x1xf32> -> vector<1x2048xf32>
    %4 = vector.extract_strided_slice %0 {offsets = [0, 2], sizes = [1, 2046], strides = [1, 1]} : vector<1x2048xf32> to vector<1x2046xf32>
    %5 = vector.extract_strided_slice %0 {offsets = [0, 0], sizes = [1, 2], strides = [1, 1]} : vector<1x2048xf32> to vector<1x2xf32>
    %6 = tpu.concatenate %4, %5 in 1 : vector<1x2046xf32>, vector<1x2xf32> -> vector<1x2048xf32>
    %7 = vector.extract_strided_slice %0 {offsets = [0, 32], sizes = [1, 2016], strides = [1, 1]} : vector<1x2048xf32> to vector<1x2016xf32>
    %8 = vector.extract_strided_slice %0 {offsets = [0, 0], sizes = [1, 32], strides = [1, 1]} : vector<1x2048xf32> to vector<1x32xf32>
    %9 = tpu.concatenate %7, %8 in 1 : vector<1x2016xf32>, vector<1x32xf32> -> vector<1x2048xf32>
    %10 = vector.extract_strided_slice %0 {offsets = [0, 33], sizes = [1, 2015], strides = [1, 1]} : vector<1x2048xf32> to vector<1x2015xf32>
    %11 = vector.extract_strided_slice %0 {offsets = [0, 0], sizes = [1, 33], strides = [1, 1]} : vector<1x2048xf32> to vector<1x33xf32>
    %12 = tpu.concatenate %10, %11 in 1 : vector<1x2015xf32>, vector<1x33xf32> -> vector<1x2048xf32>
    %13 = vector.extract_strided_slice %0 {offsets = [0, 34], sizes = [1, 2014], strides = [1, 1]} : vector<1x2048xf32> to vector<1x2014xf32>
    %14 = vector.extract_strided_slice %0 {offsets = [0, 0], sizes = [1, 34], strides = [1, 1]} : vector<1x2048xf32> to vector<1x34xf32>
    %15 = tpu.concatenate %13, %14 in 1 : vector<1x2014xf32>, vector<1x34xf32> -> vector<1x2048xf32>
    %16 = vector.extract_strided_slice %0 {offsets = [0, 64], sizes = [1, 1984], strides = [1, 1]} : vector<1x2048xf32> to vector<1x1984xf32>
    %17 = vector.extract_strided_slice %0 {offsets = [0, 0], sizes = [1, 64], strides = [1, 1]} : vector<1x2048xf32> to vector<1x64xf32>
    %18 = tpu.concatenate %16, %17 in 1 : vector<1x1984xf32>, vector<1x64xf32> -> vector<1x2048xf32>
    %19 = vector.extract_strided_slice %0 {offsets = [0, 65], sizes = [1, 1983], strides = [1, 1]} : vector<1x2048xf32> to vector<1x1983xf32>
    %20 = vector.extract_strided_slice %0 {offsets = [0, 0], sizes = [1, 65], strides = [1, 1]} : vector<1x2048xf32> to vector<1x65xf32>
    %21 = tpu.concatenate %19, %20 in 1 : vector<1x1983xf32>, vector<1x65xf32> -> vector<1x2048xf32>
    %22 = vector.extract_strided_slice %0 {offsets = [0, 66], sizes = [1, 1982], strides = [1, 1]} : vector<1x2048xf32> to vector<1x1982xf32>
    %23 = vector.extract_strided_slice %0 {offsets = [0, 0], sizes = [1, 66], strides = [1, 1]} : vector<1x2048xf32> to vector<1x66xf32>
    %24 = tpu.concatenate %22, %23 in 1 : vector<1x1982xf32>, vector<1x66xf32> -> vector<1x2048xf32>
    %25 = tpu.concatenate %0, %3, %6, %9, %12, %15, %18, %21, %24 in 0 : vector<1x2048xf32>, vector<1x2048xf32>, vector<1x2048xf32>, vector<1x2048xf32>, vector<1x2048xf32>, vector<1x2048xf32>, vector<1x2048xf32>, vector<1x2048xf32>, vector<1x2048xf32> -> vector<9x2048xf32>
    %c0_1 = arith.constant 0 : index
    %c0_2 = arith.constant 0 : index
    %26 = vector.load %arg1[%c0_1, %c0_2] : memref<6x9xf32, #tpu.memory_space<vmem>>, vector<6x9xf32>
    %cst = arith.constant dense<0.000000e+00> : vector<6x2048xf32>
    %27 = tpu.matmul %26, %25, %cst {dimension_numbers = #tpu.dot_dimension_numbers<[1], [0], [0], [1], [0, 0, 1, 1], [], []>} : vector<6x9xf32>, vector<9x2048xf32>, vector<6x2048xf32> -> vector<6x2048xf32>
    %c0_3 = arith.constant 0 : index
    %c0_4 = arith.constant 0 : index
    %28 = vector.load %arg2[%c0_3, %c0_4] : memref<6x1xf32, #tpu.memory_space<vmem>>, vector<6x1xf32>
    %29 = vector.broadcast %28 : vector<6x1xf32> to vector<6x2048xf32>
    %30 = arith.addf %27, %29 : vector<6x2048xf32>
    %cst_5 = arith.constant 0.000000e+00 : f32
    %31 = vector.broadcast %cst_5 : f32 to vector<6x2048xf32>
    %32 = arith.maximumf %30, %31 : vector<6x2048xf32>
    %33 = vector.extract_strided_slice %32 {offsets = [0, 1], sizes = [6, 2047], strides = [1, 1]} : vector<6x2048xf32> to vector<6x2047xf32>
    %34 = vector.extract_strided_slice %32 {offsets = [0, 0], sizes = [6, 1], strides = [1, 1]} : vector<6x2048xf32> to vector<6x1xf32>
    %35 = tpu.concatenate %33, %34 in 1 : vector<6x2047xf32>, vector<6x1xf32> -> vector<6x2048xf32>
    %36 = arith.maximumf %32, %35 : vector<6x2048xf32>
    %37 = vector.extract_strided_slice %32 {offsets = [0, 32], sizes = [6, 2016], strides = [1, 1]} : vector<6x2048xf32> to vector<6x2016xf32>
    %38 = vector.extract_strided_slice %32 {offsets = [0, 0], sizes = [6, 32], strides = [1, 1]} : vector<6x2048xf32> to vector<6x32xf32>
    %39 = tpu.concatenate %37, %38 in 1 : vector<6x2016xf32>, vector<6x32xf32> -> vector<6x2048xf32>
    %40 = vector.extract_strided_slice %32 {offsets = [0, 33], sizes = [6, 2015], strides = [1, 1]} : vector<6x2048xf32> to vector<6x2015xf32>
    %41 = vector.extract_strided_slice %32 {offsets = [0, 0], sizes = [6, 33], strides = [1, 1]} : vector<6x2048xf32> to vector<6x33xf32>
    %42 = tpu.concatenate %40, %41 in 1 : vector<6x2015xf32>, vector<6x33xf32> -> vector<6x2048xf32>
    %43 = arith.maximumf %39, %42 : vector<6x2048xf32>
    %44 = arith.maximumf %36, %43 : vector<6x2048xf32>
    %45 = vector.extract_strided_slice %44 {offsets = [0, 0], sizes = [6, 1024], strides = [1, 1]} : vector<6x2048xf32> to vector<6x1024xf32>
    %c0_6 = arith.constant 0 : index
    %c0_7 = arith.constant 0 : index
    %46 = vector.load %arg3[%c0_6, %c0_7] : memref<1024x225xf32, #tpu.memory_space<vmem>>, vector<1024x225xf32>
    %cst_8 = arith.constant dense<0.000000e+00> : vector<6x225xf32>
    %47 = tpu.matmul %45, %46, %cst_8 {dimension_numbers = #tpu.dot_dimension_numbers<[1], [0], [0], [1], [0, 0, 1, 1], [], []>} : vector<6x1024xf32>, vector<1024x225xf32>, vector<6x225xf32> -> vector<6x225xf32>
    %48 = vector.extract_strided_slice %44 {offsets = [0, 1024], sizes = [6, 1024], strides = [1, 1]} : vector<6x2048xf32> to vector<6x1024xf32>
    %c0_9 = arith.constant 0 : index
    %c0_10 = arith.constant 0 : index
    %49 = vector.load %arg3[%c0_9, %c0_10] : memref<1024x225xf32, #tpu.memory_space<vmem>>, vector<1024x225xf32>
    %cst_11 = arith.constant dense<0.000000e+00> : vector<6x225xf32>
    %50 = tpu.matmul %48, %49, %cst_11 {dimension_numbers = #tpu.dot_dimension_numbers<[1], [0], [0], [1], [0, 0, 1, 1], [], []>} : vector<6x1024xf32>, vector<1024x225xf32>, vector<6x225xf32> -> vector<6x225xf32>
    %51 = tpu.concatenate %47, %50 in 1 : vector<6x225xf32>, vector<6x225xf32> -> vector<6x450xf32>
    %52 = vector.extract_strided_slice %51 {offsets = [0, 1], sizes = [6, 449], strides = [1, 1]} : vector<6x450xf32> to vector<6x449xf32>
    %53 = vector.extract_strided_slice %51 {offsets = [0, 0], sizes = [6, 1], strides = [1, 1]} : vector<6x450xf32> to vector<6x1xf32>
    %54 = tpu.concatenate %52, %53 in 1 : vector<6x449xf32>, vector<6x1xf32> -> vector<6x450xf32>
    %55 = vector.extract_strided_slice %51 {offsets = [0, 2], sizes = [6, 448], strides = [1, 1]} : vector<6x450xf32> to vector<6x448xf32>
    %56 = vector.extract_strided_slice %51 {offsets = [0, 0], sizes = [6, 2], strides = [1, 1]} : vector<6x450xf32> to vector<6x2xf32>
    %57 = tpu.concatenate %55, %56 in 1 : vector<6x448xf32>, vector<6x2xf32> -> vector<6x450xf32>
    %58 = vector.extract_strided_slice %51 {offsets = [0, 15], sizes = [6, 435], strides = [1, 1]} : vector<6x450xf32> to vector<6x435xf32>
    %59 = vector.extract_strided_slice %51 {offsets = [0, 0], sizes = [6, 15], strides = [1, 1]} : vector<6x450xf32> to vector<6x15xf32>
    %60 = tpu.concatenate %58, %59 in 1 : vector<6x435xf32>, vector<6x15xf32> -> vector<6x450xf32>
    %61 = vector.extract_strided_slice %51 {offsets = [0, 16], sizes = [6, 434], strides = [1, 1]} : vector<6x450xf32> to vector<6x434xf32>
    %62 = vector.extract_strided_slice %51 {offsets = [0, 0], sizes = [6, 16], strides = [1, 1]} : vector<6x450xf32> to vector<6x16xf32>
    %63 = tpu.concatenate %61, %62 in 1 : vector<6x434xf32>, vector<6x16xf32> -> vector<6x450xf32>
    %64 = vector.extract_strided_slice %51 {offsets = [0, 17], sizes = [6, 433], strides = [1, 1]} : vector<6x450xf32> to vector<6x433xf32>
    %65 = vector.extract_strided_slice %51 {offsets = [0, 0], sizes = [6, 17], strides = [1, 1]} : vector<6x450xf32> to vector<6x17xf32>
    %66 = tpu.concatenate %64, %65 in 1 : vector<6x433xf32>, vector<6x17xf32> -> vector<6x450xf32>
    %67 = vector.extract_strided_slice %51 {offsets = [0, 30], sizes = [6, 420], strides = [1, 1]} : vector<6x450xf32> to vector<6x420xf32>
    %68 = vector.extract_strided_slice %51 {offsets = [0, 0], sizes = [6, 30], strides = [1, 1]} : vector<6x450xf32> to vector<6x30xf32>
    %69 = tpu.concatenate %67, %68 in 1 : vector<6x420xf32>, vector<6x30xf32> -> vector<6x450xf32>
    %70 = vector.extract_strided_slice %51 {offsets = [0, 31], sizes = [6, 419], strides = [1, 1]} : vector<6x450xf32> to vector<6x419xf32>
    %71 = vector.extract_strided_slice %51 {offsets = [0, 0], sizes = [6, 31], strides = [1, 1]} : vector<6x450xf32> to vector<6x31xf32>
    %72 = tpu.concatenate %70, %71 in 1 : vector<6x419xf32>, vector<6x31xf32> -> vector<6x450xf32>
    %73 = vector.extract_strided_slice %51 {offsets = [0, 32], sizes = [6, 418], strides = [1, 1]} : vector<6x450xf32> to vector<6x418xf32>
    %74 = vector.extract_strided_slice %51 {offsets = [0, 0], sizes = [6, 32], strides = [1, 1]} : vector<6x450xf32> to vector<6x32xf32>
    %75 = tpu.concatenate %73, %74 in 1 : vector<6x418xf32>, vector<6x32xf32> -> vector<6x450xf32>
    %76 = tpu.concatenate %51, %54, %57, %60, %63, %66, %69, %72, %75 in 0 : vector<6x450xf32>, vector<6x450xf32>, vector<6x450xf32>, vector<6x450xf32>, vector<6x450xf32>, vector<6x450xf32>, vector<6x450xf32>, vector<6x450xf32>, vector<6x450xf32> -> vector<54x450xf32>
    %c0_12 = arith.constant 0 : index
    %c0_13 = arith.constant 0 : index
    %77 = vector.load %arg4[%c0_12, %c0_13] : memref<16x54xf32, #tpu.memory_space<vmem>>, vector<16x54xf32>
    %cst_14 = arith.constant dense<0.000000e+00> : vector<16x450xf32>
    %78 = tpu.matmul %77, %76, %cst_14 {dimension_numbers = #tpu.dot_dimension_numbers<[1], [0], [0], [1], [0, 0, 1, 1], [], []>} : vector<16x54xf32>, vector<54x450xf32>, vector<16x450xf32> -> vector<16x450xf32>
    %c0_15 = arith.constant 0 : index
    %c0_16 = arith.constant 0 : index
    %79 = vector.load %arg5[%c0_15, %c0_16] : memref<16x1xf32, #tpu.memory_space<vmem>>, vector<16x1xf32>
    %80 = vector.broadcast %79 : vector<16x1xf32> to vector<16x450xf32>
    %81 = arith.addf %78, %80 : vector<16x450xf32>
    %cst_17 = arith.constant 0.000000e+00 : f32
    %82 = vector.broadcast %cst_17 : f32 to vector<16x450xf32>
    %83 = arith.maximumf %81, %82 : vector<16x450xf32>
    %84 = vector.extract_strided_slice %83 {offsets = [0, 1], sizes = [16, 449], strides = [1, 1]} : vector<16x450xf32> to vector<16x449xf32>
    %85 = vector.extract_strided_slice %83 {offsets = [0, 0], sizes = [16, 1], strides = [1, 1]} : vector<16x450xf32> to vector<16x1xf32>
    %86 = tpu.concatenate %84, %85 in 1 : vector<16x449xf32>, vector<16x1xf32> -> vector<16x450xf32>
    %87 = arith.maximumf %83, %86 : vector<16x450xf32>
    %88 = vector.extract_strided_slice %83 {offsets = [0, 15], sizes = [16, 435], strides = [1, 1]} : vector<16x450xf32> to vector<16x435xf32>
    %89 = vector.extract_strided_slice %83 {offsets = [0, 0], sizes = [16, 15], strides = [1, 1]} : vector<16x450xf32> to vector<16x15xf32>
    %90 = tpu.concatenate %88, %89 in 1 : vector<16x435xf32>, vector<16x15xf32> -> vector<16x450xf32>
    %91 = vector.extract_strided_slice %83 {offsets = [0, 16], sizes = [16, 434], strides = [1, 1]} : vector<16x450xf32> to vector<16x434xf32>
    %92 = vector.extract_strided_slice %83 {offsets = [0, 0], sizes = [16, 16], strides = [1, 1]} : vector<16x450xf32> to vector<16x16xf32>
    %93 = tpu.concatenate %91, %92 in 1 : vector<16x434xf32>, vector<16x16xf32> -> vector<16x450xf32>
    %94 = arith.maximumf %90, %93 : vector<16x450xf32>
    %95 = arith.maximumf %87, %94 : vector<16x450xf32>
    %c0_18 = arith.constant 0 : index
    %c0_19 = arith.constant 0 : index
    %96 = vector.load %arg6[%c0_18, %c0_19] : memref<450x72xf32, #tpu.memory_space<vmem>>, vector<450x72xf32>
    %cst_20 = arith.constant dense<0.000000e+00> : vector<16x72xf32>
    %97 = tpu.matmul %95, %96, %cst_20 {dimension_numbers = #tpu.dot_dimension_numbers<[1], [0], [0], [1], [0, 0, 1, 1], [], []>} : vector<16x450xf32>, vector<450x72xf32>, vector<16x72xf32> -> vector<16x72xf32>
    %98 = vector.extract_strided_slice %97 {offsets = [0, 0], sizes = [16, 2], strides = [1, 1]} : vector<16x72xf32> to vector<16x2xf32>
    %99 = vector.extract_strided_slice %97 {offsets = [0, 2], sizes = [16, 2], strides = [1, 1]} : vector<16x72xf32> to vector<16x2xf32>
    %100 = vector.extract_strided_slice %97 {offsets = [0, 4], sizes = [16, 2], strides = [1, 1]} : vector<16x72xf32> to vector<16x2xf32>
    %101 = vector.extract_strided_slice %97 {offsets = [0, 6], sizes = [16, 2], strides = [1, 1]} : vector<16x72xf32> to vector<16x2xf32>
    %102 = vector.extract_strided_slice %97 {offsets = [0, 8], sizes = [16, 2], strides = [1, 1]} : vector<16x72xf32> to vector<16x2xf32>
    %103 = vector.extract_strided_slice %97 {offsets = [0, 10], sizes = [16, 2], strides = [1, 1]} : vector<16x72xf32> to vector<16x2xf32>
    %104 = vector.extract_strided_slice %97 {offsets = [0, 12], sizes = [16, 2], strides = [1, 1]} : vector<16x72xf32> to vector<16x2xf32>
    %105 = vector.extract_strided_slice %97 {offsets = [0, 14], sizes = [16, 2], strides = [1, 1]} : vector<16x72xf32> to vector<16x2xf32>
    %106 = vector.extract_strided_slice %97 {offsets = [0, 16], sizes = [16, 2], strides = [1, 1]} : vector<16x72xf32> to vector<16x2xf32>
    %107 = vector.extract_strided_slice %97 {offsets = [0, 18], sizes = [16, 2], strides = [1, 1]} : vector<16x72xf32> to vector<16x2xf32>
    %108 = vector.extract_strided_slice %97 {offsets = [0, 20], sizes = [16, 2], strides = [1, 1]} : vector<16x72xf32> to vector<16x2xf32>
    %109 = vector.extract_strided_slice %97 {offsets = [0, 22], sizes = [16, 2], strides = [1, 1]} : vector<16x72xf32> to vector<16x2xf32>
    %110 = vector.extract_strided_slice %97 {offsets = [0, 24], sizes = [16, 2], strides = [1, 1]} : vector<16x72xf32> to vector<16x2xf32>
    %111 = vector.extract_strided_slice %97 {offsets = [0, 26], sizes = [16, 2], strides = [1, 1]} : vector<16x72xf32> to vector<16x2xf32>
    %112 = vector.extract_strided_slice %97 {offsets = [0, 28], sizes = [16, 2], strides = [1, 1]} : vector<16x72xf32> to vector<16x2xf32>
    %113 = vector.extract_strided_slice %97 {offsets = [0, 30], sizes = [16, 2], strides = [1, 1]} : vector<16x72xf32> to vector<16x2xf32>
    %114 = vector.extract_strided_slice %97 {offsets = [0, 32], sizes = [16, 2], strides = [1, 1]} : vector<16x72xf32> to vector<16x2xf32>
    %115 = vector.extract_strided_slice %97 {offsets = [0, 34], sizes = [16, 2], strides = [1, 1]} : vector<16x72xf32> to vector<16x2xf32>
    %116 = vector.extract_strided_slice %97 {offsets = [0, 36], sizes = [16, 2], strides = [1, 1]} : vector<16x72xf32> to vector<16x2xf32>
    %117 = vector.extract_strided_slice %97 {offsets = [0, 38], sizes = [16, 2], strides = [1, 1]} : vector<16x72xf32> to vector<16x2xf32>
    %118 = vector.extract_strided_slice %97 {offsets = [0, 40], sizes = [16, 2], strides = [1, 1]} : vector<16x72xf32> to vector<16x2xf32>
    %119 = vector.extract_strided_slice %97 {offsets = [0, 42], sizes = [16, 2], strides = [1, 1]} : vector<16x72xf32> to vector<16x2xf32>
    %120 = vector.extract_strided_slice %97 {offsets = [0, 44], sizes = [16, 2], strides = [1, 1]} : vector<16x72xf32> to vector<16x2xf32>
    %121 = vector.extract_strided_slice %97 {offsets = [0, 46], sizes = [16, 2], strides = [1, 1]} : vector<16x72xf32> to vector<16x2xf32>
    %122 = vector.extract_strided_slice %97 {offsets = [0, 48], sizes = [16, 2], strides = [1, 1]} : vector<16x72xf32> to vector<16x2xf32>
    %123 = vector.extract_strided_slice %97 {offsets = [0, 50], sizes = [16, 2], strides = [1, 1]} : vector<16x72xf32> to vector<16x2xf32>
    %124 = vector.extract_strided_slice %97 {offsets = [0, 52], sizes = [16, 2], strides = [1, 1]} : vector<16x72xf32> to vector<16x2xf32>
    %125 = vector.extract_strided_slice %97 {offsets = [0, 54], sizes = [16, 2], strides = [1, 1]} : vector<16x72xf32> to vector<16x2xf32>
    %126 = vector.extract_strided_slice %97 {offsets = [0, 56], sizes = [16, 2], strides = [1, 1]} : vector<16x72xf32> to vector<16x2xf32>
    %127 = vector.extract_strided_slice %97 {offsets = [0, 58], sizes = [16, 2], strides = [1, 1]} : vector<16x72xf32> to vector<16x2xf32>
    %128 = vector.extract_strided_slice %97 {offsets = [0, 60], sizes = [16, 2], strides = [1, 1]} : vector<16x72xf32> to vector<16x2xf32>
    %129 = vector.extract_strided_slice %97 {offsets = [0, 62], sizes = [16, 2], strides = [1, 1]} : vector<16x72xf32> to vector<16x2xf32>
    %130 = vector.extract_strided_slice %97 {offsets = [0, 64], sizes = [16, 2], strides = [1, 1]} : vector<16x72xf32> to vector<16x2xf32>
    %131 = vector.extract_strided_slice %97 {offsets = [0, 66], sizes = [16, 2], strides = [1, 1]} : vector<16x72xf32> to vector<16x2xf32>
    %132 = vector.extract_strided_slice %97 {offsets = [0, 68], sizes = [16, 2], strides = [1, 1]} : vector<16x72xf32> to vector<16x2xf32>
    %133 = vector.extract_strided_slice %97 {offsets = [0, 70], sizes = [16, 2], strides = [1, 1]} : vector<16x72xf32> to vector<16x2xf32>
    %134 = tpu.concatenate %98, %99, %100, %101, %102, %103, %104, %105, %106, %107, %108, %109, %110, %111, %112, %113 in 0 : vector<16x2xf32>, vector<16x2xf32>, vector<16x2xf32>, vector<16x2xf32>, vector<16x2xf32>, vector<16x2xf32>, vector<16x2xf32>, vector<16x2xf32>, vector<16x2xf32>, vector<16x2xf32>, vector<16x2xf32>, vector<16x2xf32>, vector<16x2xf32>, vector<16x2xf32>, vector<16x2xf32>, vector<16x2xf32> -> vector<256x2xf32>
    %135 = tpu.concatenate %114, %115, %116, %117, %118, %119, %120, %121, %122, %123, %124, %125, %126, %127, %128, %129 in 0 : vector<16x2xf32>, vector<16x2xf32>, vector<16x2xf32>, vector<16x2xf32>, vector<16x2xf32>, vector<16x2xf32>, vector<16x2xf32>, vector<16x2xf32>, vector<16x2xf32>, vector<16x2xf32>, vector<16x2xf32>, vector<16x2xf32>, vector<16x2xf32>, vector<16x2xf32>, vector<16x2xf32>, vector<16x2xf32> -> vector<256x2xf32>
    %136 = tpu.concatenate %130, %131, %132, %133 in 0 : vector<16x2xf32>, vector<16x2xf32>, vector<16x2xf32>, vector<16x2xf32> -> vector<64x2xf32>
    %137 = tpu.concatenate %134, %135, %136 in 0 : vector<256x2xf32>, vector<256x2xf32>, vector<64x2xf32> -> vector<576x2xf32>
    %c0_21 = arith.constant 0 : index
    %c0_22 = arith.constant 0 : index
    %138 = vector.load %arg7[%c0_21, %c0_22] : memref<120x576xf32, #tpu.memory_space<vmem>>, vector<120x576xf32>
    %cst_23 = arith.constant dense<0.000000e+00> : vector<120x2xf32>
    %139 = tpu.matmul %138, %137, %cst_23 {dimension_numbers = #tpu.dot_dimension_numbers<[1], [0], [0], [1], [0, 0, 1, 1], [], []>} : vector<120x576xf32>, vector<576x2xf32>, vector<120x2xf32> -> vector<120x2xf32>
    %c0_24 = arith.constant 0 : index
    %c0_25 = arith.constant 0 : index
    %140 = vector.load %arg8[%c0_24, %c0_25] : memref<120x1xf32, #tpu.memory_space<vmem>>, vector<120x1xf32>
    %141 = vector.broadcast %140 : vector<120x1xf32> to vector<120x2xf32>
    %142 = arith.addf %139, %141 : vector<120x2xf32>
    %cst_26 = arith.constant 0.000000e+00 : f32
    %143 = vector.broadcast %cst_26 : f32 to vector<120x2xf32>
    %144 = arith.maximumf %142, %143 : vector<120x2xf32>
    %c0_27 = arith.constant 0 : index
    %c0_28 = arith.constant 0 : index
    %145 = vector.load %arg9[%c0_27, %c0_28] : memref<84x120xf32, #tpu.memory_space<vmem>>, vector<84x120xf32>
    %cst_29 = arith.constant dense<0.000000e+00> : vector<84x2xf32>
    %146 = tpu.matmul %145, %144, %cst_29 {dimension_numbers = #tpu.dot_dimension_numbers<[1], [0], [0], [1], [0, 0, 1, 1], [], []>} : vector<84x120xf32>, vector<120x2xf32>, vector<84x2xf32> -> vector<84x2xf32>
    %c0_30 = arith.constant 0 : index
    %c0_31 = arith.constant 0 : index
    %147 = vector.load %arg10[%c0_30, %c0_31] : memref<84x1xf32, #tpu.memory_space<vmem>>, vector<84x1xf32>
    %148 = vector.broadcast %147 : vector<84x1xf32> to vector<84x2xf32>
    %149 = arith.addf %146, %148 : vector<84x2xf32>
    %cst_32 = arith.constant 0.000000e+00 : f32
    %150 = vector.broadcast %cst_32 : f32 to vector<84x2xf32>
    %151 = arith.maximumf %149, %150 : vector<84x2xf32>
    %c0_33 = arith.constant 0 : index
    %c0_34 = arith.constant 0 : index
    %152 = vector.load %arg11[%c0_33, %c0_34] : memref<10x84xf32, #tpu.memory_space<vmem>>, vector<10x84xf32>
    %cst_35 = arith.constant dense<0.000000e+00> : vector<10x2xf32>
    %153 = tpu.matmul %152, %151, %cst_35 {dimension_numbers = #tpu.dot_dimension_numbers<[1], [0], [0], [1], [0, 0, 1, 1], [], []>} : vector<10x84xf32>, vector<84x2xf32>, vector<10x2xf32> -> vector<10x2xf32>
    %c0_36 = arith.constant 0 : index
    %c0_37 = arith.constant 0 : index
    %154 = vector.load %arg12[%c0_36, %c0_37] : memref<10x1xf32, #tpu.memory_space<vmem>>, vector<10x1xf32>
    %155 = vector.broadcast %154 : vector<10x1xf32> to vector<10x2xf32>
    %156 = arith.addf %153, %155 : vector<10x2xf32>
    %c0_38 = arith.constant 0 : index
    %c0_39 = arith.constant 0 : index
    %157 = vector.load %arg13[%c0_38, %c0_39] : memref<10x2xf32, #tpu.memory_space<vmem>>, vector<10x2xf32>
    tpu.vector_store %arg13[%c0_38, %c0_39], %156 {strides = array<i32>} : memref<10x2xf32, #tpu.memory_space<vmem>>, vector<10x2xf32>,
    return
  }
}

</mosaic_0001>

<llo_original>
// kernel: net_forward.1
$region0: #{net_forward.1}
  #allocation0 [shape = 'u32[]', space=smem, size = 0x4, offset = 0x4, fixed_abs, tag = 'smem constant byte address 0x4 - core index']
  #allocation1 [shape = 'u32[144,128]{1,0:T(1,128)}', space=vmem, size = 0x12000, scoped, tag = 'internal scratch']
  %s0 = inlined_call_operand.vmem [shape: f32[1,2048], index: 0, kind: input, shape index: {}]
  %s1 = inlined_call_operand.vmem [shape: f32[6,9], index: 1, kind: input, shape index: {}]
  %s2 = inlined_call_operand.vmem [shape: f32[6,1], index: 2, kind: input, shape index: {}]
  %s3 = inlined_call_operand.vmem [shape: f32[1024,225], index: 3, kind: input, shape index: {}]
  %s4 = inlined_call_operand.vmem [shape: f32[16,54], index: 4, kind: input, shape index: {}]
  %s5 = inlined_call_operand.vmem [shape: f32[16,1], index: 5, kind: input, shape index: {}]
  %s6 = inlined_call_operand.vmem [shape: f32[450,72], index: 6, kind: input, shape index: {}]
  %s7 = inlined_call_operand.vmem [shape: f32[120,576], index: 7, kind: input, shape index: {}]
  %s8 = inlined_call_operand.vmem [shape: f32[120,1], index: 8, kind: input, shape index: {}]
  %s9 = inlined_call_operand.vmem [shape: f32[84,120], index: 9, kind: input, shape index: {}]
  %s10 = inlined_call_operand.vmem [shape: f32[84,1], index: 10, kind: input, shape index: {}]
  %s11 = inlined_call_operand.vmem [shape: f32[10,84], index: 11, kind: input, shape index: {}]
  %s12 = inlined_call_operand.vmem [shape: f32[10,1], index: 12, kind: input, shape index: {}]
  %s13 = inlined_call_operand.vmem [shape: f32[10,2], index: 13, kind: output, shape index: {}]
  %s14 = sld [smem:[#allocation0]]
  $region62: #{net_forward.1} parent=0
    _
  %s16 = ssub.s32 1, %s14
  %s17 = scalar_select 0, %s16, %s14
  // Predicated region
  $region2: #{net_forward.1} parent=0 // pred_check
    _
  $region3: #{net_forward.1} parent=0 // pred_check_branch
    %19 = sbr.rel (0) target = $region5
  $region4: #{net_forward.1} parent=0 // pred_region
    _
  $region5: #{net_forward.1} parent=0 // pred_fallthru
    _
  // Predicated region
  $region6: #{net_forward.1} parent=0 // pred_check
    _
  $region7: #{net_forward.1} parent=0 // pred_check_branch
    %21 = sbr.rel (0) target = $region9
  $region8: #{net_forward.1} parent=0 // pred_region
    _
  $region9: #{net_forward.1} parent=0 // pred_fallthru
    _
  // Predicated region
  $region10: #{net_forward.1} parent=0 // pred_check
    _
  $region11: #{net_forward.1} parent=0 // pred_check_branch
    %23 = sbr.rel (0) target = $region13
  $region12: #{net_forward.1} parent=0 // pred_region
    _
  $region13: #{net_forward.1} parent=0 // pred_fallthru
    _
  // Predicated region
  $region14: #{net_forward.1} parent=0 // pred_check
    _
  $region15: #{net_forward.1} parent=0 // pred_check_branch
    %25 = sbr.rel (0) target = $region17
  $region16: #{net_forward.1} parent=0 // pred_region
    _
  $region17: #{net_forward.1} parent=0 // pred_fallthru
    _
  // Predicated region
  $region18: #{net_forward.1} parent=0 // pred_check
    _
  $region19: #{net_forward.1} parent=0 // pred_check_branch
    %27 = sbr.rel (0) target = $region21
  $region20: #{net_forward.1} parent=0 // pred_region
    _
  $region21: #{net_forward.1} parent=0 // pred_fallthru
    _
  // Predicated region
  $region22: #{net_forward.1} parent=0 // pred_check
    _
  $region23: #{net_forward.1} parent=0 // pred_check_branch
    %29 = sbr.rel (0) target = $region25
  $region24: #{net_forward.1} parent=0 // pred_region
    _
  $region25: #{net_forward.1} parent=0 // pred_fallthru
    _
  // Predicated region
  $region26: #{net_forward.1} parent=0 // pred_check
    _
  $region27: #{net_forward.1} parent=0 // pred_check_branch
    %31 = sbr.rel (0) target = $region29
  $region28: #{net_forward.1} parent=0 // pred_region
    _
  $region29: #{net_forward.1} parent=0 // pred_fallthru
    _
  // Predicated region
  $region30: #{net_forward.1} parent=0 // pred_check
    _
  $region31: #{net_forward.1} parent=0 // pred_check_branch
    %33 = sbr.rel (0) target = $region33
  $region32: #{net_forward.1} parent=0 // pred_region
    _
  $region33: #{net_forward.1} parent=0 // pred_fallthru
    _
  // Predicated region
  $region34: #{net_forward.1} parent=0 // pred_check
    _
  $region35: #{net_forward.1} parent=0 // pred_check_branch
    %35 = sbr.rel (0) target = $region37
  $region36: #{net_forward.1} parent=0 // pred_region
    _
  $region37: #{net_forward.1} parent=0 // pred_fallthru
    _
  // Predicated region
  $region38: #{net_forward.1} parent=0 // pred_check
    _
  $region39: #{net_forward.1} parent=0 // pred_check_branch
    %37 = sbr.rel (0) target = $region41
  $region40: #{net_forward.1} parent=0 // pred_region
    _
  $region41: #{net_forward.1} parent=0 // pred_fallthru
    _
  // Predicated region
  $region42: #{net_forward.1} parent=0 // pred_check
    _
  $region43: #{net_forward.1} parent=0 // pred_check_branch
    %39 = sbr.rel (0) target = $region45
  $region44: #{net_forward.1} parent=0 // pred_region
    _
  $region45: #{net_forward.1} parent=0 // pred_fallthru
    _
  // Predicated region
  $region46: #{net_forward.1} parent=0 // pred_check
    _
  $region47: #{net_forward.1} parent=0 // pred_check_branch
    %41 = sbr.rel (0) target = $region49
  $region48: #{net_forward.1} parent=0 // pred_region
    _
  $region49: #{net_forward.1} parent=0 // pred_fallthru
    _
  // Predicated region
  $region50: #{net_forward.1} parent=0 // pred_check
    _
  $region51: #{net_forward.1} parent=0 // pred_check_branch
    %43 = sbr.rel (0) target = $region53
  $region52: #{net_forward.1} parent=0 // pred_region
    _
  $region53: #{net_forward.1} parent=0 // pred_fallthru
    _
  %v44 = vld [vmem:[%s0] sm:$0xff]
  %v45 = vld [vmem:[%s0 + $0x8] sm:$0xff]
  %v48 = vlaneseq
  %v49 = vshrl.u32 %v48, 7
  %v50 = vsub.s32 0, %v49
  %v51 = vrot.slane %v44, %v50
  %v52 = vlaneseq
  %v53 = vshrl.u32 %v52, 7
  %v54 = vsub.s32 1, %v53
  %v55 = vrot.slane %v44, %v54
  %v56 = vlaneseq
  %v57 = vshrl.u32 %v56, 7
  %v58 = vsub.s32 2, %v57
  %v59 = vrot.slane %v44, %v58
  %v60 = vlaneseq
  %v61 = vshrl.u32 %v60, 7
  %v62 = vsub.s32 3, %v61
  %v63 = vrot.slane %v44, %v62
  %v64 = vlaneseq
  %v65 = vshrl.u32 %v64, 7
  %v66 = vsub.s32 4, %v65
  %v67 = vrot.slane %v44, %v66
  %v68 = vlaneseq
  %v69 = vshrl.u32 %v68, 7
  %v70 = vsub.s32 5, %v69
  %v71 = vrot.slane %v44, %v70
  %v72 = vlaneseq
  %v73 = vshrl.u32 %v72, 7
  %v74 = vsub.s32 6, %v73
  %v75 = vrot.slane %v44, %v74
  %v76 = vlaneseq
  %v77 = vshrl.u32 %v76, 7
  %v78 = vsub.s32 7, %v77
  %v79 = vrot.slane %v44, %v78
  %v80 = vlaneseq
  %v81 = vshrl.u32 %v80, 7
  %v82 = vsub.s32 0, %v81
  %v83 = vrot.slane %v45, %v82
  %v84 = vlaneseq
  %v85 = vshrl.u32 %v84, 7
  %v86 = vsub.s32 1, %v85
  %v87 = vrot.slane %v45, %v86
  %v88 = vlaneseq
  %v89 = vshrl.u32 %v88, 7
  %v90 = vsub.s32 2, %v89
  %v91 = vrot.slane %v45, %v90
  %v92 = vlaneseq
  %v93 = vshrl.u32 %v92, 7
  %v94 = vsub.s32 3, %v93
  %v95 = vrot.slane %v45, %v94
  %v96 = vlaneseq
  %v97 = vshrl.u32 %v96, 7
  %v98 = vsub.s32 4, %v97
  %v99 = vrot.slane %v45, %v98
  %v100 = vlaneseq
  %v101 = vshrl.u32 %v100, 7
  %v102 = vsub.s32 5, %v101
  %v103 = vrot.slane %v45, %v102
  %v104 = vlaneseq
  %v105 = vshrl.u32 %v104, 7
  %v106 = vsub.s32 6, %v105
  %v107 = vrot.slane %v45, %v106
  %v108 = vlaneseq
  %v109 = vshrl.u32 %v108, 7
  %v110 = vsub.s32 7, %v109
  %v111 = vrot.slane %v45, %v110
  %112 = vrot.lane.b32.xlu0 %v51, 127
  %v113 = vpop.permute.xlu0 %112
  %114 = vrot.lane.b32.xlu0 %v55, 127
  %v115 = vpop.permute.xlu0 %114
  %116 = vrot.lane.b32.xlu0 %v59, 127
  %v117 = vpop.permute.xlu0 %116
  %118 = vrot.lane.b32.xlu0 %v63, 127
  %v119 = vpop.permute.xlu0 %118
  %120 = vrot.lane.b32.xlu0 %v67, 127
  %v121 = vpop.permute.xlu0 %120
  %122 = vrot.lane.b32.xlu0 %v71, 127
  %v123 = vpop.permute.xlu0 %122
  %124 = vrot.lane.b32.xlu0 %v75, 127
  %v125 = vpop.permute.xlu0 %124
  %126 = vrot.lane.b32.xlu0 %v79, 127
  %v127 = vpop.permute.xlu0 %126
  %128 = vrot.lane.b32.xlu0 %v83, 127
  %v129 = vpop.permute.xlu0 %128
  %130 = vrot.lane.b32.xlu0 %v87, 127
  %v131 = vpop.permute.xlu0 %130
  %132 = vrot.lane.b32.xlu0 %v91, 127
  %v133 = vpop.permute.xlu0 %132
  %134 = vrot.lane.b32.xlu0 %v95, 127
  %v135 = vpop.permute.xlu0 %134
  %136 = vrot.lane.b32.xlu0 %v99, 127
  %v137 = vpop.permute.xlu0 %136
  %138 = vrot.lane.b32.xlu0 %v103, 127
  %v139 = vpop.permute.xlu0 %138
  %140 = vrot.lane.b32.xlu0 %v107, 127
  %v141 = vpop.permute.xlu0 %140
  %142 = vrot.lane.b32.xlu0 %v111, 127
  %v143 = vpop.permute.xlu0 %142
  %vm144 = vcmask 1039360
  %v145 = vsel %vm144, %v113, %v115
  %v146 = vsel %vm144, %v115, %v117
  %v147 = vsel %vm144, %v117, %v119
  %v148 = vsel %vm144, %v119, %v121
  %v149 = vsel %vm144, %v121, %v123
  %v150 = vsel %vm144, %v123, %v125
  %v151 = vsel %vm144, %v125, %v127
  %v152 = vsel %vm144, %v127, %v129
  %v153 = vsel %vm144, %v129, %v131
  %v154 = vsel %vm144, %v131, %v133
  %v155 = vsel %vm144, %v133, %v135
  %v156 = vsel %vm144, %v135, %v137
  %v157 = vsel %vm144, %v137, %v139
  %v158 = vsel %vm144, %v139, %v141
  %v159 = vsel %vm144, %v141, %v143
  %v162 = vsel %vm144, %v143, %v113
  %163 = vrot.lane.b32.xlu0 %v51, 126
  %v164 = vpop.permute.xlu0 %163
  %165 = vrot.lane.b32.xlu0 %v55, 126
  %v166 = vpop.permute.xlu0 %165
  %167 = vrot.lane.b32.xlu0 %v59, 126
  %v168 = vpop.permute.xlu0 %167
  %169 = vrot.lane.b32.xlu0 %v63, 126
  %v170 = vpop.permute.xlu0 %169
  %171 = vrot.lane.b32.xlu0 %v67, 126
  %v172 = vpop.permute.xlu0 %171
  %173 = vrot.lane.b32.xlu0 %v71, 126
  %v174 = vpop.permute.xlu0 %173
  %175 = vrot.lane.b32.xlu0 %v75, 126
  %v176 = vpop.permute.xlu0 %175
  %177 = vrot.lane.b32.xlu0 %v79, 126
  %v178 = vpop.permute.xlu0 %177
  %179 = vrot.lane.b32.xlu0 %v83, 126
  %v180 = vpop.permute.xlu0 %179
  %181 = vrot.lane.b32.xlu0 %v87, 126
  %v182 = vpop.permute.xlu0 %181
  %183 = vrot.lane.b32.xlu0 %v91, 126
  %v184 = vpop.permute.xlu0 %183
  %185 = vrot.lane.b32.xlu0 %v95, 126
  %v186 = vpop.permute.xlu0 %185
  %187 = vrot.lane.b32.xlu0 %v99, 126
  %v188 = vpop.permute.xlu0 %187
  %189 = vrot.lane.b32.xlu0 %v103, 126
  %v190 = vpop.permute.xlu0 %189
  %191 = vrot.lane.b32.xlu0 %v107, 126
  %v192 = vpop.permute.xlu0 %191
  %193 = vrot.lane.b32.xlu0 %v111, 126
  %v194 = vpop.permute.xlu0 %193
  %vm195 = vcmask 1031168
  %v196 = vsel %vm195, %v164, %v166
  %v197 = vsel %vm195, %v166, %v168
  %v198 = vsel %vm195, %v168, %v170
  %v199 = vsel %vm195, %v170, %v172
  %v200 = vsel %vm195, %v172, %v174
  %v201 = vsel %vm195, %v174, %v176
  %v202 = vsel %vm195, %v176, %v178
  %v203 = vsel %vm195, %v178, %v180
  %v204 = vsel %vm195, %v180, %v182
  %v205 = vsel %vm195, %v182, %v184
  %v206 = vsel %vm195, %v184, %v186
  %v207 = vsel %vm195, %v186, %v188
  %v208 = vsel %vm195, %v188, %v190
  %v209 = vsel %vm195, %v190, %v192
  %v210 = vsel %vm195, %v192, %v194
  %v213 = vsel %vm195, %v194, %v164
  %214 = vrot.lane.b32.xlu0 %v51, 96
  %v215 = vpop.permute.xlu0 %214
  %216 = vrot.lane.b32.xlu0 %v55, 96
  %v217 = vpop.permute.xlu0 %216
  %218 = vrot.lane.b32.xlu0 %v59, 96
  %v219 = vpop.permute.xlu0 %218
  %220 = vrot.lane.b32.xlu0 %v63, 96
  %v221 = vpop.permute.xlu0 %220
  %222 = vrot.lane.b32.xlu0 %v67, 96
  %v223 = vpop.permute.xlu0 %222
  %224 = vrot.lane.b32.xlu0 %v71, 96
  %v225 = vpop.permute.xlu0 %224
  %226 = vrot.lane.b32.xlu0 %v75, 96
  %v227 = vpop.permute.xlu0 %226
  %228 = vrot.lane.b32.xlu0 %v79, 96
  %v229 = vpop.permute.xlu0 %228
  %230 = vrot.lane.b32.xlu0 %v83, 96
  %v231 = vpop.permute.xlu0 %230
  %232 = vrot.lane.b32.xlu0 %v87, 96
  %v233 = vpop.permute.xlu0 %232
  %234 = vrot.lane.b32.xlu0 %v91, 96
  %v235 = vpop.permute.xlu0 %234
  %236 = vrot.lane.b32.xlu0 %v95, 96
  %v237 = vpop.permute.xlu0 %236
  %238 = vrot.lane.b32.xlu0 %v99, 96
  %v239 = vpop.permute.xlu0 %238
  %240 = vrot.lane.b32.xlu0 %v103, 96
  %v241 = vpop.permute.xlu0 %240
  %242 = vrot.lane.b32.xlu0 %v107, 96
  %v243 = vpop.permute.xlu0 %242
  %244 = vrot.lane.b32.xlu0 %v111, 96
  %v245 = vpop.permute.xlu0 %244
  %vm246 = vcmask 785408
  %v247 = vsel %vm246, %v215, %v217
  %v248 = vsel %vm246, %v217, %v219
  %v249 = vsel %vm246, %v219, %v221
  %v250 = vsel %vm246, %v221, %v223
  %v251 = vsel %vm246, %v223, %v225
  %v252 = vsel %vm246, %v225, %v227
  %v253 = vsel %vm246, %v227, %v229
  %v254 = vsel %vm246, %v229, %v231
  %v255 = vsel %vm246, %v231, %v233
  %v256 = vsel %vm246, %v233, %v235
  %v257 = vsel %vm246, %v235, %v237
  %v258 = vsel %vm246, %v237, %v239
  %v259 = vsel %vm246, %v239, %v241
  %v260 = vsel %vm246, %v241, %v243
  %v261 = vsel %vm246, %v243, %v245
  %v264 = vsel %vm246, %v245, %v215
  %265 = vrot.lane.b32.xlu0 %v51, 95
  %v266 = vpop.permute.xlu0 %265
  %267 = vrot.lane.b32.xlu0 %v55, 95
  %v268 = vpop.permute.xlu0 %267
  %269 = vrot.lane.b32.xlu0 %v59, 95
  %v270 = vpop.permute.xlu0 %269
  %271 = vrot.lane.b32.xlu0 %v63, 95
  %v272 = vpop.permute.xlu0 %271
  %273 = vrot.lane.b32.xlu0 %v67, 95
  %v274 = vpop.permute.xlu0 %273
  %275 = vrot.lane.b32.xlu0 %v71, 95
  %v276 = vpop.permute.xlu0 %275
  %277 = vrot.lane.b32.xlu0 %v75, 95
  %v278 = vpop.permute.xlu0 %277
  %279 = vrot.lane.b32.xlu0 %v79, 95
  %v280 = vpop.permute.xlu0 %279
  %281 = vrot.lane.b32.xlu0 %v83, 95
  %v282 = vpop.permute.xlu0 %281
  %283 = vrot.lane.b32.xlu0 %v87, 95
  %v284 = vpop.permute.xlu0 %283
  %285 = vrot.lane.b32.xlu0 %v91, 95
  %v286 = vpop.permute.xlu0 %285
  %287 = vrot.lane.b32.xlu0 %v95, 95
  %v288 = vpop.permute.xlu0 %287
  %289 = vrot.lane.b32.xlu0 %v99, 95
  %v290 = vpop.permute.xlu0 %289
  %291 = vrot.lane.b32.xlu0 %v103, 95
  %v292 = vpop.permute.xlu0 %291
  %293 = vrot.lane.b32.xlu0 %v107, 95
  %v294 = vpop.permute.xlu0 %293
  %295 = vrot.lane.b32.xlu0 %v111, 95
  %v296 = vpop.permute.xlu0 %295
  %vm297 = vcmask 777216
  %v298 = vsel %vm297, %v266, %v268
  %v299 = vsel %vm297, %v268, %v270
  %v300 = vsel %vm297, %v270, %v272
  %v301 = vsel %vm297, %v272, %v274
  %v302 = vsel %vm297, %v274, %v276
  %v303 = vsel %vm297, %v276, %v278
  %v304 = vsel %vm297, %v278, %v280
  %v305 = vsel %vm297, %v280, %v282
  %v306 = vsel %vm297, %v282, %v284
  %v307 = vsel %vm297, %v284, %v286
  %v308 = vsel %vm297, %v286, %v288
  %v309 = vsel %vm297, %v288, %v290
  %v310 = vsel %vm297, %v290, %v292
  %v311 = vsel %vm297, %v292, %v294
  %v312 = vsel %vm297, %v294, %v296
  %v315 = vsel %vm297, %v296, %v266
  %316 = vrot.lane.b32.xlu0 %v51, 94
  %v317 = vpop.permute.xlu0 %316
  %318 = vrot.lane.b32.xlu0 %v55, 94
  %v319 = vpop.permute.xlu0 %318
  %320 = vrot.lane.b32.xlu0 %v59, 94
  %v321 = vpop.permute.xlu0 %320
  %322 = vrot.lane.b32.xlu0 %v63, 94
  %v323 = vpop.permute.xlu0 %322
  %324 = vrot.lane.b32.xlu0 %v67, 94
  %v325 = vpop.permute.xlu0 %324
  %326 = vrot.lane.b32.xlu0 %v71, 94
  %v327 = vpop.permute.xlu0 %326
  %328 = vrot.lane.b32.xlu0 %v75, 94
  %v329 = vpop.permute.xlu0 %328
  %330 = vrot.lane.b32.xlu0 %v79, 94
  %v331 = vpop.permute.xlu0 %330
  %332 = vrot.lane.b32.xlu0 %v83, 94
  %v333 = vpop.permute.xlu0 %332
  %334 = vrot.lane.b32.xlu0 %v87, 94
  %v335 = vpop.permute.xlu0 %334
  %336 = vrot.lane.b32.xlu0 %v91, 94
  %v337 = vpop.permute.xlu0 %336
  %338 = vrot.lane.b32.xlu0 %v95, 94
  %v339 = vpop.permute.xlu0 %338
  %340 = vrot.lane.b32.xlu0 %v99, 94
  %v341 = vpop.permute.xlu0 %340
  %342 = vrot.lane.b32.xlu0 %v103, 94
  %v343 = vpop.permute.xlu0 %342
  %344 = vrot.lane.b32.xlu0 %v107, 94
  %v345 = vpop.permute.xlu0 %344
  %346 = vrot.lane.b32.xlu0 %v111, 94
  %v347 = vpop.permute.xlu0 %346
  %vm348 = vcmask 769024
  %v349 = vsel %vm348, %v317, %v319
  %v350 = vsel %vm348, %v319, %v321
  %v351 = vsel %vm348, %v321, %v323
  %v352 = vsel %vm348, %v323, %v325
  %v353 = vsel %vm348, %v325, %v327
  %v354 = vsel %vm348, %v327, %v329
  %v355 = vsel %vm348, %v329, %v331
  %v356 = vsel %vm348, %v331, %v333
  %v357 = vsel %vm348, %v333, %v335
  %v358 = vsel %vm348, %v335, %v337
  %v359 = vsel %vm348, %v337, %v339
  %v360 = vsel %vm348, %v339, %v341
  %v361 = vsel %vm348, %v341, %v343
  %v362 = vsel %vm348, %v343, %v345
  %v363 = vsel %vm348, %v345, %v347
  %v366 = vsel %vm348, %v347, %v317
  %367 = vrot.lane.b32.xlu0 %v51, 64
  %v368 = vpop.permute.xlu0 %367
  %369 = vrot.lane.b32.xlu0 %v55, 64
  %v370 = vpop.permute.xlu0 %369
  %371 = vrot.lane.b32.xlu0 %v59, 64
  %v372 = vpop.permute.xlu0 %371
  %373 = vrot.lane.b32.xlu0 %v63, 64
  %v374 = vpop.permute.xlu0 %373
  %375 = vrot.lane.b32.xlu0 %v67, 64
  %v376 = vpop.permute.xlu0 %375
  %377 = vrot.lane.b32.xlu0 %v71, 64
  %v378 = vpop.permute.xlu0 %377
  %379 = vrot.lane.b32.xlu0 %v75, 64
  %v380 = vpop.permute.xlu0 %379
  %381 = vrot.lane.b32.xlu0 %v79, 64
  %v382 = vpop.permute.xlu0 %381
  %383 = vrot.lane.b32.xlu0 %v83, 64
  %v384 = vpop.permute.xlu0 %383
  %385 = vrot.lane.b32.xlu0 %v87, 64
  %v386 = vpop.permute.xlu0 %385
  %387 = vrot.lane.b32.xlu0 %v91, 64
  %v388 = vpop.permute.xlu0 %387
  %389 = vrot.lane.b32.xlu0 %v95, 64
  %v390 = vpop.permute.xlu0 %389
  %391 = vrot.lane.b32.xlu0 %v99, 64
  %v392 = vpop.permute.xlu0 %391
  %393 = vrot.lane.b32.xlu0 %v103, 64
  %v394 = vpop.permute.xlu0 %393
  %395 = vrot.lane.b32.xlu0 %v107, 64
  %v396 = vpop.permute.xlu0 %395
  %397 = vrot.lane.b32.xlu0 %v111, 64
  %v398 = vpop.permute.xlu0 %397
  %vm399 = vcmask 523264
  %v400 = vsel %vm399, %v368, %v370
  %v401 = vsel %vm399, %v370, %v372
  %v402 = vsel %vm399, %v372, %v374
  %v403 = vsel %vm399, %v374, %v376
  %v404 = vsel %vm399, %v376, %v378
  %v405 = vsel %vm399, %v378, %v380
  %v406 = vsel %vm399, %v380, %v382
  %v407 = vsel %vm399, %v382, %v384
  %v408 = vsel %vm399, %v384, %v386
  %v409 = vsel %vm399, %v386, %v388
  %v410 = vsel %vm399, %v388, %v390
  %v411 = vsel %vm399, %v390, %v392
  %v412 = vsel %vm399, %v392, %v394
  %v413 = vsel %vm399, %v394, %v396
  %v414 = vsel %vm399, %v396, %v398
  %v417 = vsel %vm399, %v398, %v368
  %418 = vrot.lane.b32.xlu0 %v51, 63
  %v419 = vpop.permute.xlu0 %418
  %420 = vrot.lane.b32.xlu0 %v55, 63
  %v421 = vpop.permute.xlu0 %420
  %422 = vrot.lane.b32.xlu0 %v59, 63
  %v423 = vpop.permute.xlu0 %422
  %424 = vrot.lane.b32.xlu0 %v63, 63
  %v425 = vpop.permute.xlu0 %424
  %426 = vrot.lane.b32.xlu0 %v67, 63
  %v427 = vpop.permute.xlu0 %426
  %428 = vrot.lane.b32.xlu0 %v71, 63
  %v429 = vpop.permute.xlu0 %428
  %430 = vrot.lane.b32.xlu0 %v75, 63
  %v431 = vpop.permute.xlu0 %430
  %432 = vrot.lane.b32.xlu0 %v79, 63
  %v433 = vpop.permute.xlu0 %432
  %434 = vrot.lane.b32.xlu0 %v83, 63
  %v435 = vpop.permute.xlu0 %434
  %436 = vrot.lane.b32.xlu0 %v87, 63
  %v437 = vpop.permute.xlu0 %436
  %438 = vrot.lane.b32.xlu0 %v91, 63
  %v439 = vpop.permute.xlu0 %438
  %440 = vrot.lane.b32.xlu0 %v95, 63
  %v441 = vpop.permute.xlu0 %440
  %442 = vrot.lane.b32.xlu0 %v99, 63
  %v443 = vpop.permute.xlu0 %442
  %444 = vrot.lane.b32.xlu0 %v103, 63
  %v445 = vpop.permute.xlu0 %444
  %446 = vrot.lane.b32.xlu0 %v107, 63
  %v447 = vpop.permute.xlu0 %446
  %448 = vrot.lane.b32.xlu0 %v111, 63
  %v449 = vpop.permute.xlu0 %448
  %vm450 = vcmask 515072
  %v451 = vsel %vm450, %v419, %v421
  %v452 = vsel %vm450, %v421, %v423
  %v453 = vsel %vm450, %v423, %v425
  %v454 = vsel %vm450, %v425, %v427
  %v455 = vsel %vm450, %v427, %v429
  %v456 = vsel %vm450, %v429, %v431
  %v457 = vsel %vm450, %v431, %v433
  %v458 = vsel %vm450, %v433, %v435
  %v459 = vsel %vm450, %v435, %v437
  %v460 = vsel %vm450, %v437, %v439
  %v461 = vsel %vm450, %v439, %v441
  %v462 = vsel %vm450, %v441, %v443
  %v463 = vsel %vm450, %v443, %v445
  %v464 = vsel %vm450, %v445, %v447
  %v465 = vsel %vm450, %v447, %v449
  %v468 = vsel %vm450, %v449, %v419
  %469 = vrot.lane.b32.xlu0 %v51, 62
  %v470 = vpop.permute.xlu0 %469
  %471 = vrot.lane.b32.xlu0 %v55, 62
  %v472 = vpop.permute.xlu0 %471
  %473 = vrot.lane.b32.xlu0 %v59, 62
  %v474 = vpop.permute.xlu0 %473
  %475 = vrot.lane.b32.xlu0 %v63, 62
  %v476 = vpop.permute.xlu0 %475
  %477 = vrot.lane.b32.xlu0 %v67, 62
  %v478 = vpop.permute.xlu0 %477
  %479 = vrot.lane.b32.xlu0 %v71, 62
  %v480 = vpop.permute.xlu0 %479
  %481 = vrot.lane.b32.xlu0 %v75, 62
  %v482 = vpop.permute.xlu0 %481
  %483 = vrot.lane.b32.xlu0 %v79, 62
  %v484 = vpop.permute.xlu0 %483
  %485 = vrot.lane.b32.xlu0 %v83, 62
  %v486 = vpop.permute.xlu0 %485
  %487 = vrot.lane.b32.xlu0 %v87, 62
  %v488 = vpop.permute.xlu0 %487
  %489 = vrot.lane.b32.xlu0 %v91, 62
  %v490 = vpop.permute.xlu0 %489
  %491 = vrot.lane.b32.xlu0 %v95, 62
  %v492 = vpop.permute.xlu0 %491
  %493 = vrot.lane.b32.xlu0 %v99, 62
  %v494 = vpop.permute.xlu0 %493
  %495 = vrot.lane.b32.xlu0 %v103, 62
  %v496 = vpop.permute.xlu0 %495
  %497 = vrot.lane.b32.xlu0 %v107, 62
  %v498 = vpop.permute.xlu0 %497
  %499 = vrot.lane.b32.xlu0 %v111, 62
  %v500 = vpop.permute.xlu0 %499
  %vm501 = vcmask 506880
  %v502 = vsel %vm501, %v470, %v472
  %v503 = vsel %vm501, %v472, %v474
  %v504 = vsel %vm501, %v474, %v476
  %v505 = vsel %vm501, %v476, %v478
  %v506 = vsel %vm501, %v478, %v480
  %v507 = vsel %vm501, %v480, %v482
  %v508 = vsel %vm501, %v482, %v484
  %v509 = vsel %vm501, %v484, %v486
  %v510 = vsel %vm501, %v486, %v488
  %v511 = vsel %vm501, %v488, %v490
  %v512 = vsel %vm501, %v490, %v492
  %v513 = vsel %vm501, %v492, %v494
  %v514 = vsel %vm501, %v494, %v496
  %v515 = vsel %vm501, %v496, %v498
  %v516 = vsel %vm501, %v498, %v500
  %v519 = vsel %vm501, %v500, %v470
  %v537 = vrot.slane %v145, 7
  %v538 = vrot.slane %v146, 7
  %v539 = vrot.slane %v147, 7
  %v540 = vrot.slane %v148, 7
  %v541 = vrot.slane %v149, 7
  %v542 = vrot.slane %v150, 7
  %v543 = vrot.slane %v151, 7
  %v544 = vrot.slane %v152, 7
  %v545 = vrot.slane %v153, 7
  %v546 = vrot.slane %v154, 7
  %v547 = vrot.slane %v155, 7
  %v548 = vrot.slane %v156, 7
  %v549 = vrot.slane %v157, 7
  %v550 = vrot.slane %v158, 7
  %v551 = vrot.slane %v159, 7
  %v552 = vrot.slane %v162, 7
  %v570 = vrot.slane %v196, 6
  %v571 = vrot.slane %v197, 6
  %v572 = vrot.slane %v198, 6
  %v573 = vrot.slane %v199, 6
  %v574 = vrot.slane %v200, 6
  %v575 = vrot.slane %v201, 6
  %v576 = vrot.slane %v202, 6
  %v577 = vrot.slane %v203, 6
  %v578 = vrot.slane %v204, 6
  %v579 = vrot.slane %v205, 6
  %v580 = vrot.slane %v206, 6
  %v581 = vrot.slane %v207, 6
  %v582 = vrot.slane %v208, 6
  %v583 = vrot.slane %v209, 6
  %v584 = vrot.slane %v210, 6
  %v585 = vrot.slane %v213, 6
  %v603 = vrot.slane %v247, 5
  %v604 = vrot.slane %v248, 5
  %v605 = vrot.slane %v249, 5
  %v606 = vrot.slane %v250, 5
  %v607 = vrot.slane %v251, 5
  %v608 = vrot.slane %v252, 5
  %v609 = vrot.slane %v253, 5
  %v610 = vrot.slane %v254, 5
  %v611 = vrot.slane %v255, 5
  %v612 = vrot.slane %v256, 5
  %v613 = vrot.slane %v257, 5
  %v614 = vrot.slane %v258, 5
  %v615 = vrot.slane %v259, 5
  %v616 = vrot.slane %v260, 5
  %v617 = vrot.slane %v261, 5
  %v618 = vrot.slane %v264, 5
  %v636 = vrot.slane %v298, 4
  %v637 = vrot.slane %v299, 4
  %v638 = vrot.slane %v300, 4
  %v639 = vrot.slane %v301, 4
  %v640 = vrot.slane %v302, 4
  %v641 = vrot.slane %v303, 4
  %v642 = vrot.slane %v304, 4
  %v643 = vrot.slane %v305, 4
  %v644 = vrot.slane %v306, 4
  %v645 = vrot.slane %v307, 4
  %v646 = vrot.slane %v308, 4
  %v647 = vrot.slane %v309, 4
  %v648 = vrot.slane %v310, 4
  %v649 = vrot.slane %v311, 4
  %v650 = vrot.slane %v312, 4
  %v651 = vrot.slane %v315, 4
  %v669 = vrot.slane %v349, 3
  %v670 = vrot.slane %v350, 3
  %v671 = vrot.slane %v351, 3
  %v672 = vrot.slane %v352, 3
  %v673 = vrot.slane %v353, 3
  %v674 = vrot.slane %v354, 3
  %v675 = vrot.slane %v355, 3
  %v676 = vrot.slane %v356, 3
  %v677 = vrot.slane %v357, 3
  %v678 = vrot.slane %v358, 3
  %v679 = vrot.slane %v359, 3
  %v680 = vrot.slane %v360, 3
  %v681 = vrot.slane %v361, 3
  %v682 = vrot.slane %v362, 3
  %v683 = vrot.slane %v363, 3
  %v684 = vrot.slane %v366, 3
  %v702 = vrot.slane %v400, 2
  %v703 = vrot.slane %v401, 2
  %v704 = vrot.slane %v402, 2
  %v705 = vrot.slane %v403, 2
  %v706 = vrot.slane %v404, 2
  %v707 = vrot.slane %v405, 2
  %v708 = vrot.slane %v406, 2
  %v709 = vrot.slane %v407, 2
  %v710 = vrot.slane %v408, 2
  %v711 = vrot.slane %v409, 2
  %v712 = vrot.slane %v410, 2
  %v713 = vrot.slane %v411, 2
  %v714 = vrot.slane %v412, 2
  %v715 = vrot.slane %v413, 2
  %v716 = vrot.slane %v414, 2
  %v717 = vrot.slane %v417, 2
  %v735 = vrot.slane %v451, 1
  %v736 = vrot.slane %v452, 1
  %v737 = vrot.slane %v453, 1
  %v738 = vrot.slane %v454, 1
  %v739 = vrot.slane %v455, 1
  %v740 = vrot.slane %v456, 1
  %v741 = vrot.slane %v457, 1
  %v742 = vrot.slane %v458, 1
  %v743 = vrot.slane %v459, 1
  %v744 = vrot.slane %v460, 1
  %v745 = vrot.slane %v461, 1
  %v746 = vrot.slane %v462, 1
  %v747 = vrot.slane %v463, 1
  %v748 = vrot.slane %v464, 1
  %v749 = vrot.slane %v465, 1
  %v750 = vrot.slane %v468, 1
  %vm767 = vcmask 1040384
  %v768 = vsel %vm767, %v51, %v537
  %v769 = vsel %vm767, %v55, %v538
  %v770 = vsel %vm767, %v59, %v539
  %v771 = vsel %vm767, %v63, %v540
  %v772 = vsel %vm767, %v67, %v541
  %v773 = vsel %vm767, %v71, %v542
  %v774 = vsel %vm767, %v75, %v543
  %v775 = vsel %vm767, %v79, %v544
  %v776 = vsel %vm767, %v83, %v545
  %v777 = vsel %vm767, %v87, %v546
  %v778 = vsel %vm767, %v91, %v547
  %v779 = vsel %vm767, %v95, %v548
  %v780 = vsel %vm767, %v99, %v549
  %v781 = vsel %vm767, %v103, %v550
  %v782 = vsel %vm767, %v107, %v551
  %v783 = vsel %vm767, %v111, %v552
  %vm784 = vcmask 1041408
  %v785 = vsel %vm784, %v768, %v570
  %v786 = vsel %vm784, %v769, %v571
  %v787 = vsel %vm784, %v770, %v572
  %v788 = vsel %vm784, %v771, %v573
  %v789 = vsel %vm784, %v772, %v574
  %v790 = vsel %vm784, %v773, %v575
  %v791 = vsel %vm784, %v774, %v576
  %v792 = vsel %vm784, %v775, %v577
  %v793 = vsel %vm784, %v776, %v578
  %v794 = vsel %vm784, %v777, %v579
  %v795 = vsel %vm784, %v778, %v580
  %v796 = vsel %vm784, %v779, %v581
  %v797 = vsel %vm784, %v780, %v582
  %v798 = vsel %vm784, %v781, %v583
  %v799 = vsel %vm784, %v782, %v584
  %v800 = vsel %vm784, %v783, %v585
  %vm801 = vcmask 1042432
  %v802 = vsel %vm801, %v785, %v603
  %v803 = vsel %vm801, %v786, %v604
  %v804 = vsel %vm801, %v787, %v605
  %v805 = vsel %vm801, %v788, %v606
  %v806 = vsel %vm801, %v789, %v607
  %v807 = vsel %vm801, %v790, %v608
  %v808 = vsel %vm801, %v791, %v609
  %v809 = vsel %vm801, %v792, %v610
  %v810 = vsel %vm801, %v793, %v611
  %v811 = vsel %vm801, %v794, %v612
  %v812 = vsel %vm801, %v795, %v613
  %v813 = vsel %vm801, %v796, %v614
  %v814 = vsel %vm801, %v797, %v615
  %v815 = vsel %vm801, %v798, %v616
  %v816 = vsel %vm801, %v799, %v617
  %v817 = vsel %vm801, %v800, %v618
  %vm818 = vcmask 1043456
  %v819 = vsel %vm818, %v802, %v636
  %v820 = vsel %vm818, %v803, %v637
  %v821 = vsel %vm818, %v804, %v638
  %v822 = vsel %vm818, %v805, %v639
  %v823 = vsel %vm818, %v806, %v640
  %v824 = vsel %vm818, %v807, %v641
  %v825 = vsel %vm818, %v808, %v642
  %v826 = vsel %vm818, %v809, %v643
  %v827 = vsel %vm818, %v810, %v644
  %v828 = vsel %vm818, %v811, %v645
  %v829 = vsel %vm818, %v812, %v646
  %v830 = vsel %vm818, %v813, %v647
  %v831 = vsel %vm818, %v814, %v648
  %v832 = vsel %vm818, %v815, %v649
  %v833 = vsel %vm818, %v816, %v650
  %v834 = vsel %vm818, %v817, %v651
  %vm835 = vcmask 1044480
  %v836 = vsel %vm835, %v819, %v669
  %v837 = vsel %vm835, %v820, %v670
  %v838 = vsel %vm835, %v821, %v671
  %v839 = vsel %vm835, %v822, %v672
  %v840 = vsel %vm835, %v823, %v673
  %v841 = vsel %vm835, %v824, %v674
  %v842 = vsel %vm835, %v825, %v675
  %v843 = vsel %vm835, %v826, %v676
  %v844 = vsel %vm835, %v827, %v677
  %v845 = vsel %vm835, %v828, %v678
  %v846 = vsel %vm835, %v829, %v679
  %v847 = vsel %vm835, %v830, %v680
  %v848 = vsel %vm835, %v831, %v681
  %v849 = vsel %vm835, %v832, %v682
  %v850 = vsel %vm835, %v833, %v683
  %v851 = vsel %vm835, %v834, %v684
  %vm852 = vcmask 1045504
  %v853 = vsel %vm852, %v836, %v702
  %v854 = vsel %vm852, %v837, %v703
  %v855 = vsel %vm852, %v838, %v704
  %v856 = vsel %vm852, %v839, %v705
  %v857 = vsel %vm852, %v840, %v706
  %v858 = vsel %vm852, %v841, %v707
  %v859 = vsel %vm852, %v842, %v708
  %v860 = vsel %vm852, %v843, %v709
  %v861 = vsel %vm852, %v844, %v710
  %v862 = vsel %vm852, %v845, %v711
  %v863 = vsel %vm852, %v846, %v712
  %v864 = vsel %vm852, %v847, %v713
  %v865 = vsel %vm852, %v848, %v714
  %v866 = vsel %vm852, %v849, %v715
  %v867 = vsel %vm852, %v850, %v716
  %v868 = vsel %vm852, %v851, %v717
  %vm869 = vcmask 1046528
  %v870 = vsel %vm869, %v853, %v735
  %v871 = vsel %vm869, %v854, %v736
  %v872 = vsel %vm869, %v855, %v737
  %v873 = vsel %vm869, %v856, %v738
  %v874 = vsel %vm869, %v857, %v739
  %v875 = vsel %vm869, %v858, %v740
  %v876 = vsel %vm869, %v859, %v741
  %v877 = vsel %vm869, %v860, %v742
  %v878 = vsel %vm869, %v861, %v743
  %v879 = vsel %vm869, %v862, %v744
  %v880 = vsel %vm869, %v863, %v745
  %v881 = vsel %vm869, %v864, %v746
  %v882 = vsel %vm869, %v865, %v747
  %v883 = vsel %vm869, %v866, %v748
  %v884 = vsel %vm869, %v867, %v749
  %v885 = vsel %vm869, %v868, %v750
  %v886 = vld [vmem:[%s1] sm:$0x3f]
  %v887 = vld [vmem:[%s2] sm:$0x3f]
  %889 = vset.pattern.permute.xlu0 0
  %890 = vperm.xlu0 %889, %v887
  %v891 = vpop.permute.xlu0 %890
  %vm893 = vcmask 72704
  %v895 = vsel %vm893, %v886, 0
  %v897 = vsel %vm767, %v502, 0
  %v899 = vsel %vm767, %v503, 0
  %v901 = vsel %vm767, %v504, 0
  %v903 = vsel %vm767, %v505, 0
  %v905 = vsel %vm767, %v506, 0
  %v907 = vsel %vm767, %v507, 0
  %v909 = vsel %vm767, %v508, 0
  %v911 = vsel %vm767, %v509, 0
  %v913 = vsel %vm767, %v510, 0
  %v915 = vsel %vm767, %v511, 0
  %v917 = vsel %vm767, %v512, 0
  %v919 = vsel %vm767, %v513, 0
  %v921 = vsel %vm767, %v514, 0
  %v923 = vsel %vm767, %v515, 0
  %v925 = vsel %vm767, %v516, 0
  %v928 = vsel %vm767, %v519, 0
  %930 = vmatprep.subr.mxu0 0.0
  %931 = vmatpush1.msra.mxu0 0.0
  %932 = vmatprep.subr.mxu0 0.0
  %933 = vmatpush1.msra.mxu0 0.0
  %934 = vmatprep.subr.mxu0 0.0
  %935 = vmatpush1.msra.mxu0 0.0
  %936 = vmatprep.subr.mxu0 0.0
  %937 = vmatpush1.msra.mxu0 0.0
  %938 = vmatprep.subr.mxu0 0.0
  %939 = vmatpush1.msra.mxu0 0.0
  %940 = vmatprep.subr.mxu0 0.0
  %941 = vmatpush1.msra.mxu0 0.0
  %942 = vmatprep.subr.mxu0 0.0
  %943 = vmatpush1.msra.mxu0 0.0
  %944 = vmatprep.subr.mxu0 0.0
  %945 = vmatpush1.msra.mxu0 0.0
  %946 = vmatprep.subr.mxu0 0.0
  %947 = vmatpush1.msra.mxu0 0.0
  %948 = vmatprep.subr.mxu0 0.0
  %949 = vmatpush1.msra.mxu0 0.0
  %950 = vmatprep.subr.mxu0 0.0
  %951 = vmatpush1.msra.mxu0 0.0
  %952 = vmatprep.subr.mxu0 0.0
  %953 = vmatpush1.msra.mxu0 0.0
  %954 = vmatprep.subr.mxu0 0.0
  %955 = vmatpush1.msra.mxu0 0.0
  %956 = vmatprep.subr.mxu0 0.0
  %957 = vmatpush1.msra.mxu0 0.0
  %958 = vmatprep.subr.mxu0 %v899
  %959 = vmatpush1.msra.mxu0 %v897
  %960 = vmatprep.subr.mxu0 %v871
  %961 = vmatpush1.msra.mxu0 %v870
  %962 = vmatprep.subr.mxu0 0.0
  %963 = vmatpush2.msra.mxu0 0.0
  %964 = vmatprep.subr.mxu0 0.0
  %965 = vmatpush2.msra.mxu0 0.0
  %966 = vmatprep.subr.mxu0 0.0
  %967 = vmatpush2.msra.mxu0 0.0
  %968 = vmatprep.subr.mxu0 0.0
  %969 = vmatpush2.msra.mxu0 0.0
  %970 = vmatprep.subr.mxu0 0.0
  %971 = vmatpush2.msra.mxu0 0.0
  %972 = vmatprep.subr.mxu0 0.0
  %973 = vmatpush2.msra.mxu0 0.0
  %974 = vmatprep.subr.mxu0 0.0
  %975 = vmatpush2.msra.mxu0 0.0
  %976 = vmatprep.subr.mxu0 0.0
  %977 = vmatpush2.msra.mxu0 0.0
  %978 = vmatprep.subr.mxu0 0.0
  %979 = vmatpush2.msra.mxu0 0.0
  %980 = vmatprep.subr.mxu0 0.0
  %981 = vmatpush2.msra.mxu0 0.0
  %982 = vmatprep.subr.mxu0 0.0
  %983 = vmatpush2.msra.mxu0 0.0
  %984 = vmatprep.subr.mxu0 0.0
  %985 = vmatpush2.msra.mxu0 0.0
  %986 = vmatprep.subr.mxu0 0.0
  %987 = vmatpush2.msra.mxu0 0.0
  %988 = vmatprep.subr.mxu0 0.0
  %989 = vmatpush2.msra.mxu0 0.0
  %990 = vmatprep.subr.mxu0 0.0
  %991 = vmatpush2.msra.mxu0 0.0
  %992 = vmatprep.subr.mxu0 0.0
  %993 = vmatpush2.msra.mxu0 0.0
  %994 = vmatprep.mubr.f32.mxu0 0.0
  %995 = vmatmul.mubr.f32.gmra.mxu0 %v895
  %v996 = vpop.f32.mrf.mxu0
  %v997 = vadd.f32 %v891, %v996
  %v998 = vpop.f32.mrf.mxu0
  %v999 = vadd.f32 %v891, %v998
  %1000 = vdwg.mxu0
  %1001 = vmatprep.subr.mxu0 0.0
  %1002 = vmatpush1.msra.mxu0 0.0
  %1003 = vmatprep.subr.mxu0 0.0
  %1004 = vmatpush1.msra.mxu0 0.0
  %1005 = vmatprep.subr.mxu0 0.0
  %1006 = vmatpush1.msra.mxu0 0.0
  %1007 = vmatprep.subr.mxu0 0.0
  %1008 = vmatpush1.msra.mxu0 0.0
  %1009 = vmatprep.subr.mxu0 0.0
  %1010 = vmatpush1.msra.mxu0 0.0
  %1011 = vmatprep.subr.mxu0 0.0
  %1012 = vmatpush1.msra.mxu0 0.0
  %1013 = vmatprep.subr.mxu0 0.0
  %1014 = vmatpush1.msra.mxu0 0.0
  %1015 = vmatprep.subr.mxu0 0.0
  %1016 = vmatpush1.msra.mxu0 0.0
  %1017 = vmatprep.subr.mxu0 0.0
  %1018 = vmatpush1.msra.mxu0 0.0
  %1019 = vmatprep.subr.mxu0 0.0
  %1020 = vmatpush1.msra.mxu0 0.0
  %1021 = vmatprep.subr.mxu0 0.0
  %1022 = vmatpush1.msra.mxu0 0.0
  %1023 = vmatprep.subr.mxu0 0.0
  %1024 = vmatpush1.msra.mxu0 0.0
  %1025 = vmatprep.subr.mxu0 0.0
  %1026 = vmatpush1.msra.mxu0 0.0
  %1027 = vmatprep.subr.mxu0 0.0
  %1028 = vmatpush1.msra.mxu0 0.0
  %1029 = vmatprep.subr.mxu0 %v903
  %1030 = vmatpush1.msra.mxu0 %v901
  %1031 = vmatprep.subr.mxu0 %v873
  %1032 = vmatpush1.msra.mxu0 %v872
  %1033 = vmatprep.subr.mxu0 0.0
  %1034 = vmatpush2.msra.mxu0 0.0
  %1035 = vmatprep.subr.mxu0 0.0
  %1036 = vmatpush2.msra.mxu0 0.0
  %1037 = vmatprep.subr.mxu0 0.0
  %1038 = vmatpush2.msra.mxu0 0.0
  %1039 = vmatprep.subr.mxu0 0.0
  %1040 = vmatpush2.msra.mxu0 0.0
  %1041 = vmatprep.subr.mxu0 0.0
  %1042 = vmatpush2.msra.mxu0 0.0
  %1043 = vmatprep.subr.mxu0 0.0
  %1044 = vmatpush2.msra.mxu0 0.0
  %1045 = vmatprep.subr.mxu0 0.0
  %1046 = vmatpush2.msra.mxu0 0.0
  %1047 = vmatprep.subr.mxu0 0.0
  %1048 = vmatpush2.msra.mxu0 0.0
  %1049 = vmatprep.subr.mxu0 0.0
  %1050 = vmatpush2.msra.mxu0 0.0
  %1051 = vmatprep.subr.mxu0 0.0
  %1052 = vmatpush2.msra.mxu0 0.0
  %1053 = vmatprep.subr.mxu0 0.0
  %1054 = vmatpush2.msra.mxu0 0.0
  %1055 = vmatprep.subr.mxu0 0.0
  %1056 = vmatpush2.msra.mxu0 0.0
  %1057 = vmatprep.subr.mxu0 0.0
  %1058 = vmatpush2.msra.mxu0 0.0
  %1059 = vmatprep.subr.mxu0 0.0
  %1060 = vmatpush2.msra.mxu0 0.0
  %1061 = vmatprep.subr.mxu0 0.0
  %1062 = vmatpush2.msra.mxu0 0.0
  %1063 = vmatprep.subr.mxu0 0.0
  %1064 = vmatpush2.msra.mxu0 0.0
  %1065 = vmatprep.mubr.f32.mxu0 0.0
  %1066 = vmatmul.mubr.f32.gmra.mxu0 %v895
  %v1067 = vpop.f32.mrf.mxu0
  %v1068 = vadd.f32 %v891, %v1067
  %v1069 = vpop.f32.mrf.mxu0
  %v1070 = vadd.f32 %v891, %v1069
  %1071 = vdwg.mxu0
  %1072 = vmatprep.subr.mxu0 0.0
  %1073 = vmatpush1.msra.mxu0 0.0
  %1074 = vmatprep.subr.mxu0 0.0
  %1075 = vmatpush1.msra.mxu0 0.0
  %1076 = vmatprep.subr.mxu0 0.0
  %1077 = vmatpush1.msra.mxu0 0.0
  %1078 = vmatprep.subr.mxu0 0.0
  %1079 = vmatpush1.msra.mxu0 0.0
  %1080 = vmatprep.subr.mxu0 0.0
  %1081 = vmatpush1.msra.mxu0 0.0
  %1082 = vmatprep.subr.mxu0 0.0
  %1083 = vmatpush1.msra.mxu0 0.0
  %1084 = vmatprep.subr.mxu0 0.0
  %1085 = vmatpush1.msra.mxu0 0.0
  %1086 = vmatprep.subr.mxu0 0.0
  %1087 = vmatpush1.msra.mxu0 0.0
  %1088 = vmatprep.subr.mxu0 0.0
  %1089 = vmatpush1.msra.mxu0 0.0
  %1090 = vmatprep.subr.mxu0 0.0
  %1091 = vmatpush1.msra.mxu0 0.0
  %1092 = vmatprep.subr.mxu0 0.0
  %1093 = vmatpush1.msra.mxu0 0.0
  %1094 = vmatprep.subr.mxu0 0.0
  %1095 = vmatpush1.msra.mxu0 0.0
  %1096 = vmatprep.subr.mxu0 0.0
  %1097 = vmatpush1.msra.mxu0 0.0
  %1098 = vmatprep.subr.mxu0 0.0
  %1099 = vmatpush1.msra.mxu0 0.0
  %1100 = vmatprep.subr.mxu0 %v907
  %1101 = vmatpush1.msra.mxu0 %v905
  %1102 = vmatprep.subr.mxu0 %v875
  %1103 = vmatpush1.msra.mxu0 %v874
  %1104 = vmatprep.subr.mxu0 0.0
  %1105 = vmatpush2.msra.mxu0 0.0
  %1106 = vmatprep.subr.mxu0 0.0
  %1107 = vmatpush2.msra.mxu0 0.0
  %1108 = vmatprep.subr.mxu0 0.0
  %1109 = vmatpush2.msra.mxu0 0.0
  %1110 = vmatprep.subr.mxu0 0.0
  %1111 = vmatpush2.msra.mxu0 0.0
  %1112 = vmatprep.subr.mxu0 0.0
  %1113 = vmatpush2.msra.mxu0 0.0
  %1114 = vmatprep.subr.mxu0 0.0
  %1115 = vmatpush2.msra.mxu0 0.0
  %1116 = vmatprep.subr.mxu0 0.0
  %1117 = vmatpush2.msra.mxu0 0.0
  %1118 = vmatprep.subr.mxu0 0.0
  %1119 = vmatpush2.msra.mxu0 0.0
  %1120 = vmatprep.subr.mxu0 0.0
  %1121 = vmatpush2.msra.mxu0 0.0
  %1122 = vmatprep.subr.mxu0 0.0
  %1123 = vmatpush2.msra.mxu0 0.0
  %1124 = vmatprep.subr.mxu0 0.0
  %1125 = vmatpush2.msra.mxu0 0.0
  %1126 = vmatprep.subr.mxu0 0.0
  %1127 = vmatpush2.msra.mxu0 0.0
  %1128 = vmatprep.subr.mxu0 0.0
  %1129 = vmatpush2.msra.mxu0 0.0
  %1130 = vmatprep.subr.mxu0 0.0
  %1131 = vmatpush2.msra.mxu0 0.0
  %1132 = vmatprep.subr.mxu0 0.0
  %1133 = vmatpush2.msra.mxu0 0.0
  %1134 = vmatprep.subr.mxu0 0.0
  %1135 = vmatpush2.msra.mxu0 0.0
  %1136 = vmatprep.mubr.f32.mxu0 0.0
  %1137 = vmatmul.mubr.f32.gmra.mxu0 %v895
  %v1138 = vpop.f32.mrf.mxu0
  %v1139 = vadd.f32 %v891, %v1138
  %v1140 = vpop.f32.mrf.mxu0
  %v1141 = vadd.f32 %v891, %v1140
  %1142 = vdwg.mxu0
  %1143 = vmatprep.subr.mxu0 0.0
  %1144 = vmatpush1.msra.mxu0 0.0
  %1145 = vmatprep.subr.mxu0 0.0
  %1146 = vmatpush1.msra.mxu0 0.0
  %1147 = vmatprep.subr.mxu0 0.0
  %1148 = vmatpush1.msra.mxu0 0.0
  %1149 = vmatprep.subr.mxu0 0.0
  %1150 = vmatpush1.msra.mxu0 0.0
  %1151 = vmatprep.subr.mxu0 0.0
  %1152 = vmatpush1.msra.mxu0 0.0
  %1153 = vmatprep.subr.mxu0 0.0
  %1154 = vmatpush1.msra.mxu0 0.0
  %1155 = vmatprep.subr.mxu0 0.0
  %1156 = vmatpush1.msra.mxu0 0.0
  %1157 = vmatprep.subr.mxu0 0.0
  %1158 = vmatpush1.msra.mxu0 0.0
  %1159 = vmatprep.subr.mxu0 0.0
  %1160 = vmatpush1.msra.mxu0 0.0
  %1161 = vmatprep.subr.mxu0 0.0
  %1162 = vmatpush1.msra.mxu0 0.0
  %1163 = vmatprep.subr.mxu0 0.0
  %1164 = vmatpush1.msra.mxu0 0.0
  %1165 = vmatprep.subr.mxu0 0.0
  %1166 = vmatpush1.msra.mxu0 0.0
  %1167 = vmatprep.subr.mxu0 0.0
  %1168 = vmatpush1.msra.mxu0 0.0
  %1169 = vmatprep.subr.mxu0 0.0
  %1170 = vmatpush1.msra.mxu0 0.0
  %1171 = vmatprep.subr.mxu0 %v911
  %1172 = vmatpush1.msra.mxu0 %v909
  %1173 = vmatprep.subr.mxu0 %v877
  %1174 = vmatpush1.msra.mxu0 %v876
  %1175 = vmatprep.subr.mxu0 0.0
  %1176 = vmatpush2.msra.mxu0 0.0
  %1177 = vmatprep.subr.mxu0 0.0
  %1178 = vmatpush2.msra.mxu0 0.0
  %1179 = vmatprep.subr.mxu0 0.0
  %1180 = vmatpush2.msra.mxu0 0.0
  %1181 = vmatprep.subr.mxu0 0.0
  %1182 = vmatpush2.msra.mxu0 0.0
  %1183 = vmatprep.subr.mxu0 0.0
  %1184 = vmatpush2.msra.mxu0 0.0
  %1185 = vmatprep.subr.mxu0 0.0
  %1186 = vmatpush2.msra.mxu0 0.0
  %1187 = vmatprep.subr.mxu0 0.0
  %1188 = vmatpush2.msra.mxu0 0.0
  %1189 = vmatprep.subr.mxu0 0.0
  %1190 = vmatpush2.msra.mxu0 0.0
  %1191 = vmatprep.subr.mxu0 0.0
  %1192 = vmatpush2.msra.mxu0 0.0
  %1193 = vmatprep.subr.mxu0 0.0
  %1194 = vmatpush2.msra.mxu0 0.0
  %1195 = vmatprep.subr.mxu0 0.0
  %1196 = vmatpush2.msra.mxu0 0.0
  %1197 = vmatprep.subr.mxu0 0.0
  %1198 = vmatpush2.msra.mxu0 0.0
  %1199 = vmatprep.subr.mxu0 0.0
  %1200 = vmatpush2.msra.mxu0 0.0
  %1201 = vmatprep.subr.mxu0 0.0
  %1202 = vmatpush2.msra.mxu0 0.0
  %1203 = vmatprep.subr.mxu0 0.0
  %1204 = vmatpush2.msra.mxu0 0.0
  %1205 = vmatprep.subr.mxu0 0.0
  %1206 = vmatpush2.msra.mxu0 0.0
  %1207 = vmatprep.mubr.f32.mxu0 0.0
  %1208 = vmatmul.mubr.f32.gmra.mxu0 %v895
  %v1209 = vpop.f32.mrf.mxu0
  %v1210 = vadd.f32 %v891, %v1209
  %v1211 = vpop.f32.mrf.mxu0
  %v1212 = vadd.f32 %v891, %v1211
  %1213 = vdwg.mxu0
  %1214 = vmatprep.subr.mxu0 0.0
  %1215 = vmatpush1.msra.mxu0 0.0
  %1216 = vmatprep.subr.mxu0 0.0
  %1217 = vmatpush1.msra.mxu0 0.0
  %1218 = vmatprep.subr.mxu0 0.0
  %1219 = vmatpush1.msra.mxu0 0.0
  %1220 = vmatprep.subr.mxu0 0.0
  %1221 = vmatpush1.msra.mxu0 0.0
  %1222 = vmatprep.subr.mxu0 0.0
  %1223 = vmatpush1.msra.mxu0 0.0
  %1224 = vmatprep.subr.mxu0 0.0
  %1225 = vmatpush1.msra.mxu0 0.0
  %1226 = vmatprep.subr.mxu0 0.0
  %1227 = vmatpush1.msra.mxu0 0.0
  %1228 = vmatprep.subr.mxu0 0.0
  %1229 = vmatpush1.msra.mxu0 0.0
  %1230 = vmatprep.subr.mxu0 0.0
  %1231 = vmatpush1.msra.mxu0 0.0
  %1232 = vmatprep.subr.mxu0 0.0
  %1233 = vmatpush1.msra.mxu0 0.0
  %1234 = vmatprep.subr.mxu0 0.0
  %1235 = vmatpush1.msra.mxu0 0.0
  %1236 = vmatprep.subr.mxu0 0.0
  %1237 = vmatpush1.msra.mxu0 0.0
  %1238 = vmatprep.subr.mxu0 0.0
  %1239 = vmatpush1.msra.mxu0 0.0
  %1240 = vmatprep.subr.mxu0 0.0
  %1241 = vmatpush1.msra.mxu0 0.0
  %1242 = vmatprep.subr.mxu0 %v915
  %1243 = vmatpush1.msra.mxu0 %v913
  %1244 = vmatprep.subr.mxu0 %v879
  %1245 = vmatpush1.msra.mxu0 %v878
  %1246 = vmatprep.subr.mxu0 0.0
  %1247 = vmatpush2.msra.mxu0 0.0
  %1248 = vmatprep.subr.mxu0 0.0
  %1249 = vmatpush2.msra.mxu0 0.0
  %1250 = vmatprep.subr.mxu0 0.0
  %1251 = vmatpush2.msra.mxu0 0.0
  %1252 = vmatprep.subr.mxu0 0.0
  %1253 = vmatpush2.msra.mxu0 0.0
  %1254 = vmatprep.subr.mxu0 0.0
  %1255 = vmatpush2.msra.mxu0 0.0
  %1256 = vmatprep.subr.mxu0 0.0
  %1257 = vmatpush2.msra.mxu0 0.0
  %1258 = vmatprep.subr.mxu0 0.0
  %1259 = vmatpush2.msra.mxu0 0.0
  %1260 = vmatprep.subr.mxu0 0.0
  %1261 = vmatpush2.msra.mxu0 0.0
  %1262 = vmatprep.subr.mxu0 0.0
  %1263 = vmatpush2.msra.mxu0 0.0
  %1264 = vmatprep.subr.mxu0 0.0
  %1265 = vmatpush2.msra.mxu0 0.0
  %1266 = vmatprep.subr.mxu0 0.0
  %1267 = vmatpush2.msra.mxu0 0.0
  %1268 = vmatprep.subr.mxu0 0.0
  %1269 = vmatpush2.msra.mxu0 0.0
  %1270 = vmatprep.subr.mxu0 0.0
  %1271 = vmatpush2.msra.mxu0 0.0
  %1272 = vmatprep.subr.mxu0 0.0
  %1273 = vmatpush2.msra.mxu0 0.0
  %1274 = vmatprep.subr.mxu0 0.0
  %1275 = vmatpush2.msra.mxu0 0.0
  %1276 = vmatprep.subr.mxu0 0.0
  %1277 = vmatpush2.msra.mxu0 0.0
  %1278 = vmatprep.mubr.f32.mxu0 0.0
  %1279 = vmatmul.mubr.f32.gmra.mxu0 %v895
  %v1280 = vpop.f32.mrf.mxu0
  %v1281 = vadd.f32 %v891, %v1280
  %v1282 = vpop.f32.mrf.mxu0
  %v1283 = vadd.f32 %v891, %v1282
  %1284 = vdwg.mxu0
  %1285 = vmatprep.subr.mxu0 0.0
  %1286 = vmatpush1.msra.mxu0 0.0
  %1287 = vmatprep.subr.mxu0 0.0
  %1288 = vmatpush1.msra.mxu0 0.0
  %1289 = vmatprep.subr.mxu0 0.0
  %1290 = vmatpush1.msra.mxu0 0.0
  %1291 = vmatprep.subr.mxu0 0.0
  %1292 = vmatpush1.msra.mxu0 0.0
  %1293 = vmatprep.subr.mxu0 0.0
  %1294 = vmatpush1.msra.mxu0 0.0
  %1295 = vmatprep.subr.mxu0 0.0
  %1296 = vmatpush1.msra.mxu0 0.0
  %1297 = vmatprep.subr.mxu0 0.0
  %1298 = vmatpush1.msra.mxu0 0.0
  %1299 = vmatprep.subr.mxu0 0.0
  %1300 = vmatpush1.msra.mxu0 0.0
  %1301 = vmatprep.subr.mxu0 0.0
  %1302 = vmatpush1.msra.mxu0 0.0
  %1303 = vmatprep.subr.mxu0 0.0
  %1304 = vmatpush1.msra.mxu0 0.0
  %1305 = vmatprep.subr.mxu0 0.0
  %1306 = vmatpush1.msra.mxu0 0.0
  %1307 = vmatprep.subr.mxu0 0.0
  %1308 = vmatpush1.msra.mxu0 0.0
  %1309 = vmatprep.subr.mxu0 0.0
  %1310 = vmatpush1.msra.mxu0 0.0
  %1311 = vmatprep.subr.mxu0 0.0
  %1312 = vmatpush1.msra.mxu0 0.0
  %1313 = vmatprep.subr.mxu0 %v919
  %1314 = vmatpush1.msra.mxu0 %v917
  %1315 = vmatprep.subr.mxu0 %v881
  %1316 = vmatpush1.msra.mxu0 %v880
  %1317 = vmatprep.subr.mxu0 0.0
  %1318 = vmatpush2.msra.mxu0 0.0
  %1319 = vmatprep.subr.mxu0 0.0
  %1320 = vmatpush2.msra.mxu0 0.0
  %1321 = vmatprep.subr.mxu0 0.0
  %1322 = vmatpush2.msra.mxu0 0.0
  %1323 = vmatprep.subr.mxu0 0.0
  %1324 = vmatpush2.msra.mxu0 0.0
  %1325 = vmatprep.subr.mxu0 0.0
  %1326 = vmatpush2.msra.mxu0 0.0
  %1327 = vmatprep.subr.mxu0 0.0
  %1328 = vmatpush2.msra.mxu0 0.0
  %1329 = vmatprep.subr.mxu0 0.0
  %1330 = vmatpush2.msra.mxu0 0.0
  %1331 = vmatprep.subr.mxu0 0.0
  %1332 = vmatpush2.msra.mxu0 0.0
  %1333 = vmatprep.subr.mxu0 0.0
  %1334 = vmatpush2.msra.mxu0 0.0
  %1335 = vmatprep.subr.mxu0 0.0
  %1336 = vmatpush2.msra.mxu0 0.0
  %1337 = vmatprep.subr.mxu0 0.0
  %1338 = vmatpush2.msra.mxu0 0.0
  %1339 = vmatprep.subr.mxu0 0.0
  %1340 = vmatpush2.msra.mxu0 0.0
  %1341 = vmatprep.subr.mxu0 0.0
  %1342 = vmatpush2.msra.mxu0 0.0
  %1343 = vmatprep.subr.mxu0 0.0
  %1344 = vmatpush2.msra.mxu0 0.0
  %1345 = vmatprep.subr.mxu0 0.0
  %1346 = vmatpush2.msra.mxu0 0.0
  %1347 = vmatprep.subr.mxu0 0.0
  %1348 = vmatpush2.msra.mxu0 0.0
  %1349 = vmatprep.mubr.f32.mxu0 0.0
  %1350 = vmatmul.mubr.f32.gmra.mxu0 %v895
  %v1351 = vpop.f32.mrf.mxu0
  %v1352 = vadd.f32 %v891, %v1351
  %v1353 = vpop.f32.mrf.mxu0
  %v1354 = vadd.f32 %v891, %v1353
  %1355 = vdwg.mxu0
  %1356 = vmatprep.subr.mxu0 0.0
  %1357 = vmatpush1.msra.mxu0 0.0
  %1358 = vmatprep.subr.mxu0 0.0
  %1359 = vmatpush1.msra.mxu0 0.0
  %1360 = vmatprep.subr.mxu0 0.0
  %1361 = vmatpush1.msra.mxu0 0.0
  %1362 = vmatprep.subr.mxu0 0.0
  %1363 = vmatpush1.msra.mxu0 0.0
  %1364 = vmatprep.subr.mxu0 0.0
  %1365 = vmatpush1.msra.mxu0 0.0
  %1366 = vmatprep.subr.mxu0 0.0
  %1367 = vmatpush1.msra.mxu0 0.0
  %1368 = vmatprep.subr.mxu0 0.0
  %1369 = vmatpush1.msra.mxu0 0.0
  %1370 = vmatprep.subr.mxu0 0.0
  %1371 = vmatpush1.msra.mxu0 0.0
  %1372 = vmatprep.subr.mxu0 0.0
  %1373 = vmatpush1.msra.mxu0 0.0
  %1374 = vmatprep.subr.mxu0 0.0
  %1375 = vmatpush1.msra.mxu0 0.0
  %1376 = vmatprep.subr.mxu0 0.0
  %1377 = vmatpush1.msra.mxu0 0.0
  %1378 = vmatprep.subr.mxu0 0.0
  %1379 = vmatpush1.msra.mxu0 0.0
  %1380 = vmatprep.subr.mxu0 0.0
  %1381 = vmatpush1.msra.mxu0 0.0
  %1382 = vmatprep.subr.mxu0 0.0
  %1383 = vmatpush1.msra.mxu0 0.0
  %1384 = vmatprep.subr.mxu0 %v923
  %1385 = vmatpush1.msra.mxu0 %v921
  %1386 = vmatprep.subr.mxu0 %v883
  %1387 = vmatpush1.msra.mxu0 %v882
  %1388 = vmatprep.subr.mxu0 0.0
  %1389 = vmatpush2.msra.mxu0 0.0
  %1390 = vmatprep.subr.mxu0 0.0
  %1391 = vmatpush2.msra.mxu0 0.0
  %1392 = vmatprep.subr.mxu0 0.0
  %1393 = vmatpush2.msra.mxu0 0.0
  %1394 = vmatprep.subr.mxu0 0.0
  %1395 = vmatpush2.msra.mxu0 0.0
  %1396 = vmatprep.subr.mxu0 0.0
  %1397 = vmatpush2.msra.mxu0 0.0
  %1398 = vmatprep.subr.mxu0 0.0
  %1399 = vmatpush2.msra.mxu0 0.0
  %1400 = vmatprep.subr.mxu0 0.0
  %1401 = vmatpush2.msra.mxu0 0.0
  %1402 = vmatprep.subr.mxu0 0.0
  %1403 = vmatpush2.msra.mxu0 0.0
  %1404 = vmatprep.subr.mxu0 0.0
  %1405 = vmatpush2.msra.mxu0 0.0
  %1406 = vmatprep.subr.mxu0 0.0
  %1407 = vmatpush2.msra.mxu0 0.0
  %1408 = vmatprep.subr.mxu0 0.0
  %1409 = vmatpush2.msra.mxu0 0.0
  %1410 = vmatprep.subr.mxu0 0.0
  %1411 = vmatpush2.msra.mxu0 0.0
  %1412 = vmatprep.subr.mxu0 0.0
  %1413 = vmatpush2.msra.mxu0 0.0
  %1414 = vmatprep.subr.mxu0 0.0
  %1415 = vmatpush2.msra.mxu0 0.0
  %1416 = vmatprep.subr.mxu0 0.0
  %1417 = vmatpush2.msra.mxu0 0.0
  %1418 = vmatprep.subr.mxu0 0.0
  %1419 = vmatpush2.msra.mxu0 0.0
  %1420 = vmatprep.mubr.f32.mxu0 0.0
  %1421 = vmatmul.mubr.f32.gmra.mxu0 %v895
  %v1422 = vpop.f32.mrf.mxu0
  %v1423 = vadd.f32 %v891, %v1422
  %v1424 = vpop.f32.mrf.mxu0
  %v1425 = vadd.f32 %v891, %v1424
  %1426 = vdwg.mxu0
  %1427 = vmatprep.subr.mxu0 0.0
  %1428 = vmatpush1.msra.mxu0 0.0
  %1429 = vmatprep.subr.mxu0 0.0
  %1430 = vmatpush1.msra.mxu0 0.0
  %1431 = vmatprep.subr.mxu0 0.0
  %1432 = vmatpush1.msra.mxu0 0.0
  %1433 = vmatprep.subr.mxu0 0.0
  %1434 = vmatpush1.msra.mxu0 0.0
  %1435 = vmatprep.subr.mxu0 0.0
  %1436 = vmatpush1.msra.mxu0 0.0
  %1437 = vmatprep.subr.mxu0 0.0
  %1438 = vmatpush1.msra.mxu0 0.0
  %1439 = vmatprep.subr.mxu0 0.0
  %1440 = vmatpush1.msra.mxu0 0.0
  %1441 = vmatprep.subr.mxu0 0.0
  %1442 = vmatpush1.msra.mxu0 0.0
  %1443 = vmatprep.subr.mxu0 0.0
  %1444 = vmatpush1.msra.mxu0 0.0
  %1445 = vmatprep.subr.mxu0 0.0
  %1446 = vmatpush1.msra.mxu0 0.0
  %1447 = vmatprep.subr.mxu0 0.0
  %1448 = vmatpush1.msra.mxu0 0.0
  %1449 = vmatprep.subr.mxu0 0.0
  %1450 = vmatpush1.msra.mxu0 0.0
  %1451 = vmatprep.subr.mxu0 0.0
  %1452 = vmatpush1.msra.mxu0 0.0
  %1453 = vmatprep.subr.mxu0 0.0
  %1454 = vmatpush1.msra.mxu0 0.0
  %1455 = vmatprep.subr.mxu0 %v928
  %1456 = vmatpush1.msra.mxu0 %v925
  %1457 = vmatprep.subr.mxu0 %v885
  %1458 = vmatpush1.msra.mxu0 %v884
  %1459 = vmatprep.subr.mxu0 0.0
  %1460 = vmatpush2.msra.mxu0 0.0
  %1461 = vmatprep.subr.mxu0 0.0
  %1462 = vmatpush2.msra.mxu0 0.0
  %1463 = vmatprep.subr.mxu0 0.0
  %1464 = vmatpush2.msra.mxu0 0.0
  %1465 = vmatprep.subr.mxu0 0.0
  %1466 = vmatpush2.msra.mxu0 0.0
  %1467 = vmatprep.subr.mxu0 0.0
  %1468 = vmatpush2.msra.mxu0 0.0
  %1469 = vmatprep.subr.mxu0 0.0
  %1470 = vmatpush2.msra.mxu0 0.0
  %1471 = vmatprep.subr.mxu0 0.0
  %1472 = vmatpush2.msra.mxu0 0.0
  %1473 = vmatprep.subr.mxu0 0.0
  %1474 = vmatpush2.msra.mxu0 0.0
  %1475 = vmatprep.subr.mxu0 0.0
  %1476 = vmatpush2.msra.mxu0 0.0
  %1477 = vmatprep.subr.mxu0 0.0
  %1478 = vmatpush2.msra.mxu0 0.0
  %1479 = vmatprep.subr.mxu0 0.0
  %1480 = vmatpush2.msra.mxu0 0.0
  %1481 = vmatprep.subr.mxu0 0.0
  %1482 = vmatpush2.msra.mxu0 0.0
  %1483 = vmatprep.subr.mxu0 0.0
  %1484 = vmatpush2.msra.mxu0 0.0
  %1485 = vmatprep.subr.mxu0 0.0
  %1486 = vmatpush2.msra.mxu0 0.0
  %1487 = vmatprep.subr.mxu0 0.0
  %1488 = vmatpush2.msra.mxu0 0.0
  %1489 = vmatprep.subr.mxu0 0.0
  %1490 = vmatpush2.msra.mxu0 0.0
  %1491 = vmatprep.mubr.f32.mxu0 0.0
  %1492 = vmatmul.mubr.f32.gmra.mxu0 %v895
  %v1493 = vpop.f32.mrf.mxu0
  %v1494 = vadd.f32 %v891, %v1493
  %v1495 = vpop.f32.mrf.mxu0
  %v1496 = vadd.f32 %v891, %v1495
  %1497 = vdwg.mxu0
  %v1498 = vmax.f32 %v997, 0.0
  %v1499 = vmax.f32 %v999, 0.0
  %v1500 = vmax.f32 %v1068, 0.0
  %v1501 = vmax.f32 %v1070, 0.0
  %v1502 = vmax.f32 %v1139, 0.0
  %v1503 = vmax.f32 %v1141, 0.0
  %v1504 = vmax.f32 %v1210, 0.0
  %v1505 = vmax.f32 %v1212, 0.0
  %v1506 = vmax.f32 %v1281, 0.0
  %v1507 = vmax.f32 %v1283, 0.0
  %v1508 = vmax.f32 %v1352, 0.0
  %v1509 = vmax.f32 %v1354, 0.0
  %v1510 = vmax.f32 %v1423, 0.0
  %v1511 = vmax.f32 %v1425, 0.0
  %v1512 = vmax.f32 %v1494, 0.0
  %v1513 = vmax.f32 %v1496, 0.0
  %1530 = vrot.lane.b32.xlu0 %v1498, 127
  %v1531 = vpop.permute.xlu0 %1530
  %1532 = vrot.lane.b32.xlu0 %v1499, 127
  %v1533 = vpop.permute.xlu0 %1532
  %1534 = vrot.lane.b32.xlu0 %v1500, 127
  %v1535 = vpop.permute.xlu0 %1534
  %1536 = vrot.lane.b32.xlu0 %v1501, 127
  %v1537 = vpop.permute.xlu0 %1536
  %1538 = vrot.lane.b32.xlu0 %v1502, 127
  %v1539 = vpop.permute.xlu0 %1538
  %1540 = vrot.lane.b32.xlu0 %v1503, 127
  %v1541 = vpop.permute.xlu0 %1540
  %1542 = vrot.lane.b32.xlu0 %v1504, 127
  %v1543 = vpop.permute.xlu0 %1542
  %1544 = vrot.lane.b32.xlu0 %v1505, 127
  %v1545 = vpop.permute.xlu0 %1544
  %1546 = vrot.lane.b32.xlu0 %v1506, 127
  %v1547 = vpop.permute.xlu0 %1546
  %1548 = vrot.lane.b32.xlu0 %v1507, 127
  %v1549 = vpop.permute.xlu0 %1548
  %1550 = vrot.lane.b32.xlu0 %v1508, 127
  %v1551 = vpop.permute.xlu0 %1550
  %1552 = vrot.lane.b32.xlu0 %v1509, 127
  %v1553 = vpop.permute.xlu0 %1552
  %1554 = vrot.lane.b32.xlu0 %v1510, 127
  %v1555 = vpop.permute.xlu0 %1554
  %1556 = vrot.lane.b32.xlu0 %v1511, 127
  %v1557 = vpop.permute.xlu0 %1556
  %1558 = vrot.lane.b32.xlu0 %v1512, 127
  %v1559 = vpop.permute.xlu0 %1558
  %1560 = vrot.lane.b32.xlu0 %v1513, 127
  %v1561 = vpop.permute.xlu0 %1560
  %v1562 = vsel %vm144, %v1531, %v1533
  %v1563 = vsel %vm144, %v1533, %v1535
  %v1564 = vsel %vm144, %v1535, %v1537
  %v1565 = vsel %vm144, %v1537, %v1539
  %v1566 = vsel %vm144, %v1539, %v1541
  %v1567 = vsel %vm144, %v1541, %v1543
  %v1568 = vsel %vm144, %v1543, %v1545
  %v1569 = vsel %vm144, %v1545, %v1547
  %v1570 = vsel %vm144, %v1547, %v1549
  %v1571 = vsel %vm144, %v1549, %v1551
  %v1572 = vsel %vm144, %v1551, %v1553
  %v1573 = vsel %vm144, %v1553, %v1555
  %v1574 = vsel %vm144, %v1555, %v1557
  %v1575 = vsel %vm144, %v1557, %v1559
  %v1576 = vsel %vm144, %v1559, %v1561
  %v1594 = vsel %vm144, %v1561, %v1531
  %v1595 = vmax.f32 %v1498, %v1562
  %v1596 = vmax.f32 %v1499, %v1563
  %v1597 = vmax.f32 %v1500, %v1564
  %v1598 = vmax.f32 %v1501, %v1565
  %v1599 = vmax.f32 %v1502, %v1566
  %v1600 = vmax.f32 %v1503, %v1567
  %v1601 = vmax.f32 %v1504, %v1568
  %v1602 = vmax.f32 %v1505, %v1569
  %v1603 = vmax.f32 %v1506, %v1570
  %v1604 = vmax.f32 %v1507, %v1571
  %v1605 = vmax.f32 %v1508, %v1572
  %v1606 = vmax.f32 %v1509, %v1573
  %v1607 = vmax.f32 %v1510, %v1574
  %v1608 = vmax.f32 %v1511, %v1575
  %v1609 = vmax.f32 %v1512, %v1576
  %v1610 = vmax.f32 %v1513, %v1594
  %1611 = vrot.lane.b32.xlu0 %v1498, 96
  %v1612 = vpop.permute.xlu0 %1611
  %1613 = vrot.lane.b32.xlu0 %v1499, 96
  %v1614 = vpop.permute.xlu0 %1613
  %1615 = vrot.lane.b32.xlu0 %v1500, 96
  %v1616 = vpop.permute.xlu0 %1615
  %1617 = vrot.lane.b32.xlu0 %v1501, 96
  %v1618 = vpop.permute.xlu0 %1617
  %1619 = vrot.lane.b32.xlu0 %v1502, 96
  %v1620 = vpop.permute.xlu0 %1619
  %1621 = vrot.lane.b32.xlu0 %v1503, 96
  %v1622 = vpop.permute.xlu0 %1621
  %1623 = vrot.lane.b32.xlu0 %v1504, 96
  %v1624 = vpop.permute.xlu0 %1623
  %1625 = vrot.lane.b32.xlu0 %v1505, 96
  %v1626 = vpop.permute.xlu0 %1625
  %1627 = vrot.lane.b32.xlu0 %v1506, 96
  %v1628 = vpop.permute.xlu0 %1627
  %1629 = vrot.lane.b32.xlu0 %v1507, 96
  %v1630 = vpop.permute.xlu0 %1629
  %1631 = vrot.lane.b32.xlu0 %v1508, 96
  %v1632 = vpop.permute.xlu0 %1631
  %1633 = vrot.lane.b32.xlu0 %v1509, 96
  %v1634 = vpop.permute.xlu0 %1633
  %1635 = vrot.lane.b32.xlu0 %v1510, 96
  %v1636 = vpop.permute.xlu0 %1635
  %1637 = vrot.lane.b32.xlu0 %v1511, 96
  %v1638 = vpop.permute.xlu0 %1637
  %1639 = vrot.lane.b32.xlu0 %v1512, 96
  %v1640 = vpop.permute.xlu0 %1639
  %1641 = vrot.lane.b32.xlu0 %v1513, 96
  %v1642 = vpop.permute.xlu0 %1641
  %v1643 = vsel %vm246, %v1612, %v1614
  %v1644 = vsel %vm246, %v1614, %v1616
  %v1645 = vsel %vm246, %v1616, %v1618
  %v1646 = vsel %vm246, %v1618, %v1620
  %v1647 = vsel %vm246, %v1620, %v1622
  %v1648 = vsel %vm246, %v1622, %v1624
  %v1649 = vsel %vm246, %v1624, %v1626
  %v1650 = vsel %vm246, %v1626, %v1628
  %v1651 = vsel %vm246, %v1628, %v1630
  %v1652 = vsel %vm246, %v1630, %v1632
  %v1653 = vsel %vm246, %v1632, %v1634
  %v1654 = vsel %vm246, %v1634, %v1636
  %v1655 = vsel %vm246, %v1636, %v1638
  %v1656 = vsel %vm246, %v1638, %v1640
  %v1657 = vsel %vm246, %v1640, %v1642
  %v1675 = vsel %vm246, %v1642, %v1612
  %1676 = vrot.lane.b32.xlu0 %v1498, 95
  %v1677 = vpop.permute.xlu0 %1676
  %1678 = vrot.lane.b32.xlu0 %v1499, 95
  %v1679 = vpop.permute.xlu0 %1678
  %1680 = vrot.lane.b32.xlu0 %v1500, 95
  %v1681 = vpop.permute.xlu0 %1680
  %1682 = vrot.lane.b32.xlu0 %v1501, 95
  %v1683 = vpop.permute.xlu0 %1682
  %1684 = vrot.lane.b32.xlu0 %v1502, 95
  %v1685 = vpop.permute.xlu0 %1684
  %1686 = vrot.lane.b32.xlu0 %v1503, 95
  %v1687 = vpop.permute.xlu0 %1686
  %1688 = vrot.lane.b32.xlu0 %v1504, 95
  %v1689 = vpop.permute.xlu0 %1688
  %1690 = vrot.lane.b32.xlu0 %v1505, 95
  %v1691 = vpop.permute.xlu0 %1690
  %1692 = vrot.lane.b32.xlu0 %v1506, 95
  %v1693 = vpop.permute.xlu0 %1692
  %1694 = vrot.lane.b32.xlu0 %v1507, 95
  %v1695 = vpop.permute.xlu0 %1694
  %1696 = vrot.lane.b32.xlu0 %v1508, 95
  %v1697 = vpop.permute.xlu0 %1696
  %1698 = vrot.lane.b32.xlu0 %v1509, 95
  %v1699 = vpop.permute.xlu0 %1698
  %1700 = vrot.lane.b32.xlu0 %v1510, 95
  %v1701 = vpop.permute.xlu0 %1700
  %1702 = vrot.lane.b32.xlu0 %v1511, 95
  %v1703 = vpop.permute.xlu0 %1702
  %1704 = vrot.lane.b32.xlu0 %v1512, 95
  %v1705 = vpop.permute.xlu0 %1704
  %1706 = vrot.lane.b32.xlu0 %v1513, 95
  %v1707 = vpop.permute.xlu0 %1706
  %v1708 = vsel %vm297, %v1677, %v1679
  %v1709 = vsel %vm297, %v1679, %v1681
  %v1710 = vsel %vm297, %v1681, %v1683
  %v1711 = vsel %vm297, %v1683, %v1685
  %v1712 = vsel %vm297, %v1685, %v1687
  %v1713 = vsel %vm297, %v1687, %v1689
  %v1714 = vsel %vm297, %v1689, %v1691
  %v1715 = vsel %vm297, %v1691, %v1693
  %v1716 = vsel %vm297, %v1693, %v1695
  %v1717 = vsel %vm297, %v1695, %v1697
  %v1718 = vsel %vm297, %v1697, %v1699
  %v1719 = vsel %vm297, %v1699, %v1701
  %v1720 = vsel %vm297, %v1701, %v1703
  %v1721 = vsel %vm297, %v1703, %v1705
  %v1722 = vsel %vm297, %v1705, %v1707
  %v1740 = vsel %vm297, %v1707, %v1677
  %v1741 = vmax.f32 %v1643, %v1708
  %v1742 = vmax.f32 %v1644, %v1709
  %v1743 = vmax.f32 %v1645, %v1710
  %v1744 = vmax.f32 %v1646, %v1711
  %v1745 = vmax.f32 %v1647, %v1712
  %v1746 = vmax.f32 %v1648, %v1713
  %v1747 = vmax.f32 %v1649, %v1714
  %v1748 = vmax.f32 %v1650, %v1715
  %v1749 = vmax.f32 %v1651, %v1716
  %v1750 = vmax.f32 %v1652, %v1717
  %v1751 = vmax.f32 %v1653, %v1718
  %v1752 = vmax.f32 %v1654, %v1719
  %v1753 = vmax.f32 %v1655, %v1720
  %v1754 = vmax.f32 %v1656, %v1721
  %v1755 = vmax.f32 %v1657, %v1722
  %v1756 = vmax.f32 %v1675, %v1740
  %v1757 = vmax.f32 %v1595, %v1741
  %v1758 = vmax.f32 %v1596, %v1742
  %v1759 = vmax.f32 %v1597, %v1743
  %v1760 = vmax.f32 %v1598, %v1744
  %v1761 = vmax.f32 %v1599, %v1745
  %v1762 = vmax.f32 %v1600, %v1746
  %v1763 = vmax.f32 %v1601, %v1747
  %v1764 = vmax.f32 %v1602, %v1748
  %v1765 = vmax.f32 %v1603, %v1749
  %v1766 = vmax.f32 %v1604, %v1750
  %v1767 = vmax.f32 %v1605, %v1751
  %v1768 = vmax.f32 %v1606, %v1752
  %v1769 = vmax.f32 %v1607, %v1753
  %v1770 = vmax.f32 %v1608, %v1754
  %v1771 = vmax.f32 %v1609, %v1755
  %v1772 = vmax.f32 %v1610, %v1756
  %v1773 = vld [vmem:[%s3] sm:$0xff]
  %v1774 = vld [vmem:[%s3 + $0x8] sm:$0xff]
  %v1775 = vld [vmem:[%s3 + $0x10] sm:$0xff]
  %v1776 = vld [vmem:[%s3 + $0x18] sm:$0xff]
  %v1777 = vld [vmem:[%s3 + $0x20] sm:$0xff]
  %v1778 = vld [vmem:[%s3 + $0x28] sm:$0xff]
  %v1779 = vld [vmem:[%s3 + $0x30] sm:$0xff]
  %v1780 = vld [vmem:[%s3 + $0x38] sm:$0xff]
  %v1781 = vld [vmem:[%s3 + $0x40] sm:$0xff]
  %v1782 = vld [vmem:[%s3 + $0x48] sm:$0xff]
  %v1783 = vld [vmem:[%s3 + $0x50] sm:$0xff]
  %v1784 = vld [vmem:[%s3 + $0x58] sm:$0xff]
  %v1785 = vld [vmem:[%s3 + $0x60] sm:$0xff]
  %v1786 = vld [vmem:[%s3 + $0x68] sm:$0xff]
  %v1787 = vld [vmem:[%s3 + $0x70] sm:$0xff]
  %v1788 = vld [vmem:[%s3 + $0x78] sm:$0xff]
  %v1789 = vld [vmem:[%s3 + $0x80] sm:$0xff]
  %v1790 = vld [vmem:[%s3 + $0x88] sm:$0xff]
  %v1791 = vld [vmem:[%s3 + $0x90] sm:$0xff]
  %v1792 = vld [vmem:[%s3 + $0x98] sm:$0xff]
  %v1793 = vld [vmem:[%s3 + $0xa0] sm:$0xff]
  %v1794 = vld [vmem:[%s3 + $0xa8] sm:$0xff]
  %v1795 = vld [vmem:[%s3 + $0xb0] sm:$0xff]
  %v1796 = vld [vmem:[%s3 + $0xb8] sm:$0xff]
  %v1797 = vld [vmem:[%s3 + $0xc0] sm:$0xff]
  %v1798 = vld [vmem:[%s3 + $0xc8] sm:$0xff]
  %v1799 = vld [vmem:[%s3 + $0xd0] sm:$0xff]
  %v1800 = vld [vmem:[%s3 + $0xd8] sm:$0xff]
  %v1801 = vld [vmem:[%s3 + $0xe0] sm:$0xff]
  %v1802 = vld [vmem:[%s3 + $0xe8] sm:$0xff]
  %v1803 = vld [vmem:[%s3 + $0xf0] sm:$0xff]
  %v1804 = vld [vmem:[%s3 + $0xf8] sm:$0xff]
  %v1805 = vld [vmem:[%s3 + $0x100] sm:$0xff]
  %v1806 = vld [vmem:[%s3 + $0x108] sm:$0xff]
  %v1807 = vld [vmem:[%s3 + $0x110] sm:$0xff]
  %v1808 = vld [vmem:[%s3 + $0x118] sm:$0xff]
  %v1809 = vld [vmem:[%s3 + $0x120] sm:$0xff]
  %v1810 = vld [vmem:[%s3 + $0x128] sm:$0xff]
  %v1811 = vld [vmem:[%s3 + $0x130] sm:$0xff]
  %v1812 = vld [vmem:[%s3 + $0x138] sm:$0xff]
  %v1813 = vld [vmem:[%s3 + $0x140] sm:$0xff]
  %v1814 = vld [vmem:[%s3 + $0x148] sm:$0xff]
  %v1815 = vld [vmem:[%s3 + $0x150] sm:$0xff]
  %v1816 = vld [vmem:[%s3 + $0x158] sm:$0xff]
  %v1817 = vld [vmem:[%s3 + $0x160] sm:$0xff]
  %v1818 = vld [vmem:[%s3 + $0x168] sm:$0xff]
  %v1819 = vld [vmem:[%s3 + $0x170] sm:$0xff]
  %v1820 = vld [vmem:[%s3 + $0x178] sm:$0xff]
  %v1821 = vld [vmem:[%s3 + $0x180] sm:$0xff]
  %v1822 = vld [vmem:[%s3 + $0x188] sm:$0xff]
  %v1823 = vld [vmem:[%s3 + $0x190] sm:$0xff]
  %v1824 = vld [vmem:[%s3 + $0x198] sm:$0xff]
  %v1825 = vld [vmem:[%s3 + $0x1a0] sm:$0xff]
  %v1826 = vld [vmem:[%s3 + $0x1a8] sm:$0xff]
  %v1827 = vld [vmem:[%s3 + $0x1b0] sm:$0xff]
  %v1828 = vld [vmem:[%s3 + $0x1b8] sm:$0xff]
  %v1829 = vld [vmem:[%s3 + $0x1c0] sm:$0xff]
  %v1830 = vld [vmem:[%s3 + $0x1c8] sm:$0xff]
  %v1831 = vld [vmem:[%s3 + $0x1d0] sm:$0xff]
  %v1832 = vld [vmem:[%s3 + $0x1d8] sm:$0xff]
  %v1833 = vld [vmem:[%s3 + $0x1e0] sm:$0xff]
  %v1834 = vld [vmem:[%s3 + $0x1e8] sm:$0xff]
  %v1835 = vld [vmem:[%s3 + $0x1f0] sm:$0xff]
  %v1836 = vld [vmem:[%s3 + $0x1f8] sm:$0xff]
  %v1837 = vld [vmem:[%s3 + $0x200] sm:$0xff]
  %v1838 = vld [vmem:[%s3 + $0x208] sm:$0xff]
  %v1839 = vld [vmem:[%s3 + $0x210] sm:$0xff]
  %v1840 = vld [vmem:[%s3 + $0x218] sm:$0xff]
  %v1841 = vld [vmem:[%s3 + $0x220] sm:$0xff]
  %v1842 = vld [vmem:[%s3 + $0x228] sm:$0xff]
  %v1843 = vld [vmem:[%s3 + $0x230] sm:$0xff]
  %v1844 = vld [vmem:[%s3 + $0x238] sm:$0xff]
  %v1845 = vld [vmem:[%s3 + $0x240] sm:$0xff]
  %v1846 = vld [vmem:[%s3 + $0x248] sm:$0xff]
  %v1847 = vld [vmem:[%s3 + $0x250] sm:$0xff]
  %v1848 = vld [vmem:[%s3 + $0x258] sm:$0xff]
  %v1849 = vld [vmem:[%s3 + $0x260] sm:$0xff]
  %v1850 = vld [vmem:[%s3 + $0x268] sm:$0xff]
  %v1851 = vld [vmem:[%s3 + $0x270] sm:$0xff]
  %v1852 = vld [vmem:[%s3 + $0x278] sm:$0xff]
  %v1853 = vld [vmem:[%s3 + $0x280] sm:$0xff]
  %v1854 = vld [vmem:[%s3 + $0x288] sm:$0xff]
  %v1855 = vld [vmem:[%s3 + $0x290] sm:$0xff]
  %v1856 = vld [vmem:[%s3 + $0x298] sm:$0xff]
  %v1857 = vld [vmem:[%s3 + $0x2a0] sm:$0xff]
  %v1858 = vld [vmem:[%s3 + $0x2a8] sm:$0xff]
  %v1859 = vld [vmem:[%s3 + $0x2b0] sm:$0xff]
  %v1860 = vld [vmem:[%s3 + $0x2b8] sm:$0xff]
  %v1861 = vld [vmem:[%s3 + $0x2c0] sm:$0xff]
  %v1862 = vld [vmem:[%s3 + $0x2c8] sm:$0xff]
  %v1863 = vld [vmem:[%s3 + $0x2d0] sm:$0xff]
  %v1864 = vld [vmem:[%s3 + $0x2d8] sm:$0xff]
  %v1865 = vld [vmem:[%s3 + $0x2e0] sm:$0xff]
  %v1866 = vld [vmem:[%s3 + $0x2e8] sm:$0xff]
  %v1867 = vld [vmem:[%s3 + $0x2f0] sm:$0xff]
  %v1868 = vld [vmem:[%s3 + $0x2f8] sm:$0xff]
  %v1869 = vld [vmem:[%s3 + $0x300] sm:$0xff]
  %v1870 = vld [vmem:[%s3 + $0x308] sm:$0xff]
  %v1871 = vld [vmem:[%s3 + $0x310] sm:$0xff]
  %v1872 = vld [vmem:[%s3 + $0x318] sm:$0xff]
  %v1873 = vld [vmem:[%s3 + $0x320] sm:$0xff]
  %v1874 = vld [vmem:[%s3 + $0x328] sm:$0xff]
  %v1875 = vld [vmem:[%s3 + $0x330] sm:$0xff]
  %v1876 = vld [vmem:[%s3 + $0x338] sm:$0xff]
  %v1877 = vld [vmem:[%s3 + $0x340] sm:$0xff]
  %v1878 = vld [vmem:[%s3 + $0x348] sm:$0xff]
  %v1879 = vld [vmem:[%s3 + $0x350] sm:$0xff]
  %v1880 = vld [vmem:[%s3 + $0x358] sm:$0xff]
  %v1881 = vld [vmem:[%s3 + $0x360] sm:$0xff]
  %v1882 = vld [vmem:[%s3 + $0x368] sm:$0xff]
  %v1883 = vld [vmem:[%s3 + $0x370] sm:$0xff]
  %v1884 = vld [vmem:[%s3 + $0x378] sm:$0xff]
  %v1885 = vld [vmem:[%s3 + $0x380] sm:$0xff]
  %v1886 = vld [vmem:[%s3 + $0x388] sm:$0xff]
  %v1887 = vld [vmem:[%s3 + $0x390] sm:$0xff]
  %v1888 = vld [vmem:[%s3 + $0x398] sm:$0xff]
  %v1889 = vld [vmem:[%s3 + $0x3a0] sm:$0xff]
  %v1890 = vld [vmem:[%s3 + $0x3a8] sm:$0xff]
  %v1891 = vld [vmem:[%s3 + $0x3b0] sm:$0xff]
  %v1892 = vld [vmem:[%s3 + $0x3b8] sm:$0xff]
  %v1893 = vld [vmem:[%s3 + $0x3c0] sm:$0xff]
  %v1894 = vld [vmem:[%s3 + $0x3c8] sm:$0xff]
  %v1895 = vld [vmem:[%s3 + $0x3d0] sm:$0xff]
  %v1896 = vld [vmem:[%s3 + $0x3d8] sm:$0xff]
  %v1897 = vld [vmem:[%s3 + $0x3e0] sm:$0xff]
  %v1898 = vld [vmem:[%s3 + $0x3e8] sm:$0xff]
  %v1899 = vld [vmem:[%s3 + $0x3f0] sm:$0xff]
  %v1900 = vld [vmem:[%s3 + $0x3f8] sm:$0xff]
  %v1901 = vld [vmem:[%s3 + $0x400] sm:$0xff]
  %v1902 = vld [vmem:[%s3 + $0x408] sm:$0xff]
  %v1903 = vld [vmem:[%s3 + $0x410] sm:$0xff]
  %v1904 = vld [vmem:[%s3 + $0x418] sm:$0xff]
  %v1905 = vld [vmem:[%s3 + $0x420] sm:$0xff]
  %v1906 = vld [vmem:[%s3 + $0x428] sm:$0xff]
  %v1907 = vld [vmem:[%s3 + $0x430] sm:$0xff]
  %v1908 = vld [vmem:[%s3 + $0x438] sm:$0xff]
  %v1909 = vld [vmem:[%s3 + $0x440] sm:$0xff]
  %v1910 = vld [vmem:[%s3 + $0x448] sm:$0xff]
  %v1911 = vld [vmem:[%s3 + $0x450] sm:$0xff]
  %v1912 = vld [vmem:[%s3 + $0x458] sm:$0xff]
  %v1913 = vld [vmem:[%s3 + $0x460] sm:$0xff]
  %v1914 = vld [vmem:[%s3 + $0x468] sm:$0xff]
  %v1915 = vld [vmem:[%s3 + $0x470] sm:$0xff]
  %v1916 = vld [vmem:[%s3 + $0x478] sm:$0xff]
  %v1917 = vld [vmem:[%s3 + $0x480] sm:$0xff]
  %v1918 = vld [vmem:[%s3 + $0x488] sm:$0xff]
  %v1919 = vld [vmem:[%s3 + $0x490] sm:$0xff]
  %v1920 = vld [vmem:[%s3 + $0x498] sm:$0xff]
  %v1921 = vld [vmem:[%s3 + $0x4a0] sm:$0xff]
  %v1922 = vld [vmem:[%s3 + $0x4a8] sm:$0xff]
  %v1923 = vld [vmem:[%s3 + $0x4b0] sm:$0xff]
  %v1924 = vld [vmem:[%s3 + $0x4b8] sm:$0xff]
  %v1925 = vld [vmem:[%s3 + $0x4c0] sm:$0xff]
  %v1926 = vld [vmem:[%s3 + $0x4c8] sm:$0xff]
  %v1927 = vld [vmem:[%s3 + $0x4d0] sm:$0xff]
  %v1928 = vld [vmem:[%s3 + $0x4d8] sm:$0xff]
  %v1929 = vld [vmem:[%s3 + $0x4e0] sm:$0xff]
  %v1930 = vld [vmem:[%s3 + $0x4e8] sm:$0xff]
  %v1931 = vld [vmem:[%s3 + $0x4f0] sm:$0xff]
  %v1932 = vld [vmem:[%s3 + $0x4f8] sm:$0xff]
  %v1933 = vld [vmem:[%s3 + $0x500] sm:$0xff]
  %v1934 = vld [vmem:[%s3 + $0x508] sm:$0xff]
  %v1935 = vld [vmem:[%s3 + $0x510] sm:$0xff]
  %v1936 = vld [vmem:[%s3 + $0x518] sm:$0xff]
  %v1937 = vld [vmem:[%s3 + $0x520] sm:$0xff]
  %v1938 = vld [vmem:[%s3 + $0x528] sm:$0xff]
  %v1939 = vld [vmem:[%s3 + $0x530] sm:$0xff]
  %v1940 = vld [vmem:[%s3 + $0x538] sm:$0xff]
  %v1941 = vld [vmem:[%s3 + $0x540] sm:$0xff]
  %v1942 = vld [vmem:[%s3 + $0x548] sm:$0xff]
  %v1943 = vld [vmem:[%s3 + $0x550] sm:$0xff]
  %v1944 = vld [vmem:[%s3 + $0x558] sm:$0xff]
  %v1945 = vld [vmem:[%s3 + $0x560] sm:$0xff]
  %v1946 = vld [vmem:[%s3 + $0x568] sm:$0xff]
  %v1947 = vld [vmem:[%s3 + $0x570] sm:$0xff]
  %v1948 = vld [vmem:[%s3 + $0x578] sm:$0xff]
  %v1949 = vld [vmem:[%s3 + $0x580] sm:$0xff]
  %v1950 = vld [vmem:[%s3 + $0x588] sm:$0xff]
  %v1951 = vld [vmem:[%s3 + $0x590] sm:$0xff]
  %v1952 = vld [vmem:[%s3 + $0x598] sm:$0xff]
  %v1953 = vld [vmem:[%s3 + $0x5a0] sm:$0xff]
  %v1954 = vld [vmem:[%s3 + $0x5a8] sm:$0xff]
  %v1955 = vld [vmem:[%s3 + $0x5b0] sm:$0xff]
  %v1956 = vld [vmem:[%s3 + $0x5b8] sm:$0xff]
  %v1957 = vld [vmem:[%s3 + $0x5c0] sm:$0xff]
  %v1958 = vld [vmem:[%s3 + $0x5c8] sm:$0xff]
  %v1959 = vld [vmem:[%s3 + $0x5d0] sm:$0xff]
  %v1960 = vld [vmem:[%s3 + $0x5d8] sm:$0xff]
  %v1961 = vld [vmem:[%s3 + $0x5e0] sm:$0xff]
  %v1962 = vld [vmem:[%s3 + $0x5e8] sm:$0xff]
  %v1963 = vld [vmem:[%s3 + $0x5f0] sm:$0xff]
  %v1964 = vld [vmem:[%s3 + $0x5f8] sm:$0xff]
  %v1965 = vld [vmem:[%s3 + $0x600] sm:$0xff]
  %v1966 = vld [vmem:[%s3 + $0x608] sm:$0xff]
  %v1967 = vld [vmem:[%s3 + $0x610] sm:$0xff]
  %v1968 = vld [vmem:[%s3 + $0x618] sm:$0xff]
  %v1969 = vld [vmem:[%s3 + $0x620] sm:$0xff]
  %v1970 = vld [vmem:[%s3 + $0x628] sm:$0xff]
  %v1971 = vld [vmem:[%s3 + $0x630] sm:$0xff]
  %v1972 = vld [vmem:[%s3 + $0x638] sm:$0xff]
  %v1973 = vld [vmem:[%s3 + $0x640] sm:$0xff]
  %v1974 = vld [vmem:[%s3 + $0x648] sm:$0xff]
  %v1975 = vld [vmem:[%s3 + $0x650] sm:$0xff]
  %v1976 = vld [vmem:[%s3 + $0x658] sm:$0xff]
  %v1977 = vld [vmem:[%s3 + $0x660] sm:$0xff]
  %v1978 = vld [vmem:[%s3 + $0x668] sm:$0xff]
  %v1979 = vld [vmem:[%s3 + $0x670] sm:$0xff]
  %v1980 = vld [vmem:[%s3 + $0x678] sm:$0xff]
  %v1981 = vld [vmem:[%s3 + $0x680] sm:$0xff]
  %v1982 = vld [vmem:[%s3 + $0x688] sm:$0xff]
  %v1983 = vld [vmem:[%s3 + $0x690] sm:$0xff]
  %v1984 = vld [vmem:[%s3 + $0x698] sm:$0xff]
  %v1985 = vld [vmem:[%s3 + $0x6a0] sm:$0xff]
  %v1986 = vld [vmem:[%s3 + $0x6a8] sm:$0xff]
  %v1987 = vld [vmem:[%s3 + $0x6b0] sm:$0xff]
  %v1988 = vld [vmem:[%s3 + $0x6b8] sm:$0xff]
  %v1989 = vld [vmem:[%s3 + $0x6c0] sm:$0xff]
  %v1990 = vld [vmem:[%s3 + $0x6c8] sm:$0xff]
  %v1991 = vld [vmem:[%s3 + $0x6d0] sm:$0xff]
  %v1992 = vld [vmem:[%s3 + $0x6d8] sm:$0xff]
  %v1993 = vld [vmem:[%s3 + $0x6e0] sm:$0xff]
  %v1994 = vld [vmem:[%s3 + $0x6e8] sm:$0xff]
  %v1995 = vld [vmem:[%s3 + $0x6f0] sm:$0xff]
  %v1996 = vld [vmem:[%s3 + $0x6f8] sm:$0xff]
  %v1997 = vld [vmem:[%s3 + $0x700] sm:$0xff]
  %v1998 = vld [vmem:[%s3 + $0x708] sm:$0xff]
  %v1999 = vld [vmem:[%s3 + $0x710] sm:$0xff]
  %v2000 = vld [vmem:[%s3 + $0x718] sm:$0xff]
  %v2001 = vld [vmem:[%s3 + $0x720] sm:$0xff]
  %v2002 = vld [vmem:[%s3 + $0x728] sm:$0xff]
  %v2003 = vld [vmem:[%s3 + $0x730] sm:$0xff]
  %v2004 = vld [vmem:[%s3 + $0x738] sm:$0xff]
  %v2005 = vld [vmem:[%s3 + $0x740] sm:$0xff]
  %v2006 = vld [vmem:[%s3 + $0x748] sm:$0xff]
  %v2007 = vld [vmem:[%s3 + $0x750] sm:$0xff]
  %v2008 = vld [vmem:[%s3 + $0x758] sm:$0xff]
  %v2009 = vld [vmem:[%s3 + $0x760] sm:$0xff]
  %v2010 = vld [vmem:[%s3 + $0x768] sm:$0xff]
  %v2011 = vld [vmem:[%s3 + $0x770] sm:$0xff]
  %v2012 = vld [vmem:[%s3 + $0x778] sm:$0xff]
  %v2013 = vld [vmem:[%s3 + $0x780] sm:$0xff]
  %v2014 = vld [vmem:[%s3 + $0x788] sm:$0xff]
  %v2015 = vld [vmem:[%s3 + $0x790] sm:$0xff]
  %v2016 = vld [vmem:[%s3 + $0x798] sm:$0xff]
  %v2017 = vld [vmem:[%s3 + $0x7a0] sm:$0xff]
  %v2018 = vld [vmem:[%s3 + $0x7a8] sm:$0xff]
  %v2019 = vld [vmem:[%s3 + $0x7b0] sm:$0xff]
  %v2020 = vld [vmem:[%s3 + $0x7b8] sm:$0xff]
  %v2021 = vld [vmem:[%s3 + $0x7c0] sm:$0xff]
  %v2022 = vld [vmem:[%s3 + $0x7c8] sm:$0xff]
  %v2023 = vld [vmem:[%s3 + $0x7d0] sm:$0xff]
  %v2024 = vld [vmem:[%s3 + $0x7d8] sm:$0xff]
  %v2025 = vld [vmem:[%s3 + $0x7e0] sm:$0xff]
  %v2026 = vld [vmem:[%s3 + $0x7e8] sm:$0xff]
  %v2027 = vld [vmem:[%s3 + $0x7f0] sm:$0xff]
  %v2028 = vld [vmem:[%s3 + $0x7f8] sm:$0xff]
  %2029 = vmatprep.subr.mxu0 %v1804
  %2030 = vmatpush1.msra.mxu0 %v1803
  %2031 = vmatprep.subr.mxu0 %v1802
  %2032 = vmatpush1.msra.mxu0 %v1801
  %2033 = vmatprep.subr.mxu0 %v1800
  %2034 = vmatpush1.msra.mxu0 %v1799
  %2035 = vmatprep.subr.mxu0 %v1798
  %2036 = vmatpush1.msra.mxu0 %v1797
  %2037 = vmatprep.subr.mxu0 %v1796
  %2038 = vmatpush1.msra.mxu0 %v1795
  %2039 = vmatprep.subr.mxu0 %v1794
  %2040 = vmatpush1.msra.mxu0 %v1793
  %2041 = vmatprep.subr.mxu0 %v1792
  %2042 = vmatpush1.msra.mxu0 %v1791
  %2043 = vmatprep.subr.mxu0 %v1790
  %2044 = vmatpush1.msra.mxu0 %v1789
  %2045 = vmatprep.subr.mxu0 %v1788
  %2046 = vmatpush1.msra.mxu0 %v1787
  %2047 = vmatprep.subr.mxu0 %v1786
  %2048 = vmatpush1.msra.mxu0 %v1785
  %2049 = vmatprep.subr.mxu0 %v1784
  %2050 = vmatpush1.msra.mxu0 %v1783
  %2051 = vmatprep.subr.mxu0 %v1782
  %2052 = vmatpush1.msra.mxu0 %v1781
  %2053 = vmatprep.subr.mxu0 %v1780
  %2054 = vmatpush1.msra.mxu0 %v1779
  %2055 = vmatprep.subr.mxu0 %v1778
  %2056 = vmatpush1.msra.mxu0 %v1777
  %2057 = vmatprep.subr.mxu0 %v1776
  %2058 = vmatpush1.msra.mxu0 %v1775
  %2059 = vmatprep.subr.mxu0 %v1774
  %2060 = vmatpush1.msra.mxu0 %v1773
  %2061 = vmatprep.subr.mxu0 %v1836
  %2062 = vmatpush2.msra.mxu0 %v1835
  %2063 = vmatprep.subr.mxu0 %v1834
  %2064 = vmatpush2.msra.mxu0 %v1833
  %2065 = vmatprep.subr.mxu0 %v1832
  %2066 = vmatpush2.msra.mxu0 %v1831
  %2067 = vmatprep.subr.mxu0 %v1830
  %2068 = vmatpush2.msra.mxu0 %v1829
  %2069 = vmatprep.subr.mxu0 %v1828
  %2070 = vmatpush2.msra.mxu0 %v1827
  %2071 = vmatprep.subr.mxu0 %v1826
  %2072 = vmatpush2.msra.mxu0 %v1825
  %2073 = vmatprep.subr.mxu0 %v1824
  %2074 = vmatpush2.msra.mxu0 %v1823
  %2075 = vmatprep.subr.mxu0 %v1822
  %2076 = vmatpush2.msra.mxu0 %v1821
  %2077 = vmatprep.subr.mxu0 %v1820
  %2078 = vmatpush2.msra.mxu0 %v1819
  %2079 = vmatprep.subr.mxu0 %v1818
  %2080 = vmatpush2.msra.mxu0 %v1817
  %2081 = vmatprep.subr.mxu0 %v1816
  %2082 = vmatpush2.msra.mxu0 %v1815
  %2083 = vmatprep.subr.mxu0 %v1814
  %2084 = vmatpush2.msra.mxu0 %v1813
  %2085 = vmatprep.subr.mxu0 %v1812
  %2086 = vmatpush2.msra.mxu0 %v1811
  %2087 = vmatprep.subr.mxu0 %v1810
  %2088 = vmatpush2.msra.mxu0 %v1809
  %2089 = vmatprep.subr.mxu0 %v1808
  %2090 = vmatpush2.msra.mxu0 %v1807
  %2091 = vmatprep.subr.mxu0 %v1806
  %2092 = vmatpush2.msra.mxu0 %v1805
  %2093 = vmatprep.mubr.f32.mxu0 %v1758
  %2094 = vmatmul.mubr.f32.gmra.mxu0 %v1757
  %v2095 = vpop.f32.mrf.mxu0
  %v2096 = vadd.f32 0.0, %v2095
  %v2097 = vpop.f32.mrf.mxu0
  %v2098 = vadd.f32 0.0, %v2097
  %2099 = vdwg.mxu0
  %2100 = vmatprep.subr.mxu0 %v1868
  %2101 = vmatpush1.msra.mxu0 %v1867
  %2102 = vmatprep.subr.mxu0 %v1866
  %2103 = vmatpush1.msra.mxu0 %v1865
  %2104 = vmatprep.subr.mxu0 %v1864
  %2105 = vmatpush1.msra.mxu0 %v1863
  %2106 = vmatprep.subr.mxu0 %v1862
  %2107 = vmatpush1.msra.mxu0 %v1861
  %2108 = vmatprep.subr.mxu0 %v1860
  %2109 = vmatpush1.msra.mxu0 %v1859
  %2110 = vmatprep.subr.mxu0 %v1858
  %2111 = vmatpush1.msra.mxu0 %v1857
  %2112 = vmatprep.subr.mxu0 %v1856
  %2113 = vmatpush1.msra.mxu0 %v1855
  %2114 = vmatprep.subr.mxu0 %v1854
  %2115 = vmatpush1.msra.mxu0 %v1853
  %2116 = vmatprep.subr.mxu0 %v1852
  %2117 = vmatpush1.msra.mxu0 %v1851
  %2118 = vmatprep.subr.mxu0 %v1850
  %2119 = vmatpush1.msra.mxu0 %v1849
  %2120 = vmatprep.subr.mxu0 %v1848
  %2121 = vmatpush1.msra.mxu0 %v1847
  %2122 = vmatprep.subr.mxu0 %v1846
  %2123 = vmatpush1.msra.mxu0 %v1845
  %2124 = vmatprep.subr.mxu0 %v1844
  %2125 = vmatpush1.msra.mxu0 %v1843
  %2126 = vmatprep.subr.mxu0 %v1842
  %2127 = vmatpush1.msra.mxu0 %v1841
  %2128 = vmatprep.subr.mxu0 %v1840
  %2129 = vmatpush1.msra.mxu0 %v1839
  %2130 = vmatprep.subr.mxu0 %v1838
  %2131 = vmatpush1.msra.mxu0 %v1837
  %2132 = vmatprep.subr.mxu0 %v1900
  %2133 = vmatpush2.msra.mxu0 %v1899
  %2134 = vmatprep.subr.mxu0 %v1898
  %2135 = vmatpush2.msra.mxu0 %v1897
  %2136 = vmatprep.subr.mxu0 %v1896
  %2137 = vmatpush2.msra.mxu0 %v1895
  %2138 = vmatprep.subr.mxu0 %v1894
  %2139 = vmatpush2.msra.mxu0 %v1893
  %2140 = vmatprep.subr.mxu0 %v1892
  %2141 = vmatpush2.msra.mxu0 %v1891
  %2142 = vmatprep.subr.mxu0 %v1890
  %2143 = vmatpush2.msra.mxu0 %v1889
  %2144 = vmatprep.subr.mxu0 %v1888
  %2145 = vmatpush2.msra.mxu0 %v1887
  %2146 = vmatprep.subr.mxu0 %v1886
  %2147 = vmatpush2.msra.mxu0 %v1885
  %2148 = vmatprep.subr.mxu0 %v1884
  %2149 = vmatpush2.msra.mxu0 %v1883
  %2150 = vmatprep.subr.mxu0 %v1882
  %2151 = vmatpush2.msra.mxu0 %v1881
  %2152 = vmatprep.subr.mxu0 %v1880
  %2153 = vmatpush2.msra.mxu0 %v1879
  %2154 = vmatprep.subr.mxu0 %v1878
  %2155 = vmatpush2.msra.mxu0 %v1877
  %2156 = vmatprep.subr.mxu0 %v1876
  %2157 = vmatpush2.msra.mxu0 %v1875
  %2158 = vmatprep.subr.mxu0 %v1874
  %2159 = vmatpush2.msra.mxu0 %v1873
  %2160 = vmatprep.subr.mxu0 %v1872
  %2161 = vmatpush2.msra.mxu0 %v1871
  %2162 = vmatprep.subr.mxu0 %v1870
  %2163 = vmatpush2.msra.mxu0 %v1869
  %2164 = vmatprep.mubr.f32.mxu0 %v1760
  %2165 = vmatmul.mubr.f32.gmra.mxu0 %v1759
  %v2166 = vpop.f32.mrf.mxu0
  %v2167 = vadd.f32 %v2096, %v2166
  %v2168 = vpop.f32.mrf.mxu0
  %v2169 = vadd.f32 %v2098, %v2168
  %2170 = vdwg.mxu0
  %2171 = vmatprep.subr.mxu0 %v1932
  %2172 = vmatpush1.msra.mxu0 %v1931
  %2173 = vmatprep.subr.mxu0 %v1930
  %2174 = vmatpush1.msra.mxu0 %v1929
  %2175 = vmatprep.subr.mxu0 %v1928
  %2176 = vmatpush1.msra.mxu0 %v1927
  %2177 = vmatprep.subr.mxu0 %v1926
  %2178 = vmatpush1.msra.mxu0 %v1925
  %2179 = vmatprep.subr.mxu0 %v1924
  %2180 = vmatpush1.msra.mxu0 %v1923
  %2181 = vmatprep.subr.mxu0 %v1922
  %2182 = vmatpush1.msra.mxu0 %v1921
  %2183 = vmatprep.subr.mxu0 %v1920
  %2184 = vmatpush1.msra.mxu0 %v1919
  %2185 = vmatprep.subr.mxu0 %v1918
  %2186 = vmatpush1.msra.mxu0 %v1917
  %2187 = vmatprep.subr.mxu0 %v1916
  %2188 = vmatpush1.msra.mxu0 %v1915
  %2189 = vmatprep.subr.mxu0 %v1914
  %2190 = vmatpush1.msra.mxu0 %v1913
  %2191 = vmatprep.subr.mxu0 %v1912
  %2192 = vmatpush1.msra.mxu0 %v1911
  %2193 = vmatprep.subr.mxu0 %v1910
  %2194 = vmatpush1.msra.mxu0 %v1909
  %2195 = vmatprep.subr.mxu0 %v1908
  %2196 = vmatpush1.msra.mxu0 %v1907
  %2197 = vmatprep.subr.mxu0 %v1906
  %2198 = vmatpush1.msra.mxu0 %v1905
  %2199 = vmatprep.subr.mxu0 %v1904
  %2200 = vmatpush1.msra.mxu0 %v1903
  %2201 = vmatprep.subr.mxu0 %v1902
  %2202 = vmatpush1.msra.mxu0 %v1901
  %2203 = vmatprep.subr.mxu0 %v1964
  %2204 = vmatpush2.msra.mxu0 %v1963
  %2205 = vmatprep.subr.mxu0 %v1962
  %2206 = vmatpush2.msra.mxu0 %v1961
  %2207 = vmatprep.subr.mxu0 %v1960
  %2208 = vmatpush2.msra.mxu0 %v1959
  %2209 = vmatprep.subr.mxu0 %v1958
  %2210 = vmatpush2.msra.mxu0 %v1957
  %2211 = vmatprep.subr.mxu0 %v1956
  %2212 = vmatpush2.msra.mxu0 %v1955
  %2213 = vmatprep.subr.mxu0 %v1954
  %2214 = vmatpush2.msra.mxu0 %v1953
  %2215 = vmatprep.subr.mxu0 %v1952
  %2216 = vmatpush2.msra.mxu0 %v1951
  %2217 = vmatprep.subr.mxu0 %v1950
  %2218 = vmatpush2.msra.mxu0 %v1949
  %2219 = vmatprep.subr.mxu0 %v1948
  %2220 = vmatpush2.msra.mxu0 %v1947
  %2221 = vmatprep.subr.mxu0 %v1946
  %2222 = vmatpush2.msra.mxu0 %v1945
  %2223 = vmatprep.subr.mxu0 %v1944
  %2224 = vmatpush2.msra.mxu0 %v1943
  %2225 = vmatprep.subr.mxu0 %v1942
  %2226 = vmatpush2.msra.mxu0 %v1941
  %2227 = vmatprep.subr.mxu0 %v1940
  %2228 = vmatpush2.msra.mxu0 %v1939
  %2229 = vmatprep.subr.mxu0 %v1938
  %2230 = vmatpush2.msra.mxu0 %v1937
  %2231 = vmatprep.subr.mxu0 %v1936
  %2232 = vmatpush2.msra.mxu0 %v1935
  %2233 = vmatprep.subr.mxu0 %v1934
  %2234 = vmatpush2.msra.mxu0 %v1933
  %2235 = vmatprep.mubr.f32.mxu0 %v1762
  %2236 = vmatmul.mubr.f32.gmra.mxu0 %v1761
  %v2237 = vpop.f32.mrf.mxu0
  %v2238 = vadd.f32 %v2167, %v2237
  %v2239 = vpop.f32.mrf.mxu0
  %v2240 = vadd.f32 %v2169, %v2239
  %2241 = vdwg.mxu0
  %2242 = vmatprep.subr.mxu0 %v1996
  %2243 = vmatpush1.msra.mxu0 %v1995
  %2244 = vmatprep.subr.mxu0 %v1994
  %2245 = vmatpush1.msra.mxu0 %v1993
  %2246 = vmatprep.subr.mxu0 %v1992
  %2247 = vmatpush1.msra.mxu0 %v1991
  %2248 = vmatprep.subr.mxu0 %v1990
  %2249 = vmatpush1.msra.mxu0 %v1989
  %2250 = vmatprep.subr.mxu0 %v1988
  %2251 = vmatpush1.msra.mxu0 %v1987
  %2252 = vmatprep.subr.mxu0 %v1986
  %2253 = vmatpush1.msra.mxu0 %v1985
  %2254 = vmatprep.subr.mxu0 %v1984
  %2255 = vmatpush1.msra.mxu0 %v1983
  %2256 = vmatprep.subr.mxu0 %v1982
  %2257 = vmatpush1.msra.mxu0 %v1981
  %2258 = vmatprep.subr.mxu0 %v1980
  %2259 = vmatpush1.msra.mxu0 %v1979
  %2260 = vmatprep.subr.mxu0 %v1978
  %2261 = vmatpush1.msra.mxu0 %v1977
  %2262 = vmatprep.subr.mxu0 %v1976
  %2263 = vmatpush1.msra.mxu0 %v1975
  %2264 = vmatprep.subr.mxu0 %v1974
  %2265 = vmatpush1.msra.mxu0 %v1973
  %2266 = vmatprep.subr.mxu0 %v1972
  %2267 = vmatpush1.msra.mxu0 %v1971
  %2268 = vmatprep.subr.mxu0 %v1970
  %2269 = vmatpush1.msra.mxu0 %v1969
  %2270 = vmatprep.subr.mxu0 %v1968
  %2271 = vmatpush1.msra.mxu0 %v1967
  %2272 = vmatprep.subr.mxu0 %v1966
  %2273 = vmatpush1.msra.mxu0 %v1965
  %2274 = vmatprep.subr.mxu0 %v2028
  %2275 = vmatpush2.msra.mxu0 %v2027
  %2276 = vmatprep.subr.mxu0 %v2026
  %2277 = vmatpush2.msra.mxu0 %v2025
  %2278 = vmatprep.subr.mxu0 %v2024
  %2279 = vmatpush2.msra.mxu0 %v2023
  %2280 = vmatprep.subr.mxu0 %v2022
  %2281 = vmatpush2.msra.mxu0 %v2021
  %2282 = vmatprep.subr.mxu0 %v2020
  %2283 = vmatpush2.msra.mxu0 %v2019
  %2284 = vmatprep.subr.mxu0 %v2018
  %2285 = vmatpush2.msra.mxu0 %v2017
  %2286 = vmatprep.subr.mxu0 %v2016
  %2287 = vmatpush2.msra.mxu0 %v2015
  %2288 = vmatprep.subr.mxu0 %v2014
  %2289 = vmatpush2.msra.mxu0 %v2013
  %2290 = vmatprep.subr.mxu0 %v2012
  %2291 = vmatpush2.msra.mxu0 %v2011
  %2292 = vmatprep.subr.mxu0 %v2010
  %2293 = vmatpush2.msra.mxu0 %v2009
  %2294 = vmatprep.subr.mxu0 %v2008
  %2295 = vmatpush2.msra.mxu0 %v2007
  %2296 = vmatprep.subr.mxu0 %v2006
  %2297 = vmatpush2.msra.mxu0 %v2005
  %2298 = vmatprep.subr.mxu0 %v2004
  %2299 = vmatpush2.msra.mxu0 %v2003
  %2300 = vmatprep.subr.mxu0 %v2002
  %2301 = vmatpush2.msra.mxu0 %v2001
  %2302 = vmatprep.subr.mxu0 %v2000
  %2303 = vmatpush2.msra.mxu0 %v1999
  %2304 = vmatprep.subr.mxu0 %v1998
  %2305 = vmatpush2.msra.mxu0 %v1997
  %2306 = vmatprep.mubr.f32.mxu0 %v1764
  %2307 = vmatmul.mubr.f32.gmra.mxu0 %v1763
  %v2308 = vpop.f32.mrf.mxu0
  %v2309 = vadd.f32 %v2238, %v2308
  %v2310 = vpop.f32.mrf.mxu0
  %v2311 = vadd.f32 %v2240, %v2310
  %2312 = vdwg.mxu0
  %2313 = vmatprep.subr.mxu0 %v1804
  %2314 = vmatpush1.msra.mxu0 %v1803
  %2315 = vmatprep.subr.mxu0 %v1802
  %2316 = vmatpush1.msra.mxu0 %v1801
  %2317 = vmatprep.subr.mxu0 %v1800
  %2318 = vmatpush1.msra.mxu0 %v1799
  %2319 = vmatprep.subr.mxu0 %v1798
  %2320 = vmatpush1.msra.mxu0 %v1797
  %2321 = vmatprep.subr.mxu0 %v1796
  %2322 = vmatpush1.msra.mxu0 %v1795
  %2323 = vmatprep.subr.mxu0 %v1794
  %2324 = vmatpush1.msra.mxu0 %v1793
  %2325 = vmatprep.subr.mxu0 %v1792
  %2326 = vmatpush1.msra.mxu0 %v1791
  %2327 = vmatprep.subr.mxu0 %v1790
  %2328 = vmatpush1.msra.mxu0 %v1789
  %2329 = vmatprep.subr.mxu0 %v1788
  %2330 = vmatpush1.msra.mxu0 %v1787
  %2331 = vmatprep.subr.mxu0 %v1786
  %2332 = vmatpush1.msra.mxu0 %v1785
  %2333 = vmatprep.subr.mxu0 %v1784
  %2334 = vmatpush1.msra.mxu0 %v1783
  %2335 = vmatprep.subr.mxu0 %v1782
  %2336 = vmatpush1.msra.mxu0 %v1781
  %2337 = vmatprep.subr.mxu0 %v1780
  %2338 = vmatpush1.msra.mxu0 %v1779
  %2339 = vmatprep.subr.mxu0 %v1778
  %2340 = vmatpush1.msra.mxu0 %v1777
  %2341 = vmatprep.subr.mxu0 %v1776
  %2342 = vmatpush1.msra.mxu0 %v1775
  %2343 = vmatprep.subr.mxu0 %v1774
  %2344 = vmatpush1.msra.mxu0 %v1773
  %2345 = vmatprep.subr.mxu0 %v1836
  %2346 = vmatpush2.msra.mxu0 %v1835
  %2347 = vmatprep.subr.mxu0 %v1834
  %2348 = vmatpush2.msra.mxu0 %v1833
  %2349 = vmatprep.subr.mxu0 %v1832
  %2350 = vmatpush2.msra.mxu0 %v1831
  %2351 = vmatprep.subr.mxu0 %v1830
  %2352 = vmatpush2.msra.mxu0 %v1829
  %2353 = vmatprep.subr.mxu0 %v1828
  %2354 = vmatpush2.msra.mxu0 %v1827
  %2355 = vmatprep.subr.mxu0 %v1826
  %2356 = vmatpush2.msra.mxu0 %v1825
  %2357 = vmatprep.subr.mxu0 %v1824
  %2358 = vmatpush2.msra.mxu0 %v1823
  %2359 = vmatprep.subr.mxu0 %v1822
  %2360 = vmatpush2.msra.mxu0 %v1821
  %2361 = vmatprep.subr.mxu0 %v1820
  %2362 = vmatpush2.msra.mxu0 %v1819
  %2363 = vmatprep.subr.mxu0 %v1818
  %2364 = vmatpush2.msra.mxu0 %v1817
  %2365 = vmatprep.subr.mxu0 %v1816
  %2366 = vmatpush2.msra.mxu0 %v1815
  %2367 = vmatprep.subr.mxu0 %v1814
  %2368 = vmatpush2.msra.mxu0 %v1813
  %2369 = vmatprep.subr.mxu0 %v1812
  %2370 = vmatpush2.msra.mxu0 %v1811
  %2371 = vmatprep.subr.mxu0 %v1810
  %2372 = vmatpush2.msra.mxu0 %v1809
  %2373 = vmatprep.subr.mxu0 %v1808
  %2374 = vmatpush2.msra.mxu0 %v1807
  %2375 = vmatprep.subr.mxu0 %v1806
  %2376 = vmatpush2.msra.mxu0 %v1805
  %2377 = vmatprep.mubr.f32.mxu0 %v1766
  %2378 = vmatmul.mubr.f32.gmra.mxu0 %v1765
  %v2379 = vpop.f32.mrf.mxu0
  %v2380 = vadd.f32 0.0, %v2379
  %v2381 = vpop.f32.mrf.mxu0
  %v2382 = vadd.f32 0.0, %v2381
  %2383 = vdwg.mxu0
  %2384 = vmatprep.subr.mxu0 %v1868
  %2385 = vmatpush1.msra.mxu0 %v1867
  %2386 = vmatprep.subr.mxu0 %v1866
  %2387 = vmatpush1.msra.mxu0 %v1865
  %2388 = vmatprep.subr.mxu0 %v1864
  %2389 = vmatpush1.msra.mxu0 %v1863
  %2390 = vmatprep.subr.mxu0 %v1862
  %2391 = vmatpush1.msra.mxu0 %v1861
  %2392 = vmatprep.subr.mxu0 %v1860
  %2393 = vmatpush1.msra.mxu0 %v1859
  %2394 = vmatprep.subr.mxu0 %v1858
  %2395 = vmatpush1.msra.mxu0 %v1857
  %2396 = vmatprep.subr.mxu0 %v1856
  %2397 = vmatpush1.msra.mxu0 %v1855
  %2398 = vmatprep.subr.mxu0 %v1854
  %2399 = vmatpush1.msra.mxu0 %v1853
  %2400 = vmatprep.subr.mxu0 %v1852
  %2401 = vmatpush1.msra.mxu0 %v1851
  %2402 = vmatprep.subr.mxu0 %v1850
  %2403 = vmatpush1.msra.mxu0 %v1849
  %2404 = vmatprep.subr.mxu0 %v1848
  %2405 = vmatpush1.msra.mxu0 %v1847
  %2406 = vmatprep.subr.mxu0 %v1846
  %2407 = vmatpush1.msra.mxu0 %v1845
  %2408 = vmatprep.subr.mxu0 %v1844
  %2409 = vmatpush1.msra.mxu0 %v1843
  %2410 = vmatprep.subr.mxu0 %v1842
  %2411 = vmatpush1.msra.mxu0 %v1841
  %2412 = vmatprep.subr.mxu0 %v1840
  %2413 = vmatpush1.msra.mxu0 %v1839
  %2414 = vmatprep.subr.mxu0 %v1838
  %2415 = vmatpush1.msra.mxu0 %v1837
  %2416 = vmatprep.subr.mxu0 %v1900
  %2417 = vmatpush2.msra.mxu0 %v1899
  %2418 = vmatprep.subr.mxu0 %v1898
  %2419 = vmatpush2.msra.mxu0 %v1897
  %2420 = vmatprep.subr.mxu0 %v1896
  %2421 = vmatpush2.msra.mxu0 %v1895
  %2422 = vmatprep.subr.mxu0 %v1894
  %2423 = vmatpush2.msra.mxu0 %v1893
  %2424 = vmatprep.subr.mxu0 %v1892
  %2425 = vmatpush2.msra.mxu0 %v1891
  %2426 = vmatprep.subr.mxu0 %v1890
  %2427 = vmatpush2.msra.mxu0 %v1889
  %2428 = vmatprep.subr.mxu0 %v1888
  %2429 = vmatpush2.msra.mxu0 %v1887
  %2430 = vmatprep.subr.mxu0 %v1886
  %2431 = vmatpush2.msra.mxu0 %v1885
  %2432 = vmatprep.subr.mxu0 %v1884
  %2433 = vmatpush2.msra.mxu0 %v1883
  %2434 = vmatprep.subr.mxu0 %v1882
  %2435 = vmatpush2.msra.mxu0 %v1881
  %2436 = vmatprep.subr.mxu0 %v1880
  %2437 = vmatpush2.msra.mxu0 %v1879
  %2438 = vmatprep.subr.mxu0 %v1878
  %2439 = vmatpush2.msra.mxu0 %v1877
  %2440 = vmatprep.subr.mxu0 %v1876
  %2441 = vmatpush2.msra.mxu0 %v1875
  %2442 = vmatprep.subr.mxu0 %v1874
  %2443 = vmatpush2.msra.mxu0 %v1873
  %2444 = vmatprep.subr.mxu0 %v1872
  %2445 = vmatpush2.msra.mxu0 %v1871
  %2446 = vmatprep.subr.mxu0 %v1870
  %2447 = vmatpush2.msra.mxu0 %v1869
  %2448 = vmatprep.mubr.f32.mxu0 %v1768
  %2449 = vmatmul.mubr.f32.gmra.mxu0 %v1767
  %v2450 = vpop.f32.mrf.mxu0
  %v2451 = vadd.f32 %v2380, %v2450
  %v2452 = vpop.f32.mrf.mxu0
  %v2453 = vadd.f32 %v2382, %v2452
  %2454 = vdwg.mxu0
  %2455 = vmatprep.subr.mxu0 %v1932
  %2456 = vmatpush1.msra.mxu0 %v1931
  %2457 = vmatprep.subr.mxu0 %v1930
  %2458 = vmatpush1.msra.mxu0 %v1929
  %2459 = vmatprep.subr.mxu0 %v1928
  %2460 = vmatpush1.msra.mxu0 %v1927
  %2461 = vmatprep.subr.mxu0 %v1926
  %2462 = vmatpush1.msra.mxu0 %v1925
  %2463 = vmatprep.subr.mxu0 %v1924
  %2464 = vmatpush1.msra.mxu0 %v1923
  %2465 = vmatprep.subr.mxu0 %v1922
  %2466 = vmatpush1.msra.mxu0 %v1921
  %2467 = vmatprep.subr.mxu0 %v1920
  %2468 = vmatpush1.msra.mxu0 %v1919
  %2469 = vmatprep.subr.mxu0 %v1918
  %2470 = vmatpush1.msra.mxu0 %v1917
  %2471 = vmatprep.subr.mxu0 %v1916
  %2472 = vmatpush1.msra.mxu0 %v1915
  %2473 = vmatprep.subr.mxu0 %v1914
  %2474 = vmatpush1.msra.mxu0 %v1913
  %2475 = vmatprep.subr.mxu0 %v1912
  %2476 = vmatpush1.msra.mxu0 %v1911
  %2477 = vmatprep.subr.mxu0 %v1910
  %2478 = vmatpush1.msra.mxu0 %v1909
  %2479 = vmatprep.subr.mxu0 %v1908
  %2480 = vmatpush1.msra.mxu0 %v1907
  %2481 = vmatprep.subr.mxu0 %v1906
  %2482 = vmatpush1.msra.mxu0 %v1905
  %2483 = vmatprep.subr.mxu0 %v1904
  %2484 = vmatpush1.msra.mxu0 %v1903
  %2485 = vmatprep.subr.mxu0 %v1902
  %2486 = vmatpush1.msra.mxu0 %v1901
  %2487 = vmatprep.subr.mxu0 %v1964
  %2488 = vmatpush2.msra.mxu0 %v1963
  %2489 = vmatprep.subr.mxu0 %v1962
  %2490 = vmatpush2.msra.mxu0 %v1961
  %2491 = vmatprep.subr.mxu0 %v1960
  %2492 = vmatpush2.msra.mxu0 %v1959
  %2493 = vmatprep.subr.mxu0 %v1958
  %2494 = vmatpush2.msra.mxu0 %v1957
  %2495 = vmatprep.subr.mxu0 %v1956
  %2496 = vmatpush2.msra.mxu0 %v1955
  %2497 = vmatprep.subr.mxu0 %v1954
  %2498 = vmatpush2.msra.mxu0 %v1953
  %2499 = vmatprep.subr.mxu0 %v1952
  %2500 = vmatpush2.msra.mxu0 %v1951
  %2501 = vmatprep.subr.mxu0 %v1950
  %2502 = vmatpush2.msra.mxu0 %v1949
  %2503 = vmatprep.subr.mxu0 %v1948
  %2504 = vmatpush2.msra.mxu0 %v1947
  %2505 = vmatprep.subr.mxu0 %v1946
  %2506 = vmatpush2.msra.mxu0 %v1945
  %2507 = vmatprep.subr.mxu0 %v1944
  %2508 = vmatpush2.msra.mxu0 %v1943
  %2509 = vmatprep.subr.mxu0 %v1942
  %2510 = vmatpush2.msra.mxu0 %v1941
  %2511 = vmatprep.subr.mxu0 %v1940
  %2512 = vmatpush2.msra.mxu0 %v1939
  %2513 = vmatprep.subr.mxu0 %v1938
  %2514 = vmatpush2.msra.mxu0 %v1937
  %2515 = vmatprep.subr.mxu0 %v1936
  %2516 = vmatpush2.msra.mxu0 %v1935
  %2517 = vmatprep.subr.mxu0 %v1934
  %2518 = vmatpush2.msra.mxu0 %v1933
  %2519 = vmatprep.mubr.f32.mxu0 %v1770
  %2520 = vmatmul.mubr.f32.gmra.mxu0 %v1769
  %v2521 = vpop.f32.mrf.mxu0
  %v2522 = vadd.f32 %v2451, %v2521
  %v2523 = vpop.f32.mrf.mxu0
  %v2524 = vadd.f32 %v2453, %v2523
  %2525 = vdwg.mxu0
  %2526 = vmatprep.subr.mxu0 %v1996
  %2527 = vmatpush1.msra.mxu0 %v1995
  %2528 = vmatprep.subr.mxu0 %v1994
  %2529 = vmatpush1.msra.mxu0 %v1993
  %2530 = vmatprep.subr.mxu0 %v1992
  %2531 = vmatpush1.msra.mxu0 %v1991
  %2532 = vmatprep.subr.mxu0 %v1990
  %2533 = vmatpush1.msra.mxu0 %v1989
  %2534 = vmatprep.subr.mxu0 %v1988
  %2535 = vmatpush1.msra.mxu0 %v1987
  %2536 = vmatprep.subr.mxu0 %v1986
  %2537 = vmatpush1.msra.mxu0 %v1985
  %2538 = vmatprep.subr.mxu0 %v1984
  %2539 = vmatpush1.msra.mxu0 %v1983
  %2540 = vmatprep.subr.mxu0 %v1982
  %2541 = vmatpush1.msra.mxu0 %v1981
  %2542 = vmatprep.subr.mxu0 %v1980
  %2543 = vmatpush1.msra.mxu0 %v1979
  %2544 = vmatprep.subr.mxu0 %v1978
  %2545 = vmatpush1.msra.mxu0 %v1977
  %2546 = vmatprep.subr.mxu0 %v1976
  %2547 = vmatpush1.msra.mxu0 %v1975
  %2548 = vmatprep.subr.mxu0 %v1974
  %2549 = vmatpush1.msra.mxu0 %v1973
  %2550 = vmatprep.subr.mxu0 %v1972
  %2551 = vmatpush1.msra.mxu0 %v1971
  %2552 = vmatprep.subr.mxu0 %v1970
  %2553 = vmatpush1.msra.mxu0 %v1969
  %2554 = vmatprep.subr.mxu0 %v1968
  %2555 = vmatpush1.msra.mxu0 %v1967
  %2556 = vmatprep.subr.mxu0 %v1966
  %2557 = vmatpush1.msra.mxu0 %v1965
  %2558 = vmatprep.subr.mxu0 %v2028
  %2559 = vmatpush2.msra.mxu0 %v2027
  %2560 = vmatprep.subr.mxu0 %v2026
  %2561 = vmatpush2.msra.mxu0 %v2025
  %2562 = vmatprep.subr.mxu0 %v2024
  %2563 = vmatpush2.msra.mxu0 %v2023
  %2564 = vmatprep.subr.mxu0 %v2022
  %2565 = vmatpush2.msra.mxu0 %v2021
  %2566 = vmatprep.subr.mxu0 %v2020
  %2567 = vmatpush2.msra.mxu0 %v2019
  %2568 = vmatprep.subr.mxu0 %v2018
  %2569 = vmatpush2.msra.mxu0 %v2017
  %2570 = vmatprep.subr.mxu0 %v2016
  %2571 = vmatpush2.msra.mxu0 %v2015
  %2572 = vmatprep.subr.mxu0 %v2014
  %2573 = vmatpush2.msra.mxu0 %v2013
  %2574 = vmatprep.subr.mxu0 %v2012
  %2575 = vmatpush2.msra.mxu0 %v2011
  %2576 = vmatprep.subr.mxu0 %v2010
  %2577 = vmatpush2.msra.mxu0 %v2009
  %2578 = vmatprep.subr.mxu0 %v2008
  %2579 = vmatpush2.msra.mxu0 %v2007
  %2580 = vmatprep.subr.mxu0 %v2006
  %2581 = vmatpush2.msra.mxu0 %v2005
  %2582 = vmatprep.subr.mxu0 %v2004
  %2583 = vmatpush2.msra.mxu0 %v2003
  %2584 = vmatprep.subr.mxu0 %v2002
  %2585 = vmatpush2.msra.mxu0 %v2001
  %2586 = vmatprep.subr.mxu0 %v2000
  %2587 = vmatpush2.msra.mxu0 %v1999
  %2588 = vmatprep.subr.mxu0 %v1998
  %2589 = vmatpush2.msra.mxu0 %v1997
  %2590 = vmatprep.mubr.f32.mxu0 %v1772
  %2591 = vmatmul.mubr.f32.gmra.mxu0 %v1771
  %v2592 = vpop.f32.mrf.mxu0
  %v2593 = vadd.f32 %v2522, %v2592
  %v2594 = vpop.f32.mrf.mxu0
  %v2595 = vadd.f32 %v2524, %v2594
  %2596 = vdwg.mxu0
  %2599 = vrot.lane.b32.xlu0 %v2593, 97
  %v2600 = vpop.permute.xlu0 %2599
  %2601 = vrot.lane.b32.xlu0 %v2595, 97
  %v2602 = vpop.permute.xlu0 %2601
  %vm2603 = vcmask 793600
  %v2604 = vsel %vm2603, %v2600, %v2602
  %v2608 = vsel %vm2603, %v2311, %v2600
  %2611 = vrot.lane.b32.xlu0 %v2309, 127
  %v2612 = vpop.permute.xlu0 %2611
  %2613 = vrot.lane.b32.xlu0 %v2608, 127
  %v2614 = vpop.permute.xlu0 %2613
  %2615 = vrot.lane.b32.xlu0 %v2604, 127
  %v2616 = vpop.permute.xlu0 %2615
  %2617 = vrot.lane.b32.xlu0 %v2602, 127
  %v2618 = vpop.permute.xlu0 %2617
  %v2619 = vsel %vm144, %v2612, %v2614
  %v2620 = vsel %vm144, %v2614, %v2616
  %v2621 = vsel %vm144, %v2616, %v2618
  %2623 = vrot.lane.b32.xlu0 %v2309, 65
  %v2624 = vpop.permute.xlu0 %2623
  %vm2626 = vcmask 531456
  %v2627 = vsel %vm2626, %v2618, %v2624
  %2628 = vrot.lane.b32.xlu0 %v2309, 126
  %v2629 = vpop.permute.xlu0 %2628
  %2630 = vrot.lane.b32.xlu0 %v2608, 126
  %v2631 = vpop.permute.xlu0 %2630
  %2632 = vrot.lane.b32.xlu0 %v2604, 126
  %v2633 = vpop.permute.xlu0 %2632
  %2634 = vrot.lane.b32.xlu0 %v2602, 126
  %v2635 = vpop.permute.xlu0 %2634
  %v2636 = vsel %vm195, %v2629, %v2631
  %v2637 = vsel %vm195, %v2631, %v2633
  %v2638 = vsel %vm195, %v2633, %v2635
  %2640 = vrot.lane.b32.xlu0 %v2309, 64
  %v2641 = vpop.permute.xlu0 %2640
  %v2643 = vsel %vm399, %v2635, %v2641
  %2644 = vrot.lane.b32.xlu0 %v2309, 113
  %v2645 = vpop.permute.xlu0 %2644
  %2646 = vrot.lane.b32.xlu0 %v2608, 113
  %v2647 = vpop.permute.xlu0 %2646
  %2648 = vrot.lane.b32.xlu0 %v2604, 113
  %v2649 = vpop.permute.xlu0 %2648
  %2650 = vrot.lane.b32.xlu0 %v2602, 113
  %v2651 = vpop.permute.xlu0 %2650
  %vm2652 = vcmask 924672
  %v2653 = vsel %vm2652, %v2645, %v2647
  %v2654 = vsel %vm2652, %v2647, %v2649
  %v2655 = vsel %vm2652, %v2649, %v2651
  %2657 = vrot.lane.b32.xlu0 %v2309, 51
  %v2658 = vpop.permute.xlu0 %2657
  %vm2660 = vcmask 416768
  %v2661 = vsel %vm2660, %v2651, %v2658
  %2662 = vrot.lane.b32.xlu0 %v2309, 112
  %v2663 = vpop.permute.xlu0 %2662
  %2664 = vrot.lane.b32.xlu0 %v2608, 112
  %v2665 = vpop.permute.xlu0 %2664
  %2666 = vrot.lane.b32.xlu0 %v2604, 112
  %v2667 = vpop.permute.xlu0 %2666
  %2668 = vrot.lane.b32.xlu0 %v2602, 112
  %v2669 = vpop.permute.xlu0 %2668
  %vm2670 = vcmask 916480
  %v2671 = vsel %vm2670, %v2663, %v2665
  %v2672 = vsel %vm2670, %v2665, %v2667
  %v2673 = vsel %vm2670, %v2667, %v2669
  %2678 = vrot.lane.b32.xlu0 %v2309, 50
  %v2679 = vpop.permute.xlu0 %2678
  %vm2681 = vcmask 408576
  %v2682 = vsel %vm2681, %v2669, %v2679
  %2683 = vrot.lane.b32.xlu0 %v2309, 111
  %v2684 = vpop.permute.xlu0 %2683
  %2685 = vrot.lane.b32.xlu0 %v2608, 111
  %v2686 = vpop.permute.xlu0 %2685
  %2687 = vrot.lane.b32.xlu0 %v2604, 111
  %v2688 = vpop.permute.xlu0 %2687
  %2689 = vrot.lane.b32.xlu0 %v2602, 111
  %v2690 = vpop.permute.xlu0 %2689
  %vm2691 = vcmask 908288
  %v2692 = vsel %vm2691, %v2684, %v2686
  %v2693 = vsel %vm2691, %v2686, %v2688
  %v2694 = vsel %vm2691, %v2688, %v2690
  %2696 = vrot.lane.b32.xlu0 %v2309, 49
  %v2697 = vpop.permute.xlu0 %2696
  %vm2699 = vcmask 400384
  %v2700 = vsel %vm2699, %v2690, %v2697
  %2701 = vrot.lane.b32.xlu0 %v2309, 98
  %v2702 = vpop.permute.xlu0 %2701
  %2703 = vrot.lane.b32.xlu0 %v2608, 98
  %v2704 = vpop.permute.xlu0 %2703
  %2705 = vrot.lane.b32.xlu0 %v2604, 98
  %v2706 = vpop.permute.xlu0 %2705
  %2707 = vrot.lane.b32.xlu0 %v2602, 98
  %v2708 = vpop.permute.xlu0 %2707
  %vm2709 = vcmask 801792
  %v2710 = vsel %vm2709, %v2702, %v2704
  %v2711 = vsel %vm2709, %v2704, %v2706
  %v2712 = vsel %vm2709, %v2706, %v2708
  %2714 = vrot.lane.b32.xlu0 %v2309, 36
  %v2715 = vpop.permute.xlu0 %2714
  %vm2717 = vcmask 293888
  %v2718 = vsel %vm2717, %v2708, %v2715
  %2719 = vrot.lane.b32.xlu0 %v2309, 97
  %v2720 = vpop.permute.xlu0 %2719
  %2721 = vrot.lane.b32.xlu0 %v2608, 97
  %v2722 = vpop.permute.xlu0 %2721
  %2723 = vrot.lane.b32.xlu0 %v2604, 97
  %v2724 = vpop.permute.xlu0 %2723
  %2725 = vrot.lane.b32.xlu0 %v2602, 97
  %v2726 = vpop.permute.xlu0 %2725
  %v2727 = vsel %vm2603, %v2720, %v2722
  %v2728 = vsel %vm2603, %v2722, %v2724
  %v2729 = vsel %vm2603, %v2724, %v2726
  %2731 = vrot.lane.b32.xlu0 %v2309, 35
  %v2732 = vpop.permute.xlu0 %2731
  %vm2734 = vcmask 285696
  %v2735 = vsel %vm2734, %v2726, %v2732
  %2736 = vrot.lane.b32.xlu0 %v2309, 96
  %v2737 = vpop.permute.xlu0 %2736
  %2738 = vrot.lane.b32.xlu0 %v2608, 96
  %v2739 = vpop.permute.xlu0 %2738
  %2740 = vrot.lane.b32.xlu0 %v2604, 96
  %v2741 = vpop.permute.xlu0 %2740
  %2742 = vrot.lane.b32.xlu0 %v2602, 96
  %v2743 = vpop.permute.xlu0 %2742
  %v2744 = vsel %vm246, %v2737, %v2739
  %v2745 = vsel %vm246, %v2739, %v2741
  %v2746 = vsel %vm246, %v2741, %v2743
  %2748 = vrot.lane.b32.xlu0 %v2309, 34
  %v2749 = vpop.permute.xlu0 %2748
  %vm2751 = vcmask 277504
  %v2752 = vsel %vm2751, %v2743, %v2749
  %v2754 = vrot.slane %v2619, 2
  %v2755 = vrot.slane %v2620, 2
  %v2756 = vrot.slane %v2621, 2
  %v2757 = vrot.slane %v2627, 2
  %v2763 = vrot.slane %v2636, 4
  %v2764 = vrot.slane %v2637, 4
  %v2765 = vrot.slane %v2638, 4
  %v2766 = vrot.slane %v2643, 4
  %v2772 = vrot.slane %v2653, 6
  %v2773 = vrot.slane %v2654, 6
  %v2774 = vrot.slane %v2655, 6
  %v2775 = vrot.slane %v2661, 6
  %v2781 = vrot.slane %v2692, 2
  %v2782 = vrot.slane %v2693, 2
  %v2783 = vrot.slane %v2694, 2
  %v2784 = vrot.slane %v2700, 2
  %v2790 = vrot.slane %v2710, 4
  %v2791 = vrot.slane %v2711, 4
  %v2792 = vrot.slane %v2712, 4
  %v2793 = vrot.slane %v2718, 4
  %v2799 = vrot.slane %v2727, 6
  %v2800 = vrot.slane %v2728, 6
  %v2801 = vrot.slane %v2729, 6
  %v2802 = vrot.slane %v2735, 6
  %v2807 = vsel %vm852, %v2309, %v2754
  %v2808 = vsel %vm852, %v2608, %v2755
  %v2809 = vsel %vm852, %v2604, %v2756
  %v2810 = vsel %vm852, %v2602, %v2757
  %v2811 = vsel %vm818, %v2754, %v2763
  %v2812 = vsel %vm818, %v2755, %v2764
  %v2813 = vsel %vm818, %v2756, %v2765
  %v2814 = vsel %vm818, %v2757, %v2766
  %v2815 = vsel %vm784, %v2763, %v2772
  %v2816 = vsel %vm784, %v2764, %v2773
  %v2817 = vsel %vm784, %v2765, %v2774
  %v2818 = vsel %vm784, %v2766, %v2775
  %v2819 = vsel %vm852, %v2671, %v2781
  %v2820 = vsel %vm852, %v2672, %v2782
  %v2821 = vsel %vm852, %v2673, %v2783
  %v2822 = vsel %vm852, %v2682, %v2784
  %v2823 = vsel %vm818, %v2781, %v2790
  %v2824 = vsel %vm818, %v2782, %v2791
  %v2825 = vsel %vm818, %v2783, %v2792
  %v2826 = vsel %vm818, %v2784, %v2793
  %v2827 = vsel %vm784, %v2790, %v2799
  %v2828 = vsel %vm784, %v2791, %v2800
  %v2829 = vsel %vm784, %v2792, %v2801
  %v2830 = vsel %vm784, %v2793, %v2802
  %v2831 = vld [vmem:[%s4] sm:$0xff]
  %v2832 = vld [vmem:[%s4 + $0x8] sm:$0xff]
  %v2833 = vld [vmem:[%s5] sm:$0xff]
  %v2834 = vld [vmem:[%s5 + $0x8] sm:$0xff]
  %2836 = vset.pattern.permute.xlu0 0
  %2837 = vperm.xlu0 %2836, %v2833
  %v2838 = vpop.permute.xlu0 %2837
  %2841 = vset.pattern.permute.xlu0 0
  %2842 = vperm.xlu0 %2841, %v2834
  %v2843 = vpop.permute.xlu0 %2842
  %vm2845 = vcmask 441344
  %v2847 = vsel %vm2845, %v2831, 0
  %v2850 = vsel %vm2845, %v2832, 0
  %v2852 = vsel %vm852, %v2744, 0
  %v2854 = vsel %vm852, %v2745, 0
  %v2856 = vsel %vm852, %v2746, 0
  %v2859 = vsel %vm852, %v2752, 0
  %2861 = vmatprep.subr.mxu0 0.0
  %2862 = vmatpush1.msra.mxu0 0.0
  %2863 = vmatprep.subr.mxu0 0.0
  %2864 = vmatpush1.msra.mxu0 0.0
  %2865 = vmatprep.subr.mxu0 0.0
  %2866 = vmatpush1.msra.mxu0 0.0
  %2867 = vmatprep.subr.mxu0 0.0
  %2868 = vmatpush1.msra.mxu0 0.0
  %2869 = vmatprep.subr.mxu0 0.0
  %2870 = vmatpush1.msra.mxu0 0.0
  %2871 = vmatprep.subr.mxu0 0.0
  %2872 = vmatpush1.msra.mxu0 0.0
  %2873 = vmatprep.subr.mxu0 0.0
  %2874 = vmatpush1.msra.mxu0 0.0
  %2875 = vmatprep.subr.mxu0 0.0
  %2876 = vmatpush1.msra.mxu0 0.0
  %2877 = vmatprep.subr.mxu0 0.0
  %2878 = vmatpush1.msra.mxu0 0.0
  %2879 = vmatprep.subr.mxu0 %v2854
  %2880 = vmatpush1.msra.mxu0 %v2852
  %2881 = vmatprep.subr.mxu0 %v2828
  %2882 = vmatpush1.msra.mxu0 %v2827
  %2883 = vmatprep.subr.mxu0 %v2824
  %2884 = vmatpush1.msra.mxu0 %v2823
  %2885 = vmatprep.subr.mxu0 %v2820
  %2886 = vmatpush1.msra.mxu0 %v2819
  %2887 = vmatprep.subr.mxu0 %v2816
  %2888 = vmatpush1.msra.mxu0 %v2815
  %2889 = vmatprep.subr.mxu0 %v2812
  %2890 = vmatpush1.msra.mxu0 %v2811
  %2891 = vmatprep.subr.mxu0 %v2808
  %2892 = vmatpush1.msra.mxu0 %v2807
  %2893 = vmatprep.subr.mxu0 0.0
  %2894 = vmatpush2.msra.mxu0 0.0
  %2895 = vmatprep.subr.mxu0 0.0
  %2896 = vmatpush2.msra.mxu0 0.0
  %2897 = vmatprep.subr.mxu0 0.0
  %2898 = vmatpush2.msra.mxu0 0.0
  %2899 = vmatprep.subr.mxu0 0.0
  %2900 = vmatpush2.msra.mxu0 0.0
  %2901 = vmatprep.subr.mxu0 0.0
  %2902 = vmatpush2.msra.mxu0 0.0
  %2903 = vmatprep.subr.mxu0 0.0
  %2904 = vmatpush2.msra.mxu0 0.0
  %2905 = vmatprep.subr.mxu0 0.0
  %2906 = vmatpush2.msra.mxu0 0.0
  %2907 = vmatprep.subr.mxu0 0.0
  %2908 = vmatpush2.msra.mxu0 0.0
  %2909 = vmatprep.subr.mxu0 0.0
  %2910 = vmatpush2.msra.mxu0 0.0
  %2911 = vmatprep.subr.mxu0 0.0
  %2912 = vmatpush2.msra.mxu0 0.0
  %2913 = vmatprep.subr.mxu0 0.0
  %2914 = vmatpush2.msra.mxu0 0.0
  %2915 = vmatprep.subr.mxu0 0.0
  %2916 = vmatpush2.msra.mxu0 0.0
  %2917 = vmatprep.subr.mxu0 0.0
  %2918 = vmatpush2.msra.mxu0 0.0
  %2919 = vmatprep.subr.mxu0 0.0
  %2920 = vmatpush2.msra.mxu0 0.0
  %2921 = vmatprep.subr.mxu0 0.0
  %2922 = vmatpush2.msra.mxu0 0.0
  %2923 = vmatprep.subr.mxu0 0.0
  %2924 = vmatpush2.msra.mxu0 0.0
  %2925 = vmatprep.mubr.f32.mxu0 0.0
  %2926 = vmatmul.mubr.f32.gmra.mxu0 %v2847
  %v2927 = vpop.f32.mrf.mxu0
  %v2928 = vadd.f32 %v2838, %v2927
  %v2929 = vpop.f32.mrf.mxu0
  %v2930 = vadd.f32 %v2838, %v2929
  %2931 = vmatprep.mubr.f32.mxu0 0.0
  %2932 = vmatmul.mubr.f32.gmra.mxu0 %v2850
  %v2933 = vpop.f32.mrf.mxu0
  %v2934 = vadd.f32 %v2843, %v2933
  %v2935 = vpop.f32.mrf.mxu0
  %v2936 = vadd.f32 %v2843, %v2935
  %2937 = vdwg.mxu0
  %2938 = vmatprep.subr.mxu0 0.0
  %2939 = vmatpush1.msra.mxu0 0.0
  %2940 = vmatprep.subr.mxu0 0.0
  %2941 = vmatpush1.msra.mxu0 0.0
  %2942 = vmatprep.subr.mxu0 0.0
  %2943 = vmatpush1.msra.mxu0 0.0
  %2944 = vmatprep.subr.mxu0 0.0
  %2945 = vmatpush1.msra.mxu0 0.0
  %2946 = vmatprep.subr.mxu0 0.0
  %2947 = vmatpush1.msra.mxu0 0.0
  %2948 = vmatprep.subr.mxu0 0.0
  %2949 = vmatpush1.msra.mxu0 0.0
  %2950 = vmatprep.subr.mxu0 0.0
  %2951 = vmatpush1.msra.mxu0 0.0
  %2952 = vmatprep.subr.mxu0 0.0
  %2953 = vmatpush1.msra.mxu0 0.0
  %2954 = vmatprep.subr.mxu0 0.0
  %2955 = vmatpush1.msra.mxu0 0.0
  %2956 = vmatprep.subr.mxu0 %v2859
  %2957 = vmatpush1.msra.mxu0 %v2856
  %2958 = vmatprep.subr.mxu0 %v2830
  %2959 = vmatpush1.msra.mxu0 %v2829
  %2960 = vmatprep.subr.mxu0 %v2826
  %2961 = vmatpush1.msra.mxu0 %v2825
  %2962 = vmatprep.subr.mxu0 %v2822
  %2963 = vmatpush1.msra.mxu0 %v2821
  %2964 = vmatprep.subr.mxu0 %v2818
  %2965 = vmatpush1.msra.mxu0 %v2817
  %2966 = vmatprep.subr.mxu0 %v2814
  %2967 = vmatpush1.msra.mxu0 %v2813
  %2968 = vmatprep.subr.mxu0 %v2810
  %2969 = vmatpush1.msra.mxu0 %v2809
  %2970 = vmatprep.subr.mxu0 0.0
  %2971 = vmatpush2.msra.mxu0 0.0
  %2972 = vmatprep.subr.mxu0 0.0
  %2973 = vmatpush2.msra.mxu0 0.0
  %2974 = vmatprep.subr.mxu0 0.0
  %2975 = vmatpush2.msra.mxu0 0.0
  %2976 = vmatprep.subr.mxu0 0.0
  %2977 = vmatpush2.msra.mxu0 0.0
  %2978 = vmatprep.subr.mxu0 0.0
  %2979 = vmatpush2.msra.mxu0 0.0
  %2980 = vmatprep.subr.mxu0 0.0
  %2981 = vmatpush2.msra.mxu0 0.0
  %2982 = vmatprep.subr.mxu0 0.0
  %2983 = vmatpush2.msra.mxu0 0.0
  %2984 = vmatprep.subr.mxu0 0.0
  %2985 = vmatpush2.msra.mxu0 0.0
  %2986 = vmatprep.subr.mxu0 0.0
  %2987 = vmatpush2.msra.mxu0 0.0
  %2988 = vmatprep.subr.mxu0 0.0
  %2989 = vmatpush2.msra.mxu0 0.0
  %2990 = vmatprep.subr.mxu0 0.0
  %2991 = vmatpush2.msra.mxu0 0.0
  %2992 = vmatprep.subr.mxu0 0.0
  %2993 = vmatpush2.msra.mxu0 0.0
  %2994 = vmatprep.subr.mxu0 0.0
  %2995 = vmatpush2.msra.mxu0 0.0
  %2996 = vmatprep.subr.mxu0 0.0
  %2997 = vmatpush2.msra.mxu0 0.0
  %2998 = vmatprep.subr.mxu0 0.0
  %2999 = vmatpush2.msra.mxu0 0.0
  %3000 = vmatprep.subr.mxu0 0.0
  %3001 = vmatpush2.msra.mxu0 0.0
  %3002 = vmatprep.mubr.f32.mxu0 0.0
  %3003 = vmatmul.mubr.f32.gmra.mxu0 %v2847
  %v3004 = vpop.f32.mrf.mxu0
  %v3005 = vadd.f32 %v2838, %v3004
  %v3006 = vpop.f32.mrf.mxu0
  %v3007 = vadd.f32 %v2838, %v3006
  %3008 = vmatprep.mubr.f32.mxu0 0.0
  %3009 = vmatmul.mubr.f32.gmra.mxu0 %v2850
  %v3010 = vpop.f32.mrf.mxu0
  %v3011 = vadd.f32 %v2843, %v3010
  %v3012 = vpop.f32.mrf.mxu0
  %v3013 = vadd.f32 %v2843, %v3012
  %3014 = vdwg.mxu0
  %v3015 = vmax.f32 %v2928, 0.0
  %v3016 = vmax.f32 %v2930, 0.0
  %v3017 = vmax.f32 %v3005, 0.0
  %v3018 = vmax.f32 %v3007, 0.0
  %v3019 = vmax.f32 %v2934, 0.0
  %v3020 = vmax.f32 %v2936, 0.0
  %v3021 = vmax.f32 %v3011, 0.0
  %v3022 = vmax.f32 %v3013, 0.0
  %3031 = vrot.lane.b32.xlu0 %v3015, 127
  %v3032 = vpop.permute.xlu0 %3031
  %3033 = vrot.lane.b32.xlu0 %v3016, 127
  %v3034 = vpop.permute.xlu0 %3033
  %3035 = vrot.lane.b32.xlu0 %v3017, 127
  %v3036 = vpop.permute.xlu0 %3035
  %3037 = vrot.lane.b32.xlu0 %v3018, 127
  %v3038 = vpop.permute.xlu0 %3037
  %3039 = vrot.lane.b32.xlu0 %v3019, 127
  %v3040 = vpop.permute.xlu0 %3039
  %3041 = vrot.lane.b32.xlu0 %v3020, 127
  %v3042 = vpop.permute.xlu0 %3041
  %3043 = vrot.lane.b32.xlu0 %v3021, 127
  %v3044 = vpop.permute.xlu0 %3043
  %3045 = vrot.lane.b32.xlu0 %v3022, 127
  %v3046 = vpop.permute.xlu0 %3045
  %v3047 = vsel %vm144, %v3032, %v3034
  %v3048 = vsel %vm144, %v3034, %v3036
  %v3049 = vsel %vm144, %v3036, %v3038
  %v3050 = vsel %vm144, %v3040, %v3042
  %v3051 = vsel %vm144, %v3042, %v3044
  %v3052 = vsel %vm144, %v3044, %v3046
  %3061 = vrot.lane.b32.xlu0 %v3015, 65
  %v3062 = vpop.permute.xlu0 %3061
  %3063 = vrot.lane.b32.xlu0 %v3019, 65
  %v3064 = vpop.permute.xlu0 %3063
  %v3067 = vsel %vm2626, %v3038, %v3062
  %v3068 = vsel %vm2626, %v3046, %v3064
  %v3069 = vmax.f32 %v3015, %v3047
  %v3070 = vmax.f32 %v3016, %v3048
  %v3071 = vmax.f32 %v3017, %v3049
  %v3072 = vmax.f32 %v3018, %v3067
  %v3073 = vmax.f32 %v3019, %v3050
  %v3074 = vmax.f32 %v3020, %v3051
  %v3075 = vmax.f32 %v3021, %v3052
  %v3076 = vmax.f32 %v3022, %v3068
  %3077 = vrot.lane.b32.xlu0 %v3015, 113
  %v3078 = vpop.permute.xlu0 %3077
  %3079 = vrot.lane.b32.xlu0 %v3016, 113
  %v3080 = vpop.permute.xlu0 %3079
  %3081 = vrot.lane.b32.xlu0 %v3017, 113
  %v3082 = vpop.permute.xlu0 %3081
  %3083 = vrot.lane.b32.xlu0 %v3018, 113
  %v3084 = vpop.permute.xlu0 %3083
  %3085 = vrot.lane.b32.xlu0 %v3019, 113
  %v3086 = vpop.permute.xlu0 %3085
  %3087 = vrot.lane.b32.xlu0 %v3020, 113
  %v3088 = vpop.permute.xlu0 %3087
  %3089 = vrot.lane.b32.xlu0 %v3021, 113
  %v3090 = vpop.permute.xlu0 %3089
  %3091 = vrot.lane.b32.xlu0 %v3022, 113
  %v3092 = vpop.permute.xlu0 %3091
  %v3093 = vsel %vm2652, %v3078, %v3080
  %v3094 = vsel %vm2652, %v3080, %v3082
  %v3095 = vsel %vm2652, %v3082, %v3084
  %v3096 = vsel %vm2652, %v3086, %v3088
  %v3097 = vsel %vm2652, %v3088, %v3090
  %v3098 = vsel %vm2652, %v3090, %v3092
  %3107 = vrot.lane.b32.xlu0 %v3015, 51
  %v3108 = vpop.permute.xlu0 %3107
  %3109 = vrot.lane.b32.xlu0 %v3019, 51
  %v3110 = vpop.permute.xlu0 %3109
  %v3113 = vsel %vm2660, %v3084, %v3108
  %v3114 = vsel %vm2660, %v3092, %v3110
  %3115 = vrot.lane.b32.xlu0 %v3015, 112
  %v3116 = vpop.permute.xlu0 %3115
  %3117 = vrot.lane.b32.xlu0 %v3016, 112
  %v3118 = vpop.permute.xlu0 %3117
  %3119 = vrot.lane.b32.xlu0 %v3017, 112
  %v3120 = vpop.permute.xlu0 %3119
  %3121 = vrot.lane.b32.xlu0 %v3018, 112
  %v3122 = vpop.permute.xlu0 %3121
  %3123 = vrot.lane.b32.xlu0 %v3019, 112
  %v3124 = vpop.permute.xlu0 %3123
  %3125 = vrot.lane.b32.xlu0 %v3020, 112
  %v3126 = vpop.permute.xlu0 %3125
  %3127 = vrot.lane.b32.xlu0 %v3021, 112
  %v3128 = vpop.permute.xlu0 %3127
  %3129 = vrot.lane.b32.xlu0 %v3022, 112
  %v3130 = vpop.permute.xlu0 %3129
  %v3131 = vsel %vm2670, %v3116, %v3118
  %v3132 = vsel %vm2670, %v3118, %v3120
  %v3133 = vsel %vm2670, %v3120, %v3122
  %v3134 = vsel %vm2670, %v3124, %v3126
  %v3135 = vsel %vm2670, %v3126, %v3128
  %v3136 = vsel %vm2670, %v3128, %v3130
  %3145 = vrot.lane.b32.xlu0 %v3015, 50
  %v3146 = vpop.permute.xlu0 %3145
  %3147 = vrot.lane.b32.xlu0 %v3019, 50
  %v3148 = vpop.permute.xlu0 %3147
  %v3151 = vsel %vm2681, %v3122, %v3146
  %v3152 = vsel %vm2681, %v3130, %v3148
  %v3153 = vmax.f32 %v3093, %v3131
  %v3154 = vmax.f32 %v3094, %v3132
  %v3155 = vmax.f32 %v3095, %v3133
  %v3156 = vmax.f32 %v3113, %v3151
  %v3157 = vmax.f32 %v3096, %v3134
  %v3158 = vmax.f32 %v3097, %v3135
  %v3159 = vmax.f32 %v3098, %v3136
  %v3160 = vmax.f32 %v3114, %v3152
  %v3161 = vmax.f32 %v3069, %v3153
  %v3162 = vmax.f32 %v3070, %v3154
  %v3163 = vmax.f32 %v3071, %v3155
  %v3164 = vmax.f32 %v3072, %v3156
  %v3165 = vmax.f32 %v3073, %v3157
  %v3166 = vmax.f32 %v3074, %v3158
  %v3167 = vmax.f32 %v3075, %v3159
  %v3168 = vmax.f32 %v3076, %v3160
  %v3169 = vld [vmem:[%s6] sm:$0xff]
  %v3170 = vld [vmem:[%s6 + $0x8] sm:$0xff]
  %v3171 = vld [vmem:[%s6 + $0x10] sm:$0xff]
  %v3172 = vld [vmem:[%s6 + $0x18] sm:$0xff]
  %v3173 = vld [vmem:[%s6 + $0x20] sm:$0xff]
  %v3174 = vld [vmem:[%s6 + $0x28] sm:$0xff]
  %v3175 = vld [vmem:[%s6 + $0x30] sm:$0xff]
  %v3176 = vld [vmem:[%s6 + $0x38] sm:$0xff]
  %v3177 = vld [vmem:[%s6 + $0x40] sm:$0xff]
  %v3178 = vld [vmem:[%s6 + $0x48] sm:$0xff]
  %v3179 = vld [vmem:[%s6 + $0x50] sm:$0xff]
  %v3180 = vld [vmem:[%s6 + $0x58] sm:$0xff]
  %v3181 = vld [vmem:[%s6 + $0x60] sm:$0xff]
  %v3182 = vld [vmem:[%s6 + $0x68] sm:$0xff]
  %v3183 = vld [vmem:[%s6 + $0x70] sm:$0xff]
  %v3184 = vld [vmem:[%s6 + $0x78] sm:$0xff]
  %v3185 = vld [vmem:[%s6 + $0x80] sm:$0xff]
  %v3186 = vld [vmem:[%s6 + $0x88] sm:$0xff]
  %v3187 = vld [vmem:[%s6 + $0x90] sm:$0xff]
  %v3188 = vld [vmem:[%s6 + $0x98] sm:$0xff]
  %v3189 = vld [vmem:[%s6 + $0xa0] sm:$0xff]
  %v3190 = vld [vmem:[%s6 + $0xa8] sm:$0xff]
  %v3191 = vld [vmem:[%s6 + $0xb0] sm:$0xff]
  %v3192 = vld [vmem:[%s6 + $0xb8] sm:$0xff]
  %v3193 = vld [vmem:[%s6 + $0xc0] sm:$0xff]
  %v3194 = vld [vmem:[%s6 + $0xc8] sm:$0xff]
  %v3195 = vld [vmem:[%s6 + $0xd0] sm:$0xff]
  %v3196 = vld [vmem:[%s6 + $0xd8] sm:$0xff]
  %v3197 = vld [vmem:[%s6 + $0xe0] sm:$0xff]
  %v3198 = vld [vmem:[%s6 + $0xe8] sm:$0xff]
  %v3199 = vld [vmem:[%s6 + $0xf0] sm:$0xff]
  %v3200 = vld [vmem:[%s6 + $0xf8] sm:$0xff]
  %v3201 = vld [vmem:[%s6 + $0x100] sm:$0xff]
  %v3202 = vld [vmem:[%s6 + $0x108] sm:$0xff]
  %v3203 = vld [vmem:[%s6 + $0x110] sm:$0xff]
  %v3204 = vld [vmem:[%s6 + $0x118] sm:$0xff]
  %v3205 = vld [vmem:[%s6 + $0x120] sm:$0xff]
  %v3206 = vld [vmem:[%s6 + $0x128] sm:$0xff]
  %v3207 = vld [vmem:[%s6 + $0x130] sm:$0xff]
  %v3208 = vld [vmem:[%s6 + $0x138] sm:$0xff]
  %v3209 = vld [vmem:[%s6 + $0x140] sm:$0xff]
  %v3210 = vld [vmem:[%s6 + $0x148] sm:$0xff]
  %v3211 = vld [vmem:[%s6 + $0x150] sm:$0xff]
  %v3212 = vld [vmem:[%s6 + $0x158] sm:$0xff]
  %v3213 = vld [vmem:[%s6 + $0x160] sm:$0xff]
  %v3214 = vld [vmem:[%s6 + $0x168] sm:$0xff]
  %v3215 = vld [vmem:[%s6 + $0x170] sm:$0xff]
  %v3216 = vld [vmem:[%s6 + $0x178] sm:$0xff]
  %v3217 = vld [vmem:[%s6 + $0x180] sm:$0xff]
  %v3218 = vld [vmem:[%s6 + $0x188] sm:$0xff]
  %v3219 = vld [vmem:[%s6 + $0x190] sm:$0xff]
  %v3220 = vld [vmem:[%s6 + $0x198] sm:$0xff]
  %v3221 = vld [vmem:[%s6 + $0x1a0] sm:$0xff]
  %v3222 = vld [vmem:[%s6 + $0x1a8] sm:$0xff]
  %v3223 = vld [vmem:[%s6 + $0x1b0] sm:$0xff]
  %v3224 = vld [vmem:[%s6 + $0x1b8] sm:$0xff]
  %v3225 = vld [vmem:[%s6 + $0x1c0] sm:$0x3]
  %vm3226 = vcmask 539648
  %v3228 = vsel %vm3226, %v3164, 0
  %v3231 = vsel %vm3226, %v3168, 0
  %v3234 = vsel %vm784, %v3225, 0
  %3236 = vmatprep.subr.mxu0 0.0
  %3237 = vmatpush1.msra.mxu0 %v3184
  %3238 = vmatprep.subr.mxu0 0.0
  %3239 = vmatpush1.msra.mxu0 %v3183
  %3240 = vmatprep.subr.mxu0 0.0
  %3241 = vmatpush1.msra.mxu0 %v3182
  %3242 = vmatprep.subr.mxu0 0.0
  %3243 = vmatpush1.msra.mxu0 %v3181
  %3244 = vmatprep.subr.mxu0 0.0
  %3245 = vmatpush1.msra.mxu0 %v3180
  %3246 = vmatprep.subr.mxu0 0.0
  %3247 = vmatpush1.msra.mxu0 %v3179
  %3248 = vmatprep.subr.mxu0 0.0
  %3249 = vmatpush1.msra.mxu0 %v3178
  %3250 = vmatprep.subr.mxu0 0.0
  %3251 = vmatpush1.msra.mxu0 %v3177
  %3252 = vmatprep.subr.mxu0 0.0
  %3253 = vmatpush1.msra.mxu0 %v3176
  %3254 = vmatprep.subr.mxu0 0.0
  %3255 = vmatpush1.msra.mxu0 %v3175
  %3256 = vmatprep.subr.mxu0 0.0
  %3257 = vmatpush1.msra.mxu0 %v3174
  %3258 = vmatprep.subr.mxu0 0.0
  %3259 = vmatpush1.msra.mxu0 %v3173
  %3260 = vmatprep.subr.mxu0 0.0
  %3261 = vmatpush1.msra.mxu0 %v3172
  %3262 = vmatprep.subr.mxu0 0.0
  %3263 = vmatpush1.msra.mxu0 %v3171
  %3264 = vmatprep.subr.mxu0 0.0
  %3265 = vmatpush1.msra.mxu0 %v3170
  %3266 = vmatprep.subr.mxu0 0.0
  %3267 = vmatpush1.msra.mxu0 %v3169
  %3268 = vmatprep.subr.mxu0 0.0
  %3269 = vmatpush2.msra.mxu0 %v3200
  %3270 = vmatprep.subr.mxu0 0.0
  %3271 = vmatpush2.msra.mxu0 %v3199
  %3272 = vmatprep.subr.mxu0 0.0
  %3273 = vmatpush2.msra.mxu0 %v3198
  %3274 = vmatprep.subr.mxu0 0.0
  %3275 = vmatpush2.msra.mxu0 %v3197
  %3276 = vmatprep.subr.mxu0 0.0
  %3277 = vmatpush2.msra.mxu0 %v3196
  %3278 = vmatprep.subr.mxu0 0.0
  %3279 = vmatpush2.msra.mxu0 %v3195
  %3280 = vmatprep.subr.mxu0 0.0
  %3281 = vmatpush2.msra.mxu0 %v3194
  %3282 = vmatprep.subr.mxu0 0.0
  %3283 = vmatpush2.msra.mxu0 %v3193
  %3284 = vmatprep.subr.mxu0 0.0
  %3285 = vmatpush2.msra.mxu0 %v3192
  %3286 = vmatprep.subr.mxu0 0.0
  %3287 = vmatpush2.msra.mxu0 %v3191
  %3288 = vmatprep.subr.mxu0 0.0
  %3289 = vmatpush2.msra.mxu0 %v3190
  %3290 = vmatprep.subr.mxu0 0.0
  %3291 = vmatpush2.msra.mxu0 %v3189
  %3292 = vmatprep.subr.mxu0 0.0
  %3293 = vmatpush2.msra.mxu0 %v3188
  %3294 = vmatprep.subr.mxu0 0.0
  %3295 = vmatpush2.msra.mxu0 %v3187
  %3296 = vmatprep.subr.mxu0 0.0
  %3297 = vmatpush2.msra.mxu0 %v3186
  %3298 = vmatprep.subr.mxu0 0.0
  %3299 = vmatpush2.msra.mxu0 %v3185
  %3300 = vmatprep.mubr.f32.mxu0 %v3162
  %3301 = vmatmul.mubr.f32.gmra.mxu0 %v3161
  %v3302 = vpop.f32.mrf.mxu0
  %v3303 = vadd.f32 0.0, %v3302
  %v3304 = vpop.f32.mrf.mxu0
  %3305 = vmatprep.mubr.f32.mxu0 %v3166
  %3306 = vmatmul.mubr.f32.gmra.mxu0 %v3165
  %v3307 = vpop.f32.mrf.mxu0
  %v3308 = vadd.f32 0.0, %v3307
  %v3309 = vpop.f32.mrf.mxu0
  %3310 = vdwg.mxu0
  %3311 = vmatprep.subr.mxu0 0.0
  %3312 = vmatpush1.msra.mxu0 %v3216
  %3313 = vmatprep.subr.mxu0 0.0
  %3314 = vmatpush1.msra.mxu0 %v3215
  %3315 = vmatprep.subr.mxu0 0.0
  %3316 = vmatpush1.msra.mxu0 %v3214
  %3317 = vmatprep.subr.mxu0 0.0
  %3318 = vmatpush1.msra.mxu0 %v3213
  %3319 = vmatprep.subr.mxu0 0.0
  %3320 = vmatpush1.msra.mxu0 %v3212
  %3321 = vmatprep.subr.mxu0 0.0
  %3322 = vmatpush1.msra.mxu0 %v3211
  %3323 = vmatprep.subr.mxu0 0.0
  %3324 = vmatpush1.msra.mxu0 %v3210
  %3325 = vmatprep.subr.mxu0 0.0
  %3326 = vmatpush1.msra.mxu0 %v3209
  %3327 = vmatprep.subr.mxu0 0.0
  %3328 = vmatpush1.msra.mxu0 %v3208
  %3329 = vmatprep.subr.mxu0 0.0
  %3330 = vmatpush1.msra.mxu0 %v3207
  %3331 = vmatprep.subr.mxu0 0.0
  %3332 = vmatpush1.msra.mxu0 %v3206
  %3333 = vmatprep.subr.mxu0 0.0
  %3334 = vmatpush1.msra.mxu0 %v3205
  %3335 = vmatprep.subr.mxu0 0.0
  %3336 = vmatpush1.msra.mxu0 %v3204
  %3337 = vmatprep.subr.mxu0 0.0
  %3338 = vmatpush1.msra.mxu0 %v3203
  %3339 = vmatprep.subr.mxu0 0.0
  %3340 = vmatpush1.msra.mxu0 %v3202
  %3341 = vmatprep.subr.mxu0 0.0
  %3342 = vmatpush1.msra.mxu0 %v3201
  %3343 = vmatprep.subr.mxu0 0.0
  %3344 = vmatpush2.msra.mxu0 0.0
  %3345 = vmatprep.subr.mxu0 0.0
  %3346 = vmatpush2.msra.mxu0 0.0
  %3347 = vmatprep.subr.mxu0 0.0
  %3348 = vmatpush2.msra.mxu0 0.0
  %3349 = vmatprep.subr.mxu0 0.0
  %3350 = vmatpush2.msra.mxu0 0.0
  %3351 = vmatprep.subr.mxu0 0.0
  %3352 = vmatpush2.msra.mxu0 0.0
  %3353 = vmatprep.subr.mxu0 0.0
  %3354 = vmatpush2.msra.mxu0 0.0
  %3355 = vmatprep.subr.mxu0 0.0
  %3356 = vmatpush2.msra.mxu0 0.0
  %3357 = vmatprep.subr.mxu0 0.0
  %3358 = vmatpush2.msra.mxu0 %v3234
  %3359 = vmatprep.subr.mxu0 0.0
  %3360 = vmatpush2.msra.mxu0 %v3224
  %3361 = vmatprep.subr.mxu0 0.0
  %3362 = vmatpush2.msra.mxu0 %v3223
  %3363 = vmatprep.subr.mxu0 0.0
  %3364 = vmatpush2.msra.mxu0 %v3222
  %3365 = vmatprep.subr.mxu0 0.0
  %3366 = vmatpush2.msra.mxu0 %v3221
  %3367 = vmatprep.subr.mxu0 0.0
  %3368 = vmatpush2.msra.mxu0 %v3220
  %3369 = vmatprep.subr.mxu0 0.0
  %3370 = vmatpush2.msra.mxu0 %v3219
  %3371 = vmatprep.subr.mxu0 0.0
  %3372 = vmatpush2.msra.mxu0 %v3218
  %3373 = vmatprep.subr.mxu0 0.0
  %3374 = vmatpush2.msra.mxu0 %v3217
  %3375 = vmatprep.mubr.f32.mxu0 %v3228
  %3376 = vmatmul.mubr.f32.gmra.mxu0 %v3163
  %v3377 = vpop.f32.mrf.mxu0
  %v3378 = vadd.f32 %v3303, %v3377
  %v3379 = vpop.f32.mrf.mxu0
  %3380 = vmatprep.mubr.f32.mxu0 %v3231
  %3381 = vmatmul.mubr.f32.gmra.mxu0 %v3167
  %v3382 = vpop.f32.mrf.mxu0
  %v3383 = vadd.f32 %v3308, %v3382
  %v3384 = vpop.f32.mrf.mxu0
  %3385 = vdwg.mxu0
  %3388 = vrot.lane.b32.xlu0 %v3378, 126
  %v3389 = vpop.permute.xlu0 %3388
  %3390 = vrot.lane.b32.xlu0 %v3383, 126
  %v3391 = vpop.permute.xlu0 %3390
  %3394 = vrot.lane.b32.xlu0 %v3378, 124
  %v3395 = vpop.permute.xlu0 %3394
  %3396 = vrot.lane.b32.xlu0 %v3383, 124
  %v3397 = vpop.permute.xlu0 %3396
  %3400 = vrot.lane.b32.xlu0 %v3378, 122
  %v3401 = vpop.permute.xlu0 %3400
  %3402 = vrot.lane.b32.xlu0 %v3383, 122
  %v3403 = vpop.permute.xlu0 %3402
  %3406 = vrot.lane.b32.xlu0 %v3378, 120
  %v3407 = vpop.permute.xlu0 %3406
  %3408 = vrot.lane.b32.xlu0 %v3383, 120
  %v3409 = vpop.permute.xlu0 %3408
  %3412 = vrot.lane.b32.xlu0 %v3378, 118
  %v3413 = vpop.permute.xlu0 %3412
  %3414 = vrot.lane.b32.xlu0 %v3383, 118
  %v3415 = vpop.permute.xlu0 %3414
  %3418 = vrot.lane.b32.xlu0 %v3378, 116
  %v3419 = vpop.permute.xlu0 %3418
  %3420 = vrot.lane.b32.xlu0 %v3383, 116
  %v3421 = vpop.permute.xlu0 %3420
  %3424 = vrot.lane.b32.xlu0 %v3378, 114
  %v3425 = vpop.permute.xlu0 %3424
  %3426 = vrot.lane.b32.xlu0 %v3383, 114
  %v3427 = vpop.permute.xlu0 %3426
  %3430 = vrot.lane.b32.xlu0 %v3378, 112
  %v3431 = vpop.permute.xlu0 %3430
  %3432 = vrot.lane.b32.xlu0 %v3383, 112
  %v3433 = vpop.permute.xlu0 %3432
  %3436 = vrot.lane.b32.xlu0 %v3378, 110
  %v3437 = vpop.permute.xlu0 %3436
  %3438 = vrot.lane.b32.xlu0 %v3383, 110
  %v3439 = vpop.permute.xlu0 %3438
  %3442 = vrot.lane.b32.xlu0 %v3378, 108
  %v3443 = vpop.permute.xlu0 %3442
  %3444 = vrot.lane.b32.xlu0 %v3383, 108
  %v3445 = vpop.permute.xlu0 %3444
  %3448 = vrot.lane.b32.xlu0 %v3378, 106
  %v3449 = vpop.permute.xlu0 %3448
  %3450 = vrot.lane.b32.xlu0 %v3383, 106
  %v3451 = vpop.permute.xlu0 %3450
  %3454 = vrot.lane.b32.xlu0 %v3378, 104
  %v3455 = vpop.permute.xlu0 %3454
  %3456 = vrot.lane.b32.xlu0 %v3383, 104
  %v3457 = vpop.permute.xlu0 %3456
  %3460 = vrot.lane.b32.xlu0 %v3378, 102
  %v3461 = vpop.permute.xlu0 %3460
  %3462 = vrot.lane.b32.xlu0 %v3383, 102
  %v3463 = vpop.permute.xlu0 %3462
  %3466 = vrot.lane.b32.xlu0 %v3378, 100
  %v3467 = vpop.permute.xlu0 %3466
  %3468 = vrot.lane.b32.xlu0 %v3383, 100
  %v3469 = vpop.permute.xlu0 %3468
  %3472 = vrot.lane.b32.xlu0 %v3378, 98
  %v3473 = vpop.permute.xlu0 %3472
  %3474 = vrot.lane.b32.xlu0 %v3383, 98
  %v3475 = vpop.permute.xlu0 %3474
  %3478 = vrot.lane.b32.xlu0 %v3378, 96
  %v3479 = vpop.permute.xlu0 %3478
  %3480 = vrot.lane.b32.xlu0 %v3383, 96
  %v3481 = vpop.permute.xlu0 %3480
  %3482 = vrot.lane.b32.xlu0 %v3389, 96
  %v3483 = vpop.permute.xlu0 %3482
  %3484 = vrot.lane.b32.xlu0 %v3391, 96
  %v3485 = vpop.permute.xlu0 %3484
  %3486 = vrot.lane.b32.xlu0 %v3395, 96
  %v3487 = vpop.permute.xlu0 %3486
  %3488 = vrot.lane.b32.xlu0 %v3397, 96
  %v3489 = vpop.permute.xlu0 %3488
  %3490 = vrot.lane.b32.xlu0 %v3401, 96
  %v3491 = vpop.permute.xlu0 %3490
  %3492 = vrot.lane.b32.xlu0 %v3403, 96
  %v3493 = vpop.permute.xlu0 %3492
  %3494 = vrot.lane.b32.xlu0 %v3407, 96
  %v3495 = vpop.permute.xlu0 %3494
  %3496 = vrot.lane.b32.xlu0 %v3409, 96
  %v3497 = vpop.permute.xlu0 %3496
  %3498 = vrot.lane.b32.xlu0 %v3413, 96
  %v3499 = vpop.permute.xlu0 %3498
  %3500 = vrot.lane.b32.xlu0 %v3415, 96
  %v3501 = vpop.permute.xlu0 %3500
  %3502 = vrot.lane.b32.xlu0 %v3419, 96
  %v3503 = vpop.permute.xlu0 %3502
  %3504 = vrot.lane.b32.xlu0 %v3421, 96
  %v3505 = vpop.permute.xlu0 %3504
  %3506 = vrot.lane.b32.xlu0 %v3425, 96
  %v3507 = vpop.permute.xlu0 %3506
  %3508 = vrot.lane.b32.xlu0 %v3427, 96
  %v3509 = vpop.permute.xlu0 %3508
  %3510 = vrot.lane.b32.xlu0 %v3431, 96
  %v3511 = vpop.permute.xlu0 %3510
  %3512 = vrot.lane.b32.xlu0 %v3433, 96
  %v3513 = vpop.permute.xlu0 %3512
  %3514 = vrot.lane.b32.xlu0 %v3437, 96
  %v3515 = vpop.permute.xlu0 %3514
  %3516 = vrot.lane.b32.xlu0 %v3439, 96
  %v3517 = vpop.permute.xlu0 %3516
  %3518 = vrot.lane.b32.xlu0 %v3443, 96
  %v3519 = vpop.permute.xlu0 %3518
  %3520 = vrot.lane.b32.xlu0 %v3445, 96
  %v3521 = vpop.permute.xlu0 %3520
  %3522 = vrot.lane.b32.xlu0 %v3449, 96
  %v3523 = vpop.permute.xlu0 %3522
  %3524 = vrot.lane.b32.xlu0 %v3451, 96
  %v3525 = vpop.permute.xlu0 %3524
  %3526 = vrot.lane.b32.xlu0 %v3455, 96
  %v3527 = vpop.permute.xlu0 %3526
  %3528 = vrot.lane.b32.xlu0 %v3457, 96
  %v3529 = vpop.permute.xlu0 %3528
  %3530 = vrot.lane.b32.xlu0 %v3461, 96
  %v3531 = vpop.permute.xlu0 %3530
  %3532 = vrot.lane.b32.xlu0 %v3463, 96
  %v3533 = vpop.permute.xlu0 %3532
  %3534 = vrot.lane.b32.xlu0 %v3467, 96
  %v3535 = vpop.permute.xlu0 %3534
  %3536 = vrot.lane.b32.xlu0 %v3469, 96
  %v3537 = vpop.permute.xlu0 %3536
  %3538 = vrot.lane.b32.xlu0 %v3473, 96
  %v3539 = vpop.permute.xlu0 %3538
  %3540 = vrot.lane.b32.xlu0 %v3475, 96
  %v3541 = vpop.permute.xlu0 %3540
  %3574 = vrot.lane.b32.xlu0 %v3378, 64
  %v3575 = vpop.permute.xlu0 %3574
  %3576 = vrot.lane.b32.xlu0 %v3383, 64
  %v3577 = vpop.permute.xlu0 %3576
  %3578 = vrot.lane.b32.xlu0 %v3389, 64
  %v3579 = vpop.permute.xlu0 %3578
  %3580 = vrot.lane.b32.xlu0 %v3391, 64
  %v3581 = vpop.permute.xlu0 %3580
  %3582 = vrot.lane.b32.xlu0 %v3395, 64
  %v3583 = vpop.permute.xlu0 %3582
  %3584 = vrot.lane.b32.xlu0 %v3397, 64
  %v3585 = vpop.permute.xlu0 %3584
  %3586 = vrot.lane.b32.xlu0 %v3401, 64
  %v3587 = vpop.permute.xlu0 %3586
  %3588 = vrot.lane.b32.xlu0 %v3403, 64
  %v3589 = vpop.permute.xlu0 %3588
  %v3598 = vld [vmem:[%s7] sm:$0xff]
  %v3599 = vld [vmem:[%s7 + $0x8] sm:$0xff]
  %v3600 = vld [vmem:[%s7 + $0x10] sm:$0xff]
  %v3601 = vld [vmem:[%s7 + $0x18] sm:$0xff]
  %v3602 = vld [vmem:[%s7 + $0x20] sm:$0xff]
  %v3603 = vld [vmem:[%s7 + $0x28] sm:$0xff]
  %v3604 = vld [vmem:[%s7 + $0x30] sm:$0xff]
  %v3605 = vld [vmem:[%s7 + $0x38] sm:$0xff]
  %v3606 = vld [vmem:[%s7 + $0x40] sm:$0xff]
  %v3607 = vld [vmem:[%s7 + $0x48] sm:$0xff]
  %v3608 = vld [vmem:[%s7 + $0x50] sm:$0xff]
  %v3609 = vld [vmem:[%s7 + $0x58] sm:$0xff]
  %v3610 = vld [vmem:[%s7 + $0x60] sm:$0xff]
  %v3611 = vld [vmem:[%s7 + $0x68] sm:$0xff]
  %v3612 = vld [vmem:[%s7 + $0x70] sm:$0xff]
  %v3613 = vld [vmem:[%s7 + $0x78] sm:$0xff]
  %v3614 = vld [vmem:[%s7 + $0x80] sm:$0xff]
  %v3615 = vld [vmem:[%s7 + $0x88] sm:$0xff]
  %v3616 = vld [vmem:[%s7 + $0x90] sm:$0xff]
  %v3617 = vld [vmem:[%s7 + $0x98] sm:$0xff]
  %v3618 = vld [vmem:[%s7 + $0xa0] sm:$0xff]
  %v3619 = vld [vmem:[%s7 + $0xa8] sm:$0xff]
  %v3620 = vld [vmem:[%s7 + $0xb0] sm:$0xff]
  %v3621 = vld [vmem:[%s7 + $0xb8] sm:$0xff]
  %v3622 = vld [vmem:[%s7 + $0xc0] sm:$0xff]
  %v3623 = vld [vmem:[%s7 + $0xc8] sm:$0xff]
  %v3624 = vld [vmem:[%s7 + $0xd0] sm:$0xff]
  %v3625 = vld [vmem:[%s7 + $0xd8] sm:$0xff]
  %v3626 = vld [vmem:[%s7 + $0xe0] sm:$0xff]
  %v3627 = vld [vmem:[%s7 + $0xe8] sm:$0xff]
  %v3628 = vld [vmem:[%s7 + $0xf0] sm:$0xff]
  %v3629 = vld [vmem:[%s7 + $0xf8] sm:$0xff]
  %v3630 = vld [vmem:[%s7 + $0x100] sm:$0xff]
  %v3631 = vld [vmem:[%s7 + $0x108] sm:$0xff]
  %v3632 = vld [vmem:[%s7 + $0x110] sm:$0xff]
  %v3633 = vld [vmem:[%s7 + $0x118] sm:$0xff]
  %v3634 = vld [vmem:[%s7 + $0x120] sm:$0xff]
  %v3635 = vld [vmem:[%s7 + $0x128] sm:$0xff]
  %v3636 = vld [vmem:[%s7 + $0x130] sm:$0xff]
  %v3637 = vld [vmem:[%s7 + $0x138] sm:$0xff]
  %v3638 = vld [vmem:[%s7 + $0x140] sm:$0xff]
  %v3639 = vld [vmem:[%s7 + $0x148] sm:$0xff]
  %v3640 = vld [vmem:[%s7 + $0x150] sm:$0xff]
  %v3641 = vld [vmem:[%s7 + $0x158] sm:$0xff]
  %v3642 = vld [vmem:[%s7 + $0x160] sm:$0xff]
  %v3643 = vld [vmem:[%s7 + $0x168] sm:$0xff]
  %v3644 = vld [vmem:[%s7 + $0x170] sm:$0xff]
  %v3645 = vld [vmem:[%s7 + $0x178] sm:$0xff]
  %v3646 = vld [vmem:[%s7 + $0x180] sm:$0xff]
  %v3647 = vld [vmem:[%s7 + $0x188] sm:$0xff]
  %v3648 = vld [vmem:[%s7 + $0x190] sm:$0xff]
  %v3649 = vld [vmem:[%s7 + $0x198] sm:$0xff]
  %v3650 = vld [vmem:[%s7 + $0x1a0] sm:$0xff]
  %v3651 = vld [vmem:[%s7 + $0x1a8] sm:$0xff]
  %v3652 = vld [vmem:[%s7 + $0x1b0] sm:$0xff]
  %v3653 = vld [vmem:[%s7 + $0x1b8] sm:$0xff]
  %v3654 = vld [vmem:[%s7 + $0x1c0] sm:$0xff]
  %v3655 = vld [vmem:[%s7 + $0x1c8] sm:$0xff]
  %v3656 = vld [vmem:[%s7 + $0x1d0] sm:$0xff]
  %v3657 = vld [vmem:[%s7 + $0x1d8] sm:$0xff]
  %v3658 = vld [vmem:[%s7 + $0x1e0] sm:$0xff]
  %v3659 = vld [vmem:[%s7 + $0x1e8] sm:$0xff]
  %v3660 = vld [vmem:[%s7 + $0x1f0] sm:$0xff]
  %v3661 = vld [vmem:[%s7 + $0x1f8] sm:$0xff]
  %v3662 = vld [vmem:[%s7 + $0x200] sm:$0xff]
  %v3663 = vld [vmem:[%s7 + $0x208] sm:$0xff]
  %v3664 = vld [vmem:[%s7 + $0x210] sm:$0xff]
  %v3665 = vld [vmem:[%s7 + $0x218] sm:$0xff]
  %v3666 = vld [vmem:[%s7 + $0x220] sm:$0xff]
  %v3667 = vld [vmem:[%s7 + $0x228] sm:$0xff]
  %v3668 = vld [vmem:[%s7 + $0x230] sm:$0xff]
  %v3669 = vld [vmem:[%s7 + $0x238] sm:$0xff]
  %v3670 = vld [vmem:[%s7 + $0x240] sm:$0xff]
  %v3671 = vld [vmem:[%s7 + $0x248] sm:$0xff]
  %v3672 = vld [vmem:[%s7 + $0x250] sm:$0xff]
  %v3673 = vld [vmem:[%s8] sm:$0xff]
  %v3674 = vld [vmem:[%s8 + $0x8] sm:$0xff]
  %v3675 = vld [vmem:[%s8 + $0x10] sm:$0xff]
  %v3676 = vld [vmem:[%s8 + $0x18] sm:$0xff]
  %v3677 = vld [vmem:[%s8 + $0x20] sm:$0xff]
  %v3678 = vld [vmem:[%s8 + $0x28] sm:$0xff]
  %v3679 = vld [vmem:[%s8 + $0x30] sm:$0xff]
  %v3680 = vld [vmem:[%s8 + $0x38] sm:$0xff]
  %v3681 = vld [vmem:[%s8 + $0x40] sm:$0xff]
  %v3682 = vld [vmem:[%s8 + $0x48] sm:$0xff]
  %v3683 = vld [vmem:[%s8 + $0x50] sm:$0xff]
  %v3684 = vld [vmem:[%s8 + $0x58] sm:$0xff]
  %v3685 = vld [vmem:[%s8 + $0x60] sm:$0xff]
  %v3686 = vld [vmem:[%s8 + $0x68] sm:$0xff]
  %v3687 = vld [vmem:[%s8 + $0x70] sm:$0xff]
  %3689 = vset.pattern.permute.xlu0 0
  %3690 = vperm.xlu0 %3689, %v3673
  %v3691 = vpop.permute.xlu0 %3690
  %3694 = vset.pattern.permute.xlu0 0
  %3695 = vperm.xlu0 %3694, %v3674
  %v3696 = vpop.permute.xlu0 %3695
  %3699 = vset.pattern.permute.xlu0 0
  %3700 = vperm.xlu0 %3699, %v3675
  %v3701 = vpop.permute.xlu0 %3700
  %3704 = vset.pattern.permute.xlu0 0
  %3705 = vperm.xlu0 %3704, %v3676
  %v3706 = vpop.permute.xlu0 %3705
  %3709 = vset.pattern.permute.xlu0 0
  %3710 = vperm.xlu0 %3709, %v3677
  %v3711 = vpop.permute.xlu0 %3710
  %3714 = vset.pattern.permute.xlu0 0
  %3715 = vperm.xlu0 %3714, %v3678
  %v3716 = vpop.permute.xlu0 %3715
  %3719 = vset.pattern.permute.xlu0 0
  %3720 = vperm.xlu0 %3719, %v3679
  %v3721 = vpop.permute.xlu0 %3720
  %3724 = vset.pattern.permute.xlu0 0
  %3725 = vperm.xlu0 %3724, %v3680
  %v3726 = vpop.permute.xlu0 %3725
  %3729 = vset.pattern.permute.xlu0 0
  %3730 = vperm.xlu0 %3729, %v3681
  %v3731 = vpop.permute.xlu0 %3730
  %3734 = vset.pattern.permute.xlu0 0
  %3735 = vperm.xlu0 %3734, %v3682
  %v3736 = vpop.permute.xlu0 %3735
  %3739 = vset.pattern.permute.xlu0 0
  %3740 = vperm.xlu0 %3739, %v3683
  %v3741 = vpop.permute.xlu0 %3740
  %3744 = vset.pattern.permute.xlu0 0
  %3745 = vperm.xlu0 %3744, %v3684
  %v3746 = vpop.permute.xlu0 %3745
  %3749 = vset.pattern.permute.xlu0 0
  %3750 = vperm.xlu0 %3749, %v3685
  %v3751 = vpop.permute.xlu0 %3750
  %3754 = vset.pattern.permute.xlu0 0
  %3755 = vperm.xlu0 %3754, %v3686
  %v3756 = vpop.permute.xlu0 %3755
  %3759 = vset.pattern.permute.xlu0 0
  %3760 = vperm.xlu0 %3759, %v3687
  %v3761 = vpop.permute.xlu0 %3760
  %v3764 = vsel %vm399, %v3602, 0
  %v3767 = vsel %vm399, %v3607, 0
  %v3770 = vsel %vm399, %v3612, 0
  %v3773 = vsel %vm399, %v3617, 0
  %v3776 = vsel %vm399, %v3622, 0
  %v3779 = vsel %vm399, %v3627, 0
  %v3782 = vsel %vm399, %v3632, 0
  %v3785 = vsel %vm399, %v3637, 0
  %v3788 = vsel %vm399, %v3642, 0
  %v3791 = vsel %vm399, %v3647, 0
  %v3794 = vsel %vm399, %v3652, 0
  %v3797 = vsel %vm399, %v3657, 0
  %v3800 = vsel %vm399, %v3662, 0
  %v3803 = vsel %vm399, %v3667, 0
  %v3806 = vsel %vm399, %v3672, 0
  %3808 = vmatprep.subr.mxu0 0.0
  %3809 = vmatpush1.msra.mxu0 %v3427
  %3810 = vmatprep.subr.mxu0 0.0
  %3811 = vmatpush1.msra.mxu0 %v3425
  %3812 = vmatprep.subr.mxu0 0.0
  %3813 = vmatpush1.msra.mxu0 %v3421
  %3814 = vmatprep.subr.mxu0 0.0
  %3815 = vmatpush1.msra.mxu0 %v3419
  %3816 = vmatprep.subr.mxu0 0.0
  %3817 = vmatpush1.msra.mxu0 %v3415
  %3818 = vmatprep.subr.mxu0 0.0
  %3819 = vmatpush1.msra.mxu0 %v3413
  %3820 = vmatprep.subr.mxu0 0.0
  %3821 = vmatpush1.msra.mxu0 %v3409
  %3822 = vmatprep.subr.mxu0 0.0
  %3823 = vmatpush1.msra.mxu0 %v3407
  %3824 = vmatprep.subr.mxu0 0.0
  %3825 = vmatpush1.msra.mxu0 %v3403
  %3826 = vmatprep.subr.mxu0 0.0
  %3827 = vmatpush1.msra.mxu0 %v3401
  %3828 = vmatprep.subr.mxu0 0.0
  %3829 = vmatpush1.msra.mxu0 %v3397
  %3830 = vmatprep.subr.mxu0 0.0
  %3831 = vmatpush1.msra.mxu0 %v3395
  %3832 = vmatprep.subr.mxu0 0.0
  %3833 = vmatpush1.msra.mxu0 %v3391
  %3834 = vmatprep.subr.mxu0 0.0
  %3835 = vmatpush1.msra.mxu0 %v3389
  %3836 = vmatprep.subr.mxu0 0.0
  %3837 = vmatpush1.msra.mxu0 %v3383
  %3838 = vmatprep.subr.mxu0 0.0
  %3839 = vmatpush1.msra.mxu0 %v3378
  %3840 = vmatprep.subr.mxu0 0.0
  %3841 = vmatpush2.msra.mxu0 %v3475
  %3842 = vmatprep.subr.mxu0 0.0
  %3843 = vmatpush2.msra.mxu0 %v3473
  %3844 = vmatprep.subr.mxu0 0.0
  %3845 = vmatpush2.msra.mxu0 %v3469
  %3846 = vmatprep.subr.mxu0 0.0
  %3847 = vmatpush2.msra.mxu0 %v3467
  %3848 = vmatprep.subr.mxu0 0.0
  %3849 = vmatpush2.msra.mxu0 %v3463
  %3850 = vmatprep.subr.mxu0 0.0
  %3851 = vmatpush2.msra.mxu0 %v3461
  %3852 = vmatprep.subr.mxu0 0.0
  %3853 = vmatpush2.msra.mxu0 %v3457
  %3854 = vmatprep.subr.mxu0 0.0
  %3855 = vmatpush2.msra.mxu0 %v3455
  %3856 = vmatprep.subr.mxu0 0.0
  %3857 = vmatpush2.msra.mxu0 %v3451
  %3858 = vmatprep.subr.mxu0 0.0
  %3859 = vmatpush2.msra.mxu0 %v3449
  %3860 = vmatprep.subr.mxu0 0.0
  %3861 = vmatpush2.msra.mxu0 %v3445
  %3862 = vmatprep.subr.mxu0 0.0
  %3863 = vmatpush2.msra.mxu0 %v3443
  %3864 = vmatprep.subr.mxu0 0.0
  %3865 = vmatpush2.msra.mxu0 %v3439
  %3866 = vmatprep.subr.mxu0 0.0
  %3867 = vmatpush2.msra.mxu0 %v3437
  %3868 = vmatprep.subr.mxu0 0.0
  %3869 = vmatpush2.msra.mxu0 %v3433
  %3870 = vmatprep.subr.mxu0 0.0
  %3871 = vmatpush2.msra.mxu0 %v3431
  %3872 = vmatprep.mubr.f32.mxu0 %v3599
  %3873 = vmatmul.mubr.f32.gmra.mxu0 %v3598
  %v3874 = vpop.f32.mrf.mxu0
  %v3875 = vadd.f32 %v3691, %v3874
  %v3876 = vpop.f32.mrf.mxu0
  %3877 = vmatprep.mubr.f32.mxu0 %v3604
  %3878 = vmatmul.mubr.f32.gmra.mxu0 %v3603
  %v3879 = vpop.f32.mrf.mxu0
  %v3880 = vadd.f32 %v3696, %v3879
  %v3881 = vpop.f32.mrf.mxu0
  %3882 = vmatprep.mubr.f32.mxu0 %v3609
  %3883 = vmatmul.mubr.f32.gmra.mxu0 %v3608
  %v3884 = vpop.f32.mrf.mxu0
  %v3885 = vadd.f32 %v3701, %v3884
  %v3886 = vpop.f32.mrf.mxu0
  %3887 = vmatprep.mubr.f32.mxu0 %v3614
  %3888 = vmatmul.mubr.f32.gmra.mxu0 %v3613
  %v3889 = vpop.f32.mrf.mxu0
  %v3890 = vadd.f32 %v3706, %v3889
  %v3891 = vpop.f32.mrf.mxu0
  %3892 = vmatprep.mubr.f32.mxu0 %v3619
  %3893 = vmatmul.mubr.f32.gmra.mxu0 %v3618
  %v3894 = vpop.f32.mrf.mxu0
  %v3895 = vadd.f32 %v3711, %v3894
  %v3896 = vpop.f32.mrf.mxu0
  %3897 = vmatprep.mubr.f32.mxu0 %v3624
  %3898 = vmatmul.mubr.f32.gmra.mxu0 %v3623
  %v3899 = vpop.f32.mrf.mxu0
  %v3900 = vadd.f32 %v3716, %v3899
  %v3901 = vpop.f32.mrf.mxu0
  %3902 = vmatprep.mubr.f32.mxu0 %v3629
  %3903 = vmatmul.mubr.f32.gmra.mxu0 %v3628
  %v3904 = vpop.f32.mrf.mxu0
  %v3905 = vadd.f32 %v3721, %v3904
  %v3906 = vpop.f32.mrf.mxu0
  %3907 = vmatprep.mubr.f32.mxu0 %v3634
  %3908 = vmatmul.mubr.f32.gmra.mxu0 %v3633
  %v3909 = vpop.f32.mrf.mxu0
  %v3910 = vadd.f32 %v3726, %v3909
  %v3911 = vpop.f32.mrf.mxu0
  %3912 = vmatprep.mubr.f32.mxu0 %v3639
  %3913 = vmatmul.mubr.f32.gmra.mxu0 %v3638
  %v3914 = vpop.f32.mrf.mxu0
  %v3915 = vadd.f32 %v3731, %v3914
  %v3916 = vpop.f32.mrf.mxu0
  %3917 = vmatprep.mubr.f32.mxu0 %v3644
  %3918 = vmatmul.mubr.f32.gmra.mxu0 %v3643
  %v3919 = vpop.f32.mrf.mxu0
  %v3920 = vadd.f32 %v3736, %v3919
  %v3921 = vpop.f32.mrf.mxu0
  %3922 = vmatprep.mubr.f32.mxu0 %v3649
  %3923 = vmatmul.mubr.f32.gmra.mxu0 %v3648
  %v3924 = vpop.f32.mrf.mxu0
  %v3925 = vadd.f32 %v3741, %v3924
  %v3926 = vpop.f32.mrf.mxu0
  %3927 = vmatprep.mubr.f32.mxu0 %v3654
  %3928 = vmatmul.mubr.f32.gmra.mxu0 %v3653
  %v3929 = vpop.f32.mrf.mxu0
  %v3930 = vadd.f32 %v3746, %v3929
  %v3931 = vpop.f32.mrf.mxu0
  %3932 = vmatprep.mubr.f32.mxu0 %v3659
  %3933 = vmatmul.mubr.f32.gmra.mxu0 %v3658
  %v3934 = vpop.f32.mrf.mxu0
  %v3935 = vadd.f32 %v3751, %v3934
  %v3936 = vpop.f32.mrf.mxu0
  %3937 = vmatprep.mubr.f32.mxu0 %v3664
  %3938 = vmatmul.mubr.f32.gmra.mxu0 %v3663
  %v3939 = vpop.f32.mrf.mxu0
  %v3940 = vadd.f32 %v3756, %v3939
  %v3941 = vpop.f32.mrf.mxu0
  %3942 = vmatprep.mubr.f32.mxu0 %v3669
  %3943 = vmatmul.mubr.f32.gmra.mxu0 %v3668
  %v3944 = vpop.f32.mrf.mxu0
  %v3945 = vadd.f32 %v3761, %v3944
  %v3946 = vpop.f32.mrf.mxu0
  %3947 = vdwg.mxu0
  %3948 = vmatprep.subr.mxu0 0.0
  %3949 = vmatpush1.msra.mxu0 %v3509
  %3950 = vmatprep.subr.mxu0 0.0
  %3951 = vmatpush1.msra.mxu0 %v3507
  %3952 = vmatprep.subr.mxu0 0.0
  %3953 = vmatpush1.msra.mxu0 %v3505
  %3954 = vmatprep.subr.mxu0 0.0
  %3955 = vmatpush1.msra.mxu0 %v3503
  %3956 = vmatprep.subr.mxu0 0.0
  %3957 = vmatpush1.msra.mxu0 %v3501
  %3958 = vmatprep.subr.mxu0 0.0
  %3959 = vmatpush1.msra.mxu0 %v3499
  %3960 = vmatprep.subr.mxu0 0.0
  %3961 = vmatpush1.msra.mxu0 %v3497
  %3962 = vmatprep.subr.mxu0 0.0
  %3963 = vmatpush1.msra.mxu0 %v3495
  %3964 = vmatprep.subr.mxu0 0.0
  %3965 = vmatpush1.msra.mxu0 %v3493
  %3966 = vmatprep.subr.mxu0 0.0
  %3967 = vmatpush1.msra.mxu0 %v3491
  %3968 = vmatprep.subr.mxu0 0.0
  %3969 = vmatpush1.msra.mxu0 %v3489
  %3970 = vmatprep.subr.mxu0 0.0
  %3971 = vmatpush1.msra.mxu0 %v3487
  %3972 = vmatprep.subr.mxu0 0.0
  %3973 = vmatpush1.msra.mxu0 %v3485
  %3974 = vmatprep.subr.mxu0 0.0
  %3975 = vmatpush1.msra.mxu0 %v3483
  %3976 = vmatprep.subr.mxu0 0.0
  %3977 = vmatpush1.msra.mxu0 %v3481
  %3978 = vmatprep.subr.mxu0 0.0
  %3979 = vmatpush1.msra.mxu0 %v3479
  %3980 = vmatprep.subr.mxu0 0.0
  %3981 = vmatpush2.msra.mxu0 %v3541
  %3982 = vmatprep.subr.mxu0 0.0
  %3983 = vmatpush2.msra.mxu0 %v3539
  %3984 = vmatprep.subr.mxu0 0.0
  %3985 = vmatpush2.msra.mxu0 %v3537
  %3986 = vmatprep.subr.mxu0 0.0
  %3987 = vmatpush2.msra.mxu0 %v3535
  %3988 = vmatprep.subr.mxu0 0.0
  %3989 = vmatpush2.msra.mxu0 %v3533
  %3990 = vmatprep.subr.mxu0 0.0
  %3991 = vmatpush2.msra.mxu0 %v3531
  %3992 = vmatprep.subr.mxu0 0.0
  %3993 = vmatpush2.msra.mxu0 %v3529
  %3994 = vmatprep.subr.mxu0 0.0
  %3995 = vmatpush2.msra.mxu0 %v3527
  %3996 = vmatprep.subr.mxu0 0.0
  %3997 = vmatpush2.msra.mxu0 %v3525
  %3998 = vmatprep.subr.mxu0 0.0
  %3999 = vmatpush2.msra.mxu0 %v3523
  %4000 = vmatprep.subr.mxu0 0.0
  %4001 = vmatpush2.msra.mxu0 %v3521
  %4002 = vmatprep.subr.mxu0 0.0
  %4003 = vmatpush2.msra.mxu0 %v3519
  %4004 = vmatprep.subr.mxu0 0.0
  %4005 = vmatpush2.msra.mxu0 %v3517
  %4006 = vmatprep.subr.mxu0 0.0
  %4007 = vmatpush2.msra.mxu0 %v3515
  %4008 = vmatprep.subr.mxu0 0.0
  %4009 = vmatpush2.msra.mxu0 %v3513
  %4010 = vmatprep.subr.mxu0 0.0
  %4011 = vmatpush2.msra.mxu0 %v3511
  %4012 = vmatprep.mubr.f32.mxu0 %v3601
  %4013 = vmatmul.mubr.f32.gmra.mxu0 %v3600
  %v4014 = vpop.f32.mrf.mxu0
  %v4015 = vadd.f32 %v3875, %v4014
  %v4016 = vpop.f32.mrf.mxu0
  %4017 = vmatprep.mubr.f32.mxu0 %v3606
  %4018 = vmatmul.mubr.f32.gmra.mxu0 %v3605
  %v4019 = vpop.f32.mrf.mxu0
  %v4020 = vadd.f32 %v3880, %v4019
  %v4021 = vpop.f32.mrf.mxu0
  %4022 = vmatprep.mubr.f32.mxu0 %v3611
  %4023 = vmatmul.mubr.f32.gmra.mxu0 %v3610
  %v4024 = vpop.f32.mrf.mxu0
  %v4025 = vadd.f32 %v3885, %v4024
  %v4026 = vpop.f32.mrf.mxu0
  %4027 = vmatprep.mubr.f32.mxu0 %v3616
  %4028 = vmatmul.mubr.f32.gmra.mxu0 %v3615
  %v4029 = vpop.f32.mrf.mxu0
  %v4030 = vadd.f32 %v3890, %v4029
  %v4031 = vpop.f32.mrf.mxu0
  %4032 = vmatprep.mubr.f32.mxu0 %v3621
  %4033 = vmatmul.mubr.f32.gmra.mxu0 %v3620
  %v4034 = vpop.f32.mrf.mxu0
  %v4035 = vadd.f32 %v3895, %v4034
  %v4036 = vpop.f32.mrf.mxu0
  %4037 = vmatprep.mubr.f32.mxu0 %v3626
  %4038 = vmatmul.mubr.f32.gmra.mxu0 %v3625
  %v4039 = vpop.f32.mrf.mxu0
  %v4040 = vadd.f32 %v3900, %v4039
  %v4041 = vpop.f32.mrf.mxu0
  %4042 = vmatprep.mubr.f32.mxu0 %v3631
  %4043 = vmatmul.mubr.f32.gmra.mxu0 %v3630
  %v4044 = vpop.f32.mrf.mxu0
  %v4045 = vadd.f32 %v3905, %v4044
  %v4046 = vpop.f32.mrf.mxu0
  %4047 = vmatprep.mubr.f32.mxu0 %v3636
  %4048 = vmatmul.mubr.f32.gmra.mxu0 %v3635
  %v4049 = vpop.f32.mrf.mxu0
  %v4050 = vadd.f32 %v3910, %v4049
  %v4051 = vpop.f32.mrf.mxu0
  %4052 = vmatprep.mubr.f32.mxu0 %v3641
  %4053 = vmatmul.mubr.f32.gmra.mxu0 %v3640
  %v4054 = vpop.f32.mrf.mxu0
  %v4055 = vadd.f32 %v3915, %v4054
  %v4056 = vpop.f32.mrf.mxu0
  %4057 = vmatprep.mubr.f32.mxu0 %v3646
  %4058 = vmatmul.mubr.f32.gmra.mxu0 %v3645
  %v4059 = vpop.f32.mrf.mxu0
  %v4060 = vadd.f32 %v3920, %v4059
  %v4061 = vpop.f32.mrf.mxu0
  %4062 = vmatprep.mubr.f32.mxu0 %v3651
  %4063 = vmatmul.mubr.f32.gmra.mxu0 %v3650
  %v4064 = vpop.f32.mrf.mxu0
  %v4065 = vadd.f32 %v3925, %v4064
  %v4066 = vpop.f32.mrf.mxu0
  %4067 = vmatprep.mubr.f32.mxu0 %v3656
  %4068 = vmatmul.mubr.f32.gmra.mxu0 %v3655
  %v4069 = vpop.f32.mrf.mxu0
  %v4070 = vadd.f32 %v3930, %v4069
  %v4071 = vpop.f32.mrf.mxu0
  %4072 = vmatprep.mubr.f32.mxu0 %v3661
  %4073 = vmatmul.mubr.f32.gmra.mxu0 %v3660
  %v4074 = vpop.f32.mrf.mxu0
  %v4075 = vadd.f32 %v3935, %v4074
  %v4076 = vpop.f32.mrf.mxu0
  %4077 = vmatprep.mubr.f32.mxu0 %v3666
  %4078 = vmatmul.mubr.f32.gmra.mxu0 %v3665
  %v4079 = vpop.f32.mrf.mxu0
  %v4080 = vadd.f32 %v3940, %v4079
  %v4081 = vpop.f32.mrf.mxu0
  %4082 = vmatprep.mubr.f32.mxu0 %v3671
  %4083 = vmatmul.mubr.f32.gmra.mxu0 %v3670
  %v4084 = vpop.f32.mrf.mxu0
  %v4085 = vadd.f32 %v3945, %v4084
  %v4086 = vpop.f32.mrf.mxu0
  %4087 = vdwg.mxu0
  %4088 = vmatprep.subr.mxu0 0.0
  %4089 = vmatpush1.msra.mxu0 0.0
  %4090 = vmatprep.subr.mxu0 0.0
  %4091 = vmatpush1.msra.mxu0 0.0
  %4092 = vmatprep.subr.mxu0 0.0
  %4093 = vmatpush1.msra.mxu0 0.0
  %4094 = vmatprep.subr.mxu0 0.0
  %4095 = vmatpush1.msra.mxu0 0.0
  %4096 = vmatprep.subr.mxu0 0.0
  %4097 = vmatpush1.msra.mxu0 0.0
  %4098 = vmatprep.subr.mxu0 0.0
  %4099 = vmatpush1.msra.mxu0 0.0
  %4100 = vmatprep.subr.mxu0 0.0
  %4101 = vmatpush1.msra.mxu0 0.0
  %4102 = vmatprep.subr.mxu0 0.0
  %4103 = vmatpush1.msra.mxu0 0.0
  %4104 = vmatprep.subr.mxu0 0.0
  %4105 = vmatpush1.msra.mxu0 %v3589
  %4106 = vmatprep.subr.mxu0 0.0
  %4107 = vmatpush1.msra.mxu0 %v3587
  %4108 = vmatprep.subr.mxu0 0.0
  %4109 = vmatpush1.msra.mxu0 %v3585
  %4110 = vmatprep.subr.mxu0 0.0
  %4111 = vmatpush1.msra.mxu0 %v3583
  %4112 = vmatprep.subr.mxu0 0.0
  %4113 = vmatpush1.msra.mxu0 %v3581
  %4114 = vmatprep.subr.mxu0 0.0
  %4115 = vmatpush1.msra.mxu0 %v3579
  %4116 = vmatprep.subr.mxu0 0.0
  %4117 = vmatpush1.msra.mxu0 %v3577
  %4118 = vmatprep.subr.mxu0 0.0
  %4119 = vmatpush1.msra.mxu0 %v3575
  %4120 = vmatprep.subr.mxu0 0.0
  %4121 = vmatpush2.msra.mxu0 0.0
  %4122 = vmatprep.subr.mxu0 0.0
  %4123 = vmatpush2.msra.mxu0 0.0
  %4124 = vmatprep.subr.mxu0 0.0
  %4125 = vmatpush2.msra.mxu0 0.0
  %4126 = vmatprep.subr.mxu0 0.0
  %4127 = vmatpush2.msra.mxu0 0.0
  %4128 = vmatprep.subr.mxu0 0.0
  %4129 = vmatpush2.msra.mxu0 0.0
  %4130 = vmatprep.subr.mxu0 0.0
  %4131 = vmatpush2.msra.mxu0 0.0
  %4132 = vmatprep.subr.mxu0 0.0
  %4133 = vmatpush2.msra.mxu0 0.0
  %4134 = vmatprep.subr.mxu0 0.0
  %4135 = vmatpush2.msra.mxu0 0.0
  %4136 = vmatprep.subr.mxu0 0.0
  %4137 = vmatpush2.msra.mxu0 0.0
  %4138 = vmatprep.subr.mxu0 0.0
  %4139 = vmatpush2.msra.mxu0 0.0
  %4140 = vmatprep.subr.mxu0 0.0
  %4141 = vmatpush2.msra.mxu0 0.0
  %4142 = vmatprep.subr.mxu0 0.0
  %4143 = vmatpush2.msra.mxu0 0.0
  %4144 = vmatprep.subr.mxu0 0.0
  %4145 = vmatpush2.msra.mxu0 0.0
  %4146 = vmatprep.subr.mxu0 0.0
  %4147 = vmatpush2.msra.mxu0 0.0
  %4148 = vmatprep.subr.mxu0 0.0
  %4149 = vmatpush2.msra.mxu0 0.0
  %4150 = vmatprep.subr.mxu0 0.0
  %4151 = vmatpush2.msra.mxu0 0.0
  %4152 = vmatprep.mubr.f32.mxu0 0.0
  %4153 = vmatmul.mubr.f32.gmra.mxu0 %v3764
  %v4154 = vpop.f32.mrf.mxu0
  %v4155 = vadd.f32 %v4015, %v4154
  %v4156 = vpop.f32.mrf.mxu0
  %4157 = vmatprep.mubr.f32.mxu0 0.0
  %4158 = vmatmul.mubr.f32.gmra.mxu0 %v3767
  %v4159 = vpop.f32.mrf.mxu0
  %v4160 = vadd.f32 %v4020, %v4159
  %v4161 = vpop.f32.mrf.mxu0
  %4162 = vmatprep.mubr.f32.mxu0 0.0
  %4163 = vmatmul.mubr.f32.gmra.mxu0 %v3770
  %v4164 = vpop.f32.mrf.mxu0
  %v4165 = vadd.f32 %v4025, %v4164
  %v4166 = vpop.f32.mrf.mxu0
  %4167 = vmatprep.mubr.f32.mxu0 0.0
  %4168 = vmatmul.mubr.f32.gmra.mxu0 %v3773
  %v4169 = vpop.f32.mrf.mxu0
  %v4170 = vadd.f32 %v4030, %v4169
  %v4171 = vpop.f32.mrf.mxu0
  %4172 = vmatprep.mubr.f32.mxu0 0.0
  %4173 = vmatmul.mubr.f32.gmra.mxu0 %v3776
  %v4174 = vpop.f32.mrf.mxu0
  %v4175 = vadd.f32 %v4035, %v4174
  %v4176 = vpop.f32.mrf.mxu0
  %4177 = vmatprep.mubr.f32.mxu0 0.0
  %4178 = vmatmul.mubr.f32.gmra.mxu0 %v3779
  %v4179 = vpop.f32.mrf.mxu0
  %v4180 = vadd.f32 %v4040, %v4179
  %v4181 = vpop.f32.mrf.mxu0
  %4182 = vmatprep.mubr.f32.mxu0 0.0
  %4183 = vmatmul.mubr.f32.gmra.mxu0 %v3782
  %v4184 = vpop.f32.mrf.mxu0
  %v4185 = vadd.f32 %v4045, %v4184
  %v4186 = vpop.f32.mrf.mxu0
  %4187 = vmatprep.mubr.f32.mxu0 0.0
  %4188 = vmatmul.mubr.f32.gmra.mxu0 %v3785
  %v4189 = vpop.f32.mrf.mxu0
  %v4190 = vadd.f32 %v4050, %v4189
  %v4191 = vpop.f32.mrf.mxu0
  %4192 = vmatprep.mubr.f32.mxu0 0.0
  %4193 = vmatmul.mubr.f32.gmra.mxu0 %v3788
  %v4194 = vpop.f32.mrf.mxu0
  %v4195 = vadd.f32 %v4055, %v4194
  %v4196 = vpop.f32.mrf.mxu0
  %4197 = vmatprep.mubr.f32.mxu0 0.0
  %4198 = vmatmul.mubr.f32.gmra.mxu0 %v3791
  %v4199 = vpop.f32.mrf.mxu0
  %v4200 = vadd.f32 %v4060, %v4199
  %v4201 = vpop.f32.mrf.mxu0
  %4202 = vmatprep.mubr.f32.mxu0 0.0
  %4203 = vmatmul.mubr.f32.gmra.mxu0 %v3794
  %v4204 = vpop.f32.mrf.mxu0
  %v4205 = vadd.f32 %v4065, %v4204
  %v4206 = vpop.f32.mrf.mxu0
  %4207 = vmatprep.mubr.f32.mxu0 0.0
  %4208 = vmatmul.mubr.f32.gmra.mxu0 %v3797
  %v4209 = vpop.f32.mrf.mxu0
  %v4210 = vadd.f32 %v4070, %v4209
  %v4211 = vpop.f32.mrf.mxu0
  %4212 = vmatprep.mubr.f32.mxu0 0.0
  %4213 = vmatmul.mubr.f32.gmra.mxu0 %v3800
  %v4214 = vpop.f32.mrf.mxu0
  %v4215 = vadd.f32 %v4075, %v4214
  %v4216 = vpop.f32.mrf.mxu0
  %4217 = vmatprep.mubr.f32.mxu0 0.0
  %4218 = vmatmul.mubr.f32.gmra.mxu0 %v3803
  %v4219 = vpop.f32.mrf.mxu0
  %v4220 = vadd.f32 %v4080, %v4219
  %v4221 = vpop.f32.mrf.mxu0
  %4222 = vmatprep.mubr.f32.mxu0 0.0
  %4223 = vmatmul.mubr.f32.gmra.mxu0 %v3806
  %v4224 = vpop.f32.mrf.mxu0
  %v4225 = vadd.f32 %v4085, %v4224
  %v4226 = vpop.f32.mrf.mxu0
  %4227 = vdwg.mxu0
  %v4228 = vmax.f32 %v4155, 0.0
  %v4229 = vmax.f32 %v4160, 0.0
  %v4230 = vmax.f32 %v4165, 0.0
  %v4231 = vmax.f32 %v4170, 0.0
  %v4232 = vmax.f32 %v4175, 0.0
  %v4233 = vmax.f32 %v4180, 0.0
  %v4234 = vmax.f32 %v4185, 0.0
  %v4235 = vmax.f32 %v4190, 0.0
  %v4236 = vmax.f32 %v4195, 0.0
  %v4237 = vmax.f32 %v4200, 0.0
  %v4238 = vmax.f32 %v4205, 0.0
  %v4239 = vmax.f32 %v4210, 0.0
  %v4240 = vmax.f32 %v4215, 0.0
  %v4241 = vmax.f32 %v4220, 0.0
  %v4242 = vmax.f32 %v4225, 0.0
  %v4243 = vld [vmem:[%s9] sm:$0xff]
  %v4244 = vld [vmem:[%s9 + $0x8] sm:$0xff]
  %v4245 = vld [vmem:[%s9 + $0x10] sm:$0xff]
  %v4246 = vld [vmem:[%s9 + $0x18] sm:$0xff]
  %v4247 = vld [vmem:[%s9 + $0x20] sm:$0xff]
  %v4248 = vld [vmem:[%s9 + $0x28] sm:$0xff]
  %v4249 = vld [vmem:[%s9 + $0x30] sm:$0xff]
  %v4250 = vld [vmem:[%s9 + $0x38] sm:$0xff]
  %v4251 = vld [vmem:[%s9 + $0x40] sm:$0xff]
  %v4252 = vld [vmem:[%s9 + $0x48] sm:$0xff]
  %v4253 = vld [vmem:[%s9 + $0x50] sm:$0xf]
  %v4254 = vld [vmem:[%s10] sm:$0xff]
  %v4255 = vld [vmem:[%s10 + $0x8] sm:$0xff]
  %v4256 = vld [vmem:[%s10 + $0x10] sm:$0xff]
  %v4257 = vld [vmem:[%s10 + $0x18] sm:$0xff]
  %v4258 = vld [vmem:[%s10 + $0x20] sm:$0xff]
  %v4259 = vld [vmem:[%s10 + $0x28] sm:$0xff]
  %v4260 = vld [vmem:[%s10 + $0x30] sm:$0xff]
  %v4261 = vld [vmem:[%s10 + $0x38] sm:$0xff]
  %v4262 = vld [vmem:[%s10 + $0x40] sm:$0xff]
  %v4263 = vld [vmem:[%s10 + $0x48] sm:$0xff]
  %v4264 = vld [vmem:[%s10 + $0x50] sm:$0xf]
  %4266 = vset.pattern.permute.xlu0 0
  %4267 = vperm.xlu0 %4266, %v4254
  %v4268 = vpop.permute.xlu0 %4267
  %4271 = vset.pattern.permute.xlu0 0
  %4272 = vperm.xlu0 %4271, %v4255
  %v4273 = vpop.permute.xlu0 %4272
  %4276 = vset.pattern.permute.xlu0 0
  %4277 = vperm.xlu0 %4276, %v4256
  %v4278 = vpop.permute.xlu0 %4277
  %4281 = vset.pattern.permute.xlu0 0
  %4282 = vperm.xlu0 %4281, %v4257
  %v4283 = vpop.permute.xlu0 %4282
  %4286 = vset.pattern.permute.xlu0 0
  %4287 = vperm.xlu0 %4286, %v4258
  %v4288 = vpop.permute.xlu0 %4287
  %4291 = vset.pattern.permute.xlu0 0
  %4292 = vperm.xlu0 %4291, %v4259
  %v4293 = vpop.permute.xlu0 %4292
  %4296 = vset.pattern.permute.xlu0 0
  %4297 = vperm.xlu0 %4296, %v4260
  %v4298 = vpop.permute.xlu0 %4297
  %4301 = vset.pattern.permute.xlu0 0
  %4302 = vperm.xlu0 %4301, %v4261
  %v4303 = vpop.permute.xlu0 %4302
  %4306 = vset.pattern.permute.xlu0 0
  %4307 = vperm.xlu0 %4306, %v4262
  %v4308 = vpop.permute.xlu0 %4307
  %4311 = vset.pattern.permute.xlu0 0
  %4312 = vperm.xlu0 %4311, %v4263
  %v4313 = vpop.permute.xlu0 %4312
  %4316 = vset.pattern.permute.xlu0 0
  %4317 = vperm.xlu0 %4316, %v4264
  %v4318 = vpop.permute.xlu0 %4317
  %vm4320 = vcmask 982016
  %v4322 = vsel %vm4320, %v4243, 0
  %v4325 = vsel %vm4320, %v4244, 0
  %v4328 = vsel %vm4320, %v4245, 0
  %v4331 = vsel %vm4320, %v4246, 0
  %v4334 = vsel %vm4320, %v4247, 0
  %v4337 = vsel %vm4320, %v4248, 0
  %v4340 = vsel %vm4320, %v4249, 0
  %v4343 = vsel %vm4320, %v4250, 0
  %v4346 = vsel %vm4320, %v4251, 0
  %v4349 = vsel %vm4320, %v4252, 0
  %v4352 = vsel %vm4320, %v4253, 0
  %4354 = vmatprep.subr.mxu0 0.0
  %4355 = vmatpush1.msra.mxu0 0.0
  %4356 = vmatprep.subr.mxu0 0.0
  %4357 = vmatpush1.msra.mxu0 %v4242
  %4358 = vmatprep.subr.mxu0 0.0
  %4359 = vmatpush1.msra.mxu0 %v4241
  %4360 = vmatprep.subr.mxu0 0.0
  %4361 = vmatpush1.msra.mxu0 %v4240
  %4362 = vmatprep.subr.mxu0 0.0
  %4363 = vmatpush1.msra.mxu0 %v4239
  %4364 = vmatprep.subr.mxu0 0.0
  %4365 = vmatpush1.msra.mxu0 %v4238
  %4366 = vmatprep.subr.mxu0 0.0
  %4367 = vmatpush1.msra.mxu0 %v4237
  %4368 = vmatprep.subr.mxu0 0.0
  %4369 = vmatpush1.msra.mxu0 %v4236
  %4370 = vmatprep.subr.mxu0 0.0
  %4371 = vmatpush1.msra.mxu0 %v4235
  %4372 = vmatprep.subr.mxu0 0.0
  %4373 = vmatpush1.msra.mxu0 %v4234
  %4374 = vmatprep.subr.mxu0 0.0
  %4375 = vmatpush1.msra.mxu0 %v4233
  %4376 = vmatprep.subr.mxu0 0.0
  %4377 = vmatpush1.msra.mxu0 %v4232
  %4378 = vmatprep.subr.mxu0 0.0
  %4379 = vmatpush1.msra.mxu0 %v4231
  %4380 = vmatprep.subr.mxu0 0.0
  %4381 = vmatpush1.msra.mxu0 %v4230
  %4382 = vmatprep.subr.mxu0 0.0
  %4383 = vmatpush1.msra.mxu0 %v4229
  %4384 = vmatprep.subr.mxu0 0.0
  %4385 = vmatpush1.msra.mxu0 %v4228
  %4386 = vmatprep.subr.mxu0 0.0
  %4387 = vmatpush2.msra.mxu0 0.0
  %4388 = vmatprep.subr.mxu0 0.0
  %4389 = vmatpush2.msra.mxu0 0.0
  %4390 = vmatprep.subr.mxu0 0.0
  %4391 = vmatpush2.msra.mxu0 0.0
  %4392 = vmatprep.subr.mxu0 0.0
  %4393 = vmatpush2.msra.mxu0 0.0
  %4394 = vmatprep.subr.mxu0 0.0
  %4395 = vmatpush2.msra.mxu0 0.0
  %4396 = vmatprep.subr.mxu0 0.0
  %4397 = vmatpush2.msra.mxu0 0.0
  %4398 = vmatprep.subr.mxu0 0.0
  %4399 = vmatpush2.msra.mxu0 0.0
  %4400 = vmatprep.subr.mxu0 0.0
  %4401 = vmatpush2.msra.mxu0 0.0
  %4402 = vmatprep.subr.mxu0 0.0
  %4403 = vmatpush2.msra.mxu0 0.0
  %4404 = vmatprep.subr.mxu0 0.0
  %4405 = vmatpush2.msra.mxu0 0.0
  %4406 = vmatprep.subr.mxu0 0.0
  %4407 = vmatpush2.msra.mxu0 0.0
  %4408 = vmatprep.subr.mxu0 0.0
  %4409 = vmatpush2.msra.mxu0 0.0
  %4410 = vmatprep.subr.mxu0 0.0
  %4411 = vmatpush2.msra.mxu0 0.0
  %4412 = vmatprep.subr.mxu0 0.0
  %4413 = vmatpush2.msra.mxu0 0.0
  %4414 = vmatprep.subr.mxu0 0.0
  %4415 = vmatpush2.msra.mxu0 0.0
  %4416 = vmatprep.subr.mxu0 0.0
  %4417 = vmatpush2.msra.mxu0 0.0
  %4418 = vmatprep.mubr.f32.mxu0 0.0
  %4419 = vmatmul.mubr.f32.gmra.mxu0 %v4322
  %v4420 = vpop.f32.mrf.mxu0
  %v4421 = vadd.f32 %v4268, %v4420
  %v4422 = vpop.f32.mrf.mxu0
  %4423 = vmatprep.mubr.f32.mxu0 0.0
  %4424 = vmatmul.mubr.f32.gmra.mxu0 %v4325
  %v4425 = vpop.f32.mrf.mxu0
  %v4426 = vadd.f32 %v4273, %v4425
  %v4427 = vpop.f32.mrf.mxu0
  %4428 = vmatprep.mubr.f32.mxu0 0.0
  %4429 = vmatmul.mubr.f32.gmra.mxu0 %v4328
  %v4430 = vpop.f32.mrf.mxu0
  %v4431 = vadd.f32 %v4278, %v4430
  %v4432 = vpop.f32.mrf.mxu0
  %4433 = vmatprep.mubr.f32.mxu0 0.0
  %4434 = vmatmul.mubr.f32.gmra.mxu0 %v4331
  %v4435 = vpop.f32.mrf.mxu0
  %v4436 = vadd.f32 %v4283, %v4435
  %v4437 = vpop.f32.mrf.mxu0
  %4438 = vmatprep.mubr.f32.mxu0 0.0
  %4439 = vmatmul.mubr.f32.gmra.mxu0 %v4334
  %v4440 = vpop.f32.mrf.mxu0
  %v4441 = vadd.f32 %v4288, %v4440
  %v4442 = vpop.f32.mrf.mxu0
  %4443 = vmatprep.mubr.f32.mxu0 0.0
  %4444 = vmatmul.mubr.f32.gmra.mxu0 %v4337
  %v4445 = vpop.f32.mrf.mxu0
  %v4446 = vadd.f32 %v4293, %v4445
  %v4447 = vpop.f32.mrf.mxu0
  %4448 = vmatprep.mubr.f32.mxu0 0.0
  %4449 = vmatmul.mubr.f32.gmra.mxu0 %v4340
  %v4450 = vpop.f32.mrf.mxu0
  %v4451 = vadd.f32 %v4298, %v4450
  %v4452 = vpop.f32.mrf.mxu0
  %4453 = vmatprep.mubr.f32.mxu0 0.0
  %4454 = vmatmul.mubr.f32.gmra.mxu0 %v4343
  %v4455 = vpop.f32.mrf.mxu0
  %v4456 = vadd.f32 %v4303, %v4455
  %v4457 = vpop.f32.mrf.mxu0
  %4458 = vmatprep.mubr.f32.mxu0 0.0
  %4459 = vmatmul.mubr.f32.gmra.mxu0 %v4346
  %v4460 = vpop.f32.mrf.mxu0
  %v4461 = vadd.f32 %v4308, %v4460
  %v4462 = vpop.f32.mrf.mxu0
  %4463 = vmatprep.mubr.f32.mxu0 0.0
  %4464 = vmatmul.mubr.f32.gmra.mxu0 %v4349
  %v4465 = vpop.f32.mrf.mxu0
  %v4466 = vadd.f32 %v4313, %v4465
  %v4467 = vpop.f32.mrf.mxu0
  %4468 = vmatprep.mubr.f32.mxu0 0.0
  %4469 = vmatmul.mubr.f32.gmra.mxu0 %v4352
  %v4470 = vpop.f32.mrf.mxu0
  %v4471 = vadd.f32 %v4318, %v4470
  %v4472 = vpop.f32.mrf.mxu0
  %4473 = vdwg.mxu0
  %v4474 = vmax.f32 %v4421, 0.0
  %v4475 = vmax.f32 %v4426, 0.0
  %v4476 = vmax.f32 %v4431, 0.0
  %v4477 = vmax.f32 %v4436, 0.0
  %v4478 = vmax.f32 %v4441, 0.0
  %v4479 = vmax.f32 %v4446, 0.0
  %v4480 = vmax.f32 %v4451, 0.0
  %v4481 = vmax.f32 %v4456, 0.0
  %v4482 = vmax.f32 %v4461, 0.0
  %v4483 = vmax.f32 %v4466, 0.0
  %v4484 = vmax.f32 %v4471, 0.0
  %v4485 = vld [vmem:[%s11] sm:$0xff]
  %v4486 = vld [vmem:[%s11 + $0x8] sm:$0x3]
  %v4487 = vld [vmem:[%s12] sm:$0xff]
  %v4488 = vld [vmem:[%s12 + $0x8] sm:$0x3]
  %4490 = vset.pattern.permute.xlu0 0
  %4491 = vperm.xlu0 %4490, %v4487
  %v4492 = vpop.permute.xlu0 %4491
  %4495 = vset.pattern.permute.xlu0 0
  %4496 = vperm.xlu0 %4495, %v4488
  %v4497 = vpop.permute.xlu0 %4496
  %vm4499 = vcmask 687104
  %v4501 = vsel %vm4499, %v4485, 0
  %v4504 = vsel %vm4499, %v4486, 0
  %v4507 = vsel %vm818, %v4484, 0
  %4509 = vmatprep.subr.mxu0 0.0
  %4510 = vmatpush1.msra.mxu0 0.0
  %4511 = vmatprep.subr.mxu0 0.0
  %4512 = vmatpush1.msra.mxu0 0.0
  %4513 = vmatprep.subr.mxu0 0.0
  %4514 = vmatpush1.msra.mxu0 0.0
  %4515 = vmatprep.subr.mxu0 0.0
  %4516 = vmatpush1.msra.mxu0 0.0
  %4517 = vmatprep.subr.mxu0 0.0
  %4518 = vmatpush1.msra.mxu0 0.0
  %4519 = vmatprep.subr.mxu0 0.0
  %4520 = vmatpush1.msra.mxu0 %v4507
  %4521 = vmatprep.subr.mxu0 0.0
  %4522 = vmatpush1.msra.mxu0 %v4483
  %4523 = vmatprep.subr.mxu0 0.0
  %4524 = vmatpush1.msra.mxu0 %v4482
  %4525 = vmatprep.subr.mxu0 0.0
  %4526 = vmatpush1.msra.mxu0 %v4481
  %4527 = vmatprep.subr.mxu0 0.0
  %4528 = vmatpush1.msra.mxu0 %v4480
  %4529 = vmatprep.subr.mxu0 0.0
  %4530 = vmatpush1.msra.mxu0 %v4479
  %4531 = vmatprep.subr.mxu0 0.0
  %4532 = vmatpush1.msra.mxu0 %v4478
  %4533 = vmatprep.subr.mxu0 0.0
  %4534 = vmatpush1.msra.mxu0 %v4477
  %4535 = vmatprep.subr.mxu0 0.0
  %4536 = vmatpush1.msra.mxu0 %v4476
  %4537 = vmatprep.subr.mxu0 0.0
  %4538 = vmatpush1.msra.mxu0 %v4475
  %4539 = vmatprep.subr.mxu0 0.0
  %4540 = vmatpush1.msra.mxu0 %v4474
  %4541 = vmatprep.subr.mxu0 0.0
  %4542 = vmatpush2.msra.mxu0 0.0
  %4543 = vmatprep.subr.mxu0 0.0
  %4544 = vmatpush2.msra.mxu0 0.0
  %4545 = vmatprep.subr.mxu0 0.0
  %4546 = vmatpush2.msra.mxu0 0.0
  %4547 = vmatprep.subr.mxu0 0.0
  %4548 = vmatpush2.msra.mxu0 0.0
  %4549 = vmatprep.subr.mxu0 0.0
  %4550 = vmatpush2.msra.mxu0 0.0
  %4551 = vmatprep.subr.mxu0 0.0
  %4552 = vmatpush2.msra.mxu0 0.0
  %4553 = vmatprep.subr.mxu0 0.0
  %4554 = vmatpush2.msra.mxu0 0.0
  %4555 = vmatprep.subr.mxu0 0.0
  %4556 = vmatpush2.msra.mxu0 0.0
  %4557 = vmatprep.subr.mxu0 0.0
  %4558 = vmatpush2.msra.mxu0 0.0
  %4559 = vmatprep.subr.mxu0 0.0
  %4560 = vmatpush2.msra.mxu0 0.0
  %4561 = vmatprep.subr.mxu0 0.0
  %4562 = vmatpush2.msra.mxu0 0.0
  %4563 = vmatprep.subr.mxu0 0.0
  %4564 = vmatpush2.msra.mxu0 0.0
  %4565 = vmatprep.subr.mxu0 0.0
  %4566 = vmatpush2.msra.mxu0 0.0
  %4567 = vmatprep.subr.mxu0 0.0
  %4568 = vmatpush2.msra.mxu0 0.0
  %4569 = vmatprep.subr.mxu0 0.0
  %4570 = vmatpush2.msra.mxu0 0.0
  %4571 = vmatprep.subr.mxu0 0.0
  %4572 = vmatpush2.msra.mxu0 0.0
  %4573 = vmatprep.mubr.f32.mxu0 0.0
  %4574 = vmatmul.mubr.f32.gmra.mxu0 %v4501
  %v4575 = vpop.f32.mrf.mxu0
  %v4576 = vadd.f32 %v4492, %v4575
  %v4577 = vpop.f32.mrf.mxu0
  %4578 = vmatprep.mubr.f32.mxu0 0.0
  %4579 = vmatmul.mubr.f32.gmra.mxu0 %v4504
  %v4580 = vpop.f32.mrf.mxu0
  %v4581 = vadd.f32 %v4497, %v4580
  %v4582 = vpop.f32.mrf.mxu0
  %4583 = vdwg.mxu0
  %vm4584 = vcmask 15360
  %4585 = vst.msk [vmem:[%s13] sm:$0xff] %vm4584, %v4576
  %vm4586 = vcmask 9216
  %4587 = vst.msk [vmem:[%s13 + $0x8] sm:$0x3] %vm4586, %v4581
  // Predicated region
  $region54: #{net_forward.1} parent=0 // pred_check
    _
  $region55: #{net_forward.1} parent=0 // pred_check_branch
    %4589 = sbr.rel (0) target = $region57
  $region56: #{net_forward.1} parent=0 // pred_region
    _
  $region57: #{net_forward.1} parent=0 // pred_fallthru
    _
  // Predicated region
  $region58: #{net_forward.1} parent=0 // pred_check
    _
  $region59: #{net_forward.1} parent=0 // pred_check_branch
    %4591 = sbr.rel (0) target = $region61
  $region60: #{net_forward.1} parent=0 // pred_region
    _
  $region61: #{net_forward.1} parent=0 // pred_fallthru
    _

</llo_original>
